<compile_context>
chip_gen: v7x
topology: tpu7x:2x2x1
jax: 0.10.0
libtpu: 0.0.40
codegen_flags: <defaults>
</compile_context>

<pallas_src>
import jax
import jax.numpy as jnp
from jax import lax
from jax.experimental import pallas as pl
from jax.experimental.pallas import tpu as pltpu

# ----------------------------- model config (small) -----------------------------
VOCAB = 256
HIDDEN = 128
N_HEADS = 4
HEAD_DIM = HIDDEN // N_HEADS          # 32
HALF = HEAD_DIM // 2                  # 16 (RoPE half-split)
FFN = 256
N_LAYERS = 2
PROMPT_LEN = 8
NEW_TOKENS = 4
MAX_LEN = 16                          # padded sequence length (>= PROMPT_LEN + NEW_TOKENS)
RMS_EPS = 1e-6


# ----------------------------- helpers -------------------------------------------
def _rms(x, w):
    var = jnp.mean(x * x, axis=-1, keepdims=True)
    return x * lax.rsqrt(var + RMS_EPS) * w


def rope_swap_matrix():
    """(HIDDEN, HIDDEN) matrix M with q @ M == rotate_half(q) per head
    (concat(-q2, q1) within each head's 32 dims)."""
    idx = jnp.arange(HIDDEN)
    head_pos = idx % HEAD_DIM
    first = head_pos < HALF
    src = jnp.where(first, idx + HALF, idx - HALF)   # column c reads row src[c]
    sgn = jnp.where(first, -1.0, 1.0).astype(jnp.float32)
    return jnp.zeros((HIDDEN, HIDDEN), jnp.float32).at[src, idx].set(sgn)


def rope_tables_full(max_len):
    """Full-width (max_len, HIDDEN) cos/sin tables, head-block tiled so that
    q_rot = q*cos + rotate_half(q)*sin is a plain elementwise op."""
    inv_freq = 1.0 / (10000.0 ** (jnp.arange(HALF, dtype=jnp.float32) / HALF))
    pos = jnp.arange(max_len, dtype=jnp.float32)
    ang = pos[:, None] * inv_freq[None, :]                       # (max_len, HALF)
    reps = HIDDEN // HALF
    return jnp.tile(jnp.cos(ang), (1, reps)), jnp.tile(jnp.sin(ang), (1, reps))


def causal_additive_mask(seq_len):
    rows = lax.broadcasted_iota(jnp.int32, (seq_len, seq_len), 0)
    cols = lax.broadcasted_iota(jnp.int32, (seq_len, seq_len), 1)
    return jnp.where(rows >= cols, 0.0, -1e30).astype(jnp.float32)


# ----------------------------- fully fused decoder kernel ------------------------
def _fused_decoder_kernel(len_ref,                         # scalar prefetch (SMEM)
                          tok_ref, embed_ref, cos_ref, sin_ref, mask_ref,
                          attn_norm_ref, wqkv_ref, wo_ref,
                          mlp_norm_ref, wgu_ref, wd_ref,
                          final_norm_ref, lm_head_ref,
                          tok_out_ref,                     # (1,1) f32 output
                          resid_ref, attn_ref):            # VMEM scratch
    """One decoder layer per grid step; the residual stream lives in resid_ref
    (VMEM) for the whole stack.  Layer 0 also does the embedding gather; the last
    layer also does final-norm + lm_head + greedy argmax."""
    layer = pl.program_id(0)
    S = MAX_LEN

    # ---- layer 0: in-kernel embedding gather via one-hot matmul -----------------
    @pl.when(layer == 0)
    def _():
        ids = tok_ref[...]                                           # (S, 1) int32
        eq = lax.broadcasted_iota(jnp.int32, (S, VOCAB), 1) == ids   # (S, VOCAB)
        onehot = jnp.where(eq, 1.0, 0.0).astype(jnp.bfloat16)
        resid_ref[...] = jnp.dot(onehot, embed_ref[...],
                                 preferred_element_type=jnp.float32)

    x = resid_ref[...]                      # (S, HIDDEN) f32 residual stream
    cosf = cos_ref[...]                     # (S, HIDDEN) f32
    sinf = sin_ref[...]                     # (S, HIDDEN) f32
    mask = mask_ref[...]                    # (S, S) additive causal mask

    # ---------------- self-attention block ---------------------------------------
    h = _rms(x, attn_norm_ref[...]).astype(jnp.bfloat16)
    # One lane-dense matmul for [q, rotate_half(q)-folded, k, rotate_half(k)-folded, v].
    # 1/sqrt(head_dim) is pre-folded into the q columns.
    qkv = jnp.dot(h, wqkv_ref[...], preferred_element_type=jnp.float32)   # (S, 5H)
    q = qkv[:, 0:HIDDEN]
    qs = qkv[:, HIDDEN:2 * HIDDEN]
    k = qkv[:, 2 * HIDDEN:3 * HIDDEN]
    ks = qkv[:, 3 * HIDDEN:4 * HIDDEN]
    v = qkv[:, 4 * HIDDEN:5 * HIDDEN]

    # Full-width RoPE: q_rot = q*cos + rotate_half(q)*sin (4 dense VPU muls).
    q_rot = q * cosf + qs * sinf
    k_rot = k * cosf + ks * sinf

    # Per-head causal softmax attention; outputs assembled into (S, HIDDEN) scratch
    # so the output projection wo is a single full-depth matmul.
    for hd in range(N_HEADS):
        c0 = hd * HEAD_DIM
        qh = q_rot[:, c0:c0 + HEAD_DIM].astype(jnp.bfloat16)
        kh = k_rot[:, c0:c0 + HEAD_DIM].astype(jnp.bfloat16)
        vh = v[:, c0:c0 + HEAD_DIM].astype(jnp.bfloat16)
        s = jnp.einsum("qd,kd->qk", qh, kh,
                       preferred_element_type=jnp.float32) + mask       # (S, S)
        m = jnp.max(s, axis=-1, keepdims=True)
        p = jnp.exp(s - m)
        p = p * pl.reciprocal(jnp.sum(p, axis=-1, keepdims=True), approx=True)
        attn_ref[:, c0:c0 + HEAD_DIM] = jnp.dot(
            p.astype(jnp.bfloat16), vh, preferred_element_type=jnp.float32)

    x = x + jnp.dot(attn_ref[...].astype(jnp.bfloat16), wo_ref[...],
                    preferred_element_type=jnp.float32)

    # ---------------- SwiGLU MLP block --------------------------------------------
    h = _rms(x, mlp_norm_ref[...]).astype(jnp.bfloat16)
    gu = jnp.dot(h, wgu_ref[...], preferred_element_type=jnp.float32)    # (S, 2*FFN)
    g = gu[:, :FFN]
    u = gu[:, FFN:]
    act = (g * jax.nn.sigmoid(g) * u).astype(jnp.bfloat16)               # SiLU(g)*u
    x = x + jnp.dot(act, wd_ref[...], preferred_element_type=jnp.float32)

    resid_ref[...] = x

    # ---- last layer: fused final RMSNorm + lm_head + greedy argmax ---------------
    @pl.when(layer == N_LAYERS - 1)
    def _():
        idx = len_ref[0] - 1                                 # last valid position
        row = resid_ref[pl.ds(idx, 1), :]                    # (1, HIDDEN)
        hrow = _rms(row, final_norm_ref[...]).astype(jnp.bfloat16)
        logits = jnp.dot(hrow, lm_head_ref[...],
                         preferred_element_type=jnp.float32)             # (1, VOCAB)
        mmax = jnp.max(logits, axis=-1, keepdims=True)
        pos = lax.broadcasted_iota(jnp.int32, (1, VOCAB), 1).astype(jnp.float32)
        cand = jnp.where(logits >= mmax, pos, jnp.float32(VOCAB))
        tok_out_ref[...] = jnp.min(cand, axis=-1, keepdims=True)         # argmax


def decoder_forward(tokens, cur_len, cosf, sinf, neg_mask, params):
    """Single pallas_call: embed -> N_LAYERS decoder layers -> lm_head -> argmax.
    Returns the next token as a (1,1) float32 (cast to int outside)."""
    S, H = MAX_LEN, HIDDEN
    len_arr = jnp.reshape(cur_len, (1,)).astype(jnp.int32)
    tok_col = jnp.reshape(tokens, (S, 1)).astype(jnp.int32)

    def fixed(shape):
        return pl.BlockSpec(shape, lambda l, L, _s=len(shape): (0,) * _s)

    def per_layer(s0, s1):
        return pl.BlockSpec((None, s0, s1), lambda l, L: (l, 0, 0))

    in_specs = [
        fixed((S, 1)),               # token ids
        fixed((VOCAB, H)),           # embedding table (bf16, VMEM resident)
        fixed((S, H)),               # cos (full width)
        fixed((S, H)),               # sin (full width)
        fixed((S, S)),               # causal additive mask
        per_layer(1, H),             # attn_norm
        per_layer(H, 5 * H),         # w_qkv  (q | q@M | k | k@M | v), bf16
        per_layer(H, H),             # wo
        per_layer(1, H),             # mlp_norm
        per_layer(H, 2 * FFN),       # w_gu   (gate | up), bf16
        per_layer(FFN, H),           # wd
        fixed((1, H)),               # final_norm
        fixed((H, VOCAB)),           # lm_head
    ]
    return pl.pallas_call(
        _fused_decoder_kernel,
        out_shape=jax.ShapeDtypeStruct((1, 1), jnp.float32),
        grid_spec=pltpu.PrefetchScalarGridSpec(
            num_scalar_prefetch=1,
            grid=(N_LAYERS,),
            in_specs=in_specs,
            out_specs=pl.BlockSpec((1, 1), lambda l, L: (0, 0)),
            scratch_shapes=[pltpu.VMEM((S, H), jnp.float32),   # residual stream
                            pltpu.VMEM((S, H), jnp.float32)],  # per-head attn out
        ),
        compiler_params=pltpu.CompilerParams(
            dimension_semantics=("arbitrary",)),
    )(len_arr, tok_col, params["embed"], cosf, sinf, neg_mask,
      params["attn_norm"], params["w_qkv"], params["wo"],
      params["mlp_norm"], params["w_gu"], params["wd"],
      params["final_norm"], params["lm_head"])


# ----------------------------- params --------------------------------------------
def init_params(key):
    def nrm(k, shape, scale=0.02):
        return (scale * jax.random.normal(k, shape)).astype(jnp.float32)

    ks = jax.random.split(key, 9)
    wq = nrm(ks[2], (N_LAYERS, HIDDEN, HIDDEN))
    wk = nrm(ks[3], (N_LAYERS, HIDDEN, HIDDEN))
    wv = nrm(ks[4], (N_LAYERS, HIDDEN, HIDDEN))
    wo = nrm(ks[5], (N_LAYERS, HIDDEN, HIDDEN))
    wg = nrm(ks[6], (N_LAYERS, HIDDEN, FFN))
    wu = nrm(ks[7], (N_LAYERS, HIDDEN, FFN))
    wd = nrm(ks[8], (N_LAYERS, FFN, HIDDEN))

    # Fold rotate_half permutation+sign and the 1/sqrt(head_dim) scale into the
    # q/k projection weights so RoPE + scaling become full-width elementwise ops.
    M = rope_swap_matrix()
    scale = jnp.float32(1.0 / (HEAD_DIM ** 0.5))
    wq_rot = jnp.einsum("lij,jk->lik", wq, M)
    wk_rot = jnp.einsum("lij,jk->lik", wk, M)
    w_qkv = jnp.concatenate([wq * scale, wq_rot * scale, wk, wk_rot, wv],
                            axis=-1).astype(jnp.bfloat16)          # (L, H, 5H)
    w_gu = jnp.concatenate([wg, wu], axis=-1).astype(jnp.bfloat16)  # (L, H, 2*FFN)

    return {
        "embed": nrm(ks[0], (VOCAB, HIDDEN)).astype(jnp.bfloat16),
        "final_norm": jnp.ones((1, HIDDEN), jnp.float32),
        "lm_head": nrm(ks[1], (HIDDEN, VOCAB)).astype(jnp.bfloat16),
        "attn_norm": jnp.ones((N_LAYERS, 1, HIDDEN), jnp.float32),
        "mlp_norm": jnp.ones((N_LAYERS, 1, HIDDEN), jnp.float32),
        "w_qkv": w_qkv,
        "wo": wo.astype(jnp.bfloat16),
        "w_gu": w_gu,
        "wd": wd.astype(jnp.bfloat16),
    }


# ----------------------------- greedy generation (single jit) --------------------
@jax.jit
def generate(params, prompt_tokens):
    """Greedy autoregressive decode over a fixed padded length; full-prefix
    recompute each step (use_cache=False), compiled exactly once."""
    cosf, sinf = rope_tables_full(MAX_LEN)
    neg_mask = causal_additive_mask(MAX_LEN)

    tokens = jnp.zeros((MAX_LEN,), jnp.int32).at[:PROMPT_LEN].set(prompt_tokens)

    def step(i, tokens):
        cur_len = PROMPT_LEN + i
        nxt = decoder_forward(tokens, cur_len, cosf, sinf, neg_mask, params)
        next_tok = nxt[0, 0].astype(jnp.int32)                 # greedy decode
        return lax.dynamic_update_index_in_dim(tokens, next_tok, cur_len, 0)

    tokens = lax.fori_loop(0, NEW_TOKENS, step, tokens)
    return tokens[:PROMPT_LEN + NEW_TOKENS]


# ----------------------------- main ----------------------------------------------
if __name__ == "__main__":
    key = jax.random.PRNGKey(0)
    pkey, tkey = jax.random.split(key)
    params = init_params(pkey)
    prompt = jax.random.randint(tkey, (PROMPT_LEN,), 0, VOCAB, dtype=jnp.int32)

    out_tokens = jax.block_until_ready(generate(params, prompt))

    assert out_tokens.shape == (PROMPT_LEN + NEW_TOKENS,)
    assert out_tokens.dtype == jnp.int32
    assert bool(jnp.all(out_tokens >= 0)) and bool(jnp.all(out_tokens < VOCAB))
    print("KERNEL_OK")
</pallas_src>

<mosaic_0001>
module attributes {stable_mosaic.version = 11 : i64} {
  func.func @_fused_decoder_kernel(%arg0: i32, %arg1: memref<1xi32, #tpu.memory_space<smem>>, %arg2: memref<16x1xi32, #tpu.memory_space<vmem>>, %arg3: memref<256x128xbf16, #tpu.memory_space<vmem>>, %arg4: memref<16x128xf32, #tpu.memory_space<vmem>>, %arg5: memref<16x128xf32, #tpu.memory_space<vmem>>, %arg6: memref<16x16xf32, #tpu.memory_space<vmem>>, %arg7: memref<1x1x128xf32, #tpu.memory_space<vmem>>, %arg8: memref<1x128x640xbf16, #tpu.memory_space<vmem>>, %arg9: memref<1x128x128xbf16, #tpu.memory_space<vmem>>, %arg10: memref<1x1x128xf32, #tpu.memory_space<vmem>>, %arg11: memref<1x128x512xbf16, #tpu.memory_space<vmem>>, %arg12: memref<1x256x128xbf16, #tpu.memory_space<vmem>>, %arg13: memref<1x128xf32, #tpu.memory_space<vmem>>, %arg14: memref<128x256xbf16, #tpu.memory_space<vmem>>, %arg15: memref<1x1xf32, #tpu.memory_space<vmem>>, %arg16: memref<16x128xf32, #tpu.memory_space<vmem>>, %arg17: memref<16x128xf32, #tpu.memory_space<vmem>>) attributes {dimension_semantics = [#tpu.dimension_semantics<arbitrary>], iteration_bounds = array<i64: 2>, scalar_prefetch = 1 : i64, scratch_operands = 2 : i64, tpu.core_type = #tpu.core_type<tc>, window_params = [{pipeline_mode = #tpu.pipeline_mode<synchronous>, transform_indices = @transform_0, window_bounds = array<i64: 16, 1>}, {pipeline_mode = #tpu.pipeline_mode<synchronous>, transform_indices = @transform_1, window_bounds = array<i64: 256, 128>}, {pipeline_mode = #tpu.pipeline_mode<synchronous>, transform_indices = @transform_2, window_bounds = array<i64: 16, 128>}, {pipeline_mode = #tpu.pipeline_mode<synchronous>, transform_indices = @transform_3, window_bounds = array<i64: 16, 128>}, {pipeline_mode = #tpu.pipeline_mode<synchronous>, transform_indices = @transform_4, window_bounds = array<i64: 16, 16>}, {transform_indices = @transform_5, window_bounds = array<i64: 1, 1, 128>}, {transform_indices = @transform_6, window_bounds = array<i64: 1, 128, 640>}, {transform_indices = @transform_7, window_bounds = array<i64: 1, 128, 128>}, {transform_indices = @transform_8, window_bounds = array<i64: 1, 1, 128>}, {transform_indices = @transform_9, window_bounds = array<i64: 1, 128, 512>}, {transform_indices = @transform_10, window_bounds = array<i64: 1, 256, 128>}, {pipeline_mode = #tpu.pipeline_mode<synchronous>, transform_indices = @transform_11, window_bounds = array<i64: 1, 128>}, {pipeline_mode = #tpu.pipeline_mode<synchronous>, transform_indices = @transform_12, window_bounds = array<i64: 128, 256>}, {pipeline_mode = #tpu.pipeline_mode<synchronous>, transform_indices = @transform_13, window_bounds = array<i64: 1, 1>}]} {
    %c0_i32 = arith.constant 0 : i32
    %0 = arith.cmpi eq, %arg0, %c0_i32 : i32
    %1 = arith.extui %0 : i1 to i32
    %c0_i32_0 = arith.constant 0 : i32
    %2 = arith.cmpi ne, %1, %c0_i32_0 : i32
    scf.if %2 {
      %c0_62 = arith.constant 0 : index
      %c0_63 = arith.constant 0 : index
      %162 = vector.load %arg2[%c0_62, %c0_63] : memref<16x1xi32, #tpu.memory_space<vmem>>, vector<16x1xi32>
      %163 = tpu.iota {dimensions = array<i32: 1>} : vector<16x256xi32>
      %164 = vector.broadcast %162 : vector<16x1xi32> to vector<16x256xi32>
      %165 = arith.cmpi eq, %163, %164 : vector<16x256xi32>
      %cst_64 = arith.constant 1.000000e+00 : f32
      %cst_65 = arith.constant 0.000000e+00 : f32
      %166 = vector.broadcast %cst_64 : f32 to vector<16x256xf32>
      %167 = vector.broadcast %cst_65 : f32 to vector<16x256xf32>
      %168 = arith.select %165, %166, %167 : vector<16x256xi1>, vector<16x256xf32>
      %169 = arith.truncf %168 : vector<16x256xf32> to vector<16x256xbf16>
      %c0_66 = arith.constant 0 : index
      %c0_67 = arith.constant 0 : index
      %170 = vector.load %arg3[%c0_66, %c0_67] : memref<256x128xbf16, #tpu.memory_space<vmem>>, vector<256x128xbf16>
      %cst_68 = arith.constant dense<0.000000e+00> : vector<16x128xf32>
      %171 = tpu.matmul %169, %170, %cst_68 {dimension_numbers = #tpu.dot_dimension_numbers<[1], [0], [0], [1], [0, 0, 1, 1], [], []>} : vector<16x256xbf16>, vector<256x128xbf16>, vector<16x128xf32> -> vector<16x128xf32>
      %c0_69 = arith.constant 0 : index
      %c0_70 = arith.constant 0 : index
      %172 = vector.load %arg16[%c0_69, %c0_70] : memref<16x128xf32, #tpu.memory_space<vmem>>, vector<16x128xf32>
      tpu.vector_store %arg16[%c0_69, %c0_70], %171 {strides = array<i32>} : memref<16x128xf32, #tpu.memory_space<vmem>>, vector<16x128xf32>,
    } else {
    }
    %c0 = arith.constant 0 : index
    %c0_1 = arith.constant 0 : index
    %3 = vector.load %arg16[%c0, %c0_1] : memref<16x128xf32, #tpu.memory_space<vmem>>, vector<16x128xf32>
    %c0_2 = arith.constant 0 : index
    %c0_3 = arith.constant 0 : index
    %4 = vector.load %arg4[%c0_2, %c0_3] : memref<16x128xf32, #tpu.memory_space<vmem>>, vector<16x128xf32>
    %c0_4 = arith.constant 0 : index
    %c0_5 = arith.constant 0 : index
    %5 = vector.load %arg5[%c0_4, %c0_5] : memref<16x128xf32, #tpu.memory_space<vmem>>, vector<16x128xf32>
    %c0_6 = arith.constant 0 : index
    %c0_7 = arith.constant 0 : index
    %6 = vector.load %arg6[%c0_6, %c0_7] : memref<16x16xf32, #tpu.memory_space<vmem>>, vector<16x16xf32>
    %c0_8 = arith.constant 0 : index
    %c0_9 = arith.constant 0 : index
    %c0_10 = arith.constant 0 : index
    %7 = vector.load %arg7[%c0_8, %c0_9, %c0_10] : memref<1x1x128xf32, #tpu.memory_space<vmem>>, vector<1x1x128xf32>
    %8 = vector.shape_cast %7 : vector<1x1x128xf32> to vector<1x128xf32>
    %9 = arith.mulf %3, %3 : vector<16x128xf32>
    %cst = arith.constant dense<0.000000e+00> : vector<16xf32>
    %10 = vector.multi_reduction <add>, %9, %cst [1] : vector<16x128xf32> to vector<16xf32>
    %11 = vector.shape_cast %10 : vector<16xf32> to vector<16x1xf32>
    %cst_11 = arith.constant 1.280000e+02 : f32
    %12 = vector.broadcast %cst_11 : f32 to vector<16x1xf32>
    %13 = arith.divf %11, %12 : vector<16x1xf32>
    %cst_12 = arith.constant 9.99999997E-7 : f32
    %14 = vector.broadcast %cst_12 : f32 to vector<16x1xf32>
    %15 = arith.addf %13, %14 : vector<16x1xf32>
    %16 = math.rsqrt %15 : vector<16x1xf32>
    %17 = vector.broadcast %16 : vector<16x1xf32> to vector<16x128xf32>
    %18 = arith.mulf %3, %17 : vector<16x128xf32>
    %19 = vector.broadcast %8 : vector<1x128xf32> to vector<16x128xf32>
    %20 = arith.mulf %18, %19 : vector<16x128xf32>
    %21 = arith.truncf %20 : vector<16x128xf32> to vector<16x128xbf16>
    %c0_13 = arith.constant 0 : index
    %c0_14 = arith.constant 0 : index
    %c0_15 = arith.constant 0 : index
    %22 = vector.load %arg8[%c0_13, %c0_14, %c0_15] : memref<1x128x640xbf16, #tpu.memory_space<vmem>>, vector<1x128x640xbf16>
    %23 = vector.shape_cast %22 : vector<1x128x640xbf16> to vector<128x640xbf16>
    %cst_16 = arith.constant dense<0.000000e+00> : vector<16x640xf32>
    %24 = tpu.matmul %21, %23, %cst_16 {dimension_numbers = #tpu.dot_dimension_numbers<[1], [0], [0], [1], [0, 0, 1, 1], [], []>} : vector<16x128xbf16>, vector<128x640xbf16>, vector<16x640xf32> -> vector<16x640xf32>
    %25 = vector.extract_strided_slice %24 {offsets = [0, 0], sizes = [16, 128], strides = [1, 1]} : vector<16x640xf32> to vector<16x128xf32>
    %26 = vector.extract_strided_slice %24 {offsets = [0, 128], sizes = [16, 128], strides = [1, 1]} : vector<16x640xf32> to vector<16x128xf32>
    %27 = vector.extract_strided_slice %24 {offsets = [0, 256], sizes = [16, 128], strides = [1, 1]} : vector<16x640xf32> to vector<16x128xf32>
    %28 = vector.extract_strided_slice %24 {offsets = [0, 384], sizes = [16, 128], strides = [1, 1]} : vector<16x640xf32> to vector<16x128xf32>
    %29 = vector.extract_strided_slice %24 {offsets = [0, 512], sizes = [16, 128], strides = [1, 1]} : vector<16x640xf32> to vector<16x128xf32>
    %30 = arith.mulf %25, %4 : vector<16x128xf32>
    %31 = arith.mulf %26, %5 : vector<16x128xf32>
    %32 = arith.addf %30, %31 : vector<16x128xf32>
    %33 = arith.mulf %27, %4 : vector<16x128xf32>
    %34 = arith.mulf %28, %5 : vector<16x128xf32>
    %35 = arith.addf %33, %34 : vector<16x128xf32>
    %36 = vector.extract_strided_slice %32 {offsets = [0, 0], sizes = [16, 32], strides = [1, 1]} : vector<16x128xf32> to vector<16x32xf32>
    %37 = arith.truncf %36 : vector<16x32xf32> to vector<16x32xbf16>
    %38 = vector.extract_strided_slice %35 {offsets = [0, 0], sizes = [16, 32], strides = [1, 1]} : vector<16x128xf32> to vector<16x32xf32>
    %39 = arith.truncf %38 : vector<16x32xf32> to vector<16x32xbf16>
    %40 = vector.extract_strided_slice %29 {offsets = [0, 0], sizes = [16, 32], strides = [1, 1]} : vector<16x128xf32> to vector<16x32xf32>
    %41 = arith.truncf %40 : vector<16x32xf32> to vector<16x32xbf16>
    "tpu.trace_start"() <{level = 10 : i32, message = "qd,kd->qk"}> : () -> ()
    %cst_17 = arith.constant dense<0.000000e+00> : vector<16x16xf32>
    %42 = tpu.matmul %37, %39, %cst_17 {dimension_numbers = #tpu.dot_dimension_numbers<[1], [1], [0], [0], [0, 0, 1, 0], [], []>} : vector<16x32xbf16>, vector<16x32xbf16>, vector<16x16xf32> -> vector<16x16xf32>
    "tpu.trace_stop"() : () -> ()
    %43 = arith.addf %42, %6 : vector<16x16xf32>
    %cst_18 = arith.constant dense<0xFF800000> : vector<16xf32>
    %44 = vector.multi_reduction <maximumf>, %43, %cst_18 [1] : vector<16x16xf32> to vector<16xf32>
    %45 = vector.shape_cast %44 : vector<16xf32> to vector<16x1xf32>
    %46 = vector.broadcast %45 : vector<16x1xf32> to vector<16x16xf32>
    %47 = arith.subf %43, %46 : vector<16x16xf32>
    %48 = math.exp %47 : vector<16x16xf32>
    %cst_19 = arith.constant dense<0.000000e+00> : vector<16xf32>
    %49 = vector.multi_reduction <add>, %48, %cst_19 [1] : vector<16x16xf32> to vector<16xf32>
    %50 = vector.shape_cast %49 : vector<16xf32> to vector<16x1xf32>
    %51 = tpu.reciprocal %50 {approx = true} : vector<16x1xf32> -> vector<16x1xf32>
    %52 = vector.broadcast %51 : vector<16x1xf32> to vector<16x16xf32>
    %53 = arith.mulf %48, %52 : vector<16x16xf32>
    %54 = arith.truncf %53 : vector<16x16xf32> to vector<16x16xbf16>
    %cst_20 = arith.constant dense<0.000000e+00> : vector<16x32xf32>
    %55 = tpu.matmul %54, %41, %cst_20 {dimension_numbers = #tpu.dot_dimension_numbers<[1], [0], [0], [1], [0, 0, 1, 1], [], []>} : vector<16x16xbf16>, vector<16x32xbf16>, vector<16x32xf32> -> vector<16x32xf32>
    %c0_21 = arith.constant 0 : index
    %c0_22 = arith.constant 0 : index
    %56 = vector.load %arg17[%c0_21, %c0_22] : memref<16x128xf32, #tpu.memory_space<vmem>>, vector<16x32xf32>
    tpu.vector_store %arg17[%c0_21, %c0_22], %55 {strides = array<i32>} : memref<16x128xf32, #tpu.memory_space<vmem>>, vector<16x32xf32>,
    %57 = vector.extract_strided_slice %32 {offsets = [0, 32], sizes = [16, 32], strides = [1, 1]} : vector<16x128xf32> to vector<16x32xf32>
    %58 = arith.truncf %57 : vector<16x32xf32> to vector<16x32xbf16>
    %59 = vector.extract_strided_slice %35 {offsets = [0, 32], sizes = [16, 32], strides = [1, 1]} : vector<16x128xf32> to vector<16x32xf32>
    %60 = arith.truncf %59 : vector<16x32xf32> to vector<16x32xbf16>
    %61 = vector.extract_strided_slice %29 {offsets = [0, 32], sizes = [16, 32], strides = [1, 1]} : vector<16x128xf32> to vector<16x32xf32>
    %62 = arith.truncf %61 : vector<16x32xf32> to vector<16x32xbf16>
    "tpu.trace_start"() <{level = 10 : i32, message = "qd,kd->qk"}> : () -> ()
    %cst_23 = arith.constant dense<0.000000e+00> : vector<16x16xf32>
    %63 = tpu.matmul %58, %60, %cst_23 {dimension_numbers = #tpu.dot_dimension_numbers<[1], [1], [0], [0], [0, 0, 1, 0], [], []>} : vector<16x32xbf16>, vector<16x32xbf16>, vector<16x16xf32> -> vector<16x16xf32>
    "tpu.trace_stop"() : () -> ()
    %64 = arith.addf %63, %6 : vector<16x16xf32>
    %cst_24 = arith.constant dense<0xFF800000> : vector<16xf32>
    %65 = vector.multi_reduction <maximumf>, %64, %cst_24 [1] : vector<16x16xf32> to vector<16xf32>
    %66 = vector.shape_cast %65 : vector<16xf32> to vector<16x1xf32>
    %67 = vector.broadcast %66 : vector<16x1xf32> to vector<16x16xf32>
    %68 = arith.subf %64, %67 : vector<16x16xf32>
    %69 = math.exp %68 : vector<16x16xf32>
    %cst_25 = arith.constant dense<0.000000e+00> : vector<16xf32>
    %70 = vector.multi_reduction <add>, %69, %cst_25 [1] : vector<16x16xf32> to vector<16xf32>
    %71 = vector.shape_cast %70 : vector<16xf32> to vector<16x1xf32>
    %72 = tpu.reciprocal %71 {approx = true} : vector<16x1xf32> -> vector<16x1xf32>
    %73 = vector.broadcast %72 : vector<16x1xf32> to vector<16x16xf32>
    %74 = arith.mulf %69, %73 : vector<16x16xf32>
    %75 = arith.truncf %74 : vector<16x16xf32> to vector<16x16xbf16>
    %cst_26 = arith.constant dense<0.000000e+00> : vector<16x32xf32>
    %76 = tpu.matmul %75, %62, %cst_26 {dimension_numbers = #tpu.dot_dimension_numbers<[1], [0], [0], [1], [0, 0, 1, 1], [], []>} : vector<16x16xbf16>, vector<16x32xbf16>, vector<16x32xf32> -> vector<16x32xf32>
    %c0_27 = arith.constant 0 : index
    %c32 = arith.constant 32 : index
    %77 = vector.load %arg17[%c0_27, %c32] : memref<16x128xf32, #tpu.memory_space<vmem>>, vector<16x32xf32>
    tpu.vector_store %arg17[%c0_27, %c32], %76 {strides = array<i32>} : memref<16x128xf32, #tpu.memory_space<vmem>>, vector<16x32xf32>,
    %78 = vector.extract_strided_slice %32 {offsets = [0, 64], sizes = [16, 32], strides = [1, 1]} : vector<16x128xf32> to vector<16x32xf32>
    %79 = arith.truncf %78 : vector<16x32xf32> to vector<16x32xbf16>
    %80 = vector.extract_strided_slice %35 {offsets = [0, 64], sizes = [16, 32], strides = [1, 1]} : vector<16x128xf32> to vector<16x32xf32>
    %81 = arith.truncf %80 : vector<16x32xf32> to vector<16x32xbf16>
    %82 = vector.extract_strided_slice %29 {offsets = [0, 64], sizes = [16, 32], strides = [1, 1]} : vector<16x128xf32> to vector<16x32xf32>
    %83 = arith.truncf %82 : vector<16x32xf32> to vector<16x32xbf16>
    "tpu.trace_start"() <{level = 10 : i32, message = "qd,kd->qk"}> : () -> ()
    %cst_28 = arith.constant dense<0.000000e+00> : vector<16x16xf32>
    %84 = tpu.matmul %79, %81, %cst_28 {dimension_numbers = #tpu.dot_dimension_numbers<[1], [1], [0], [0], [0, 0, 1, 0], [], []>} : vector<16x32xbf16>, vector<16x32xbf16>, vector<16x16xf32> -> vector<16x16xf32>
    "tpu.trace_stop"() : () -> ()
    %85 = arith.addf %84, %6 : vector<16x16xf32>
    %cst_29 = arith.constant dense<0xFF800000> : vector<16xf32>
    %86 = vector.multi_reduction <maximumf>, %85, %cst_29 [1] : vector<16x16xf32> to vector<16xf32>
    %87 = vector.shape_cast %86 : vector<16xf32> to vector<16x1xf32>
    %88 = vector.broadcast %87 : vector<16x1xf32> to vector<16x16xf32>
    %89 = arith.subf %85, %88 : vector<16x16xf32>
    %90 = math.exp %89 : vector<16x16xf32>
    %cst_30 = arith.constant dense<0.000000e+00> : vector<16xf32>
    %91 = vector.multi_reduction <add>, %90, %cst_30 [1] : vector<16x16xf32> to vector<16xf32>
    %92 = vector.shape_cast %91 : vector<16xf32> to vector<16x1xf32>
    %93 = tpu.reciprocal %92 {approx = true} : vector<16x1xf32> -> vector<16x1xf32>
    %94 = vector.broadcast %93 : vector<16x1xf32> to vector<16x16xf32>
    %95 = arith.mulf %90, %94 : vector<16x16xf32>
    %96 = arith.truncf %95 : vector<16x16xf32> to vector<16x16xbf16>
    %cst_31 = arith.constant dense<0.000000e+00> : vector<16x32xf32>
    %97 = tpu.matmul %96, %83, %cst_31 {dimension_numbers = #tpu.dot_dimension_numbers<[1], [0], [0], [1], [0, 0, 1, 1], [], []>} : vector<16x16xbf16>, vector<16x32xbf16>, vector<16x32xf32> -> vector<16x32xf32>
    %c0_32 = arith.constant 0 : index
    %c64 = arith.constant 64 : index
    %98 = vector.load %arg17[%c0_32, %c64] : memref<16x128xf32, #tpu.memory_space<vmem>>, vector<16x32xf32>
    tpu.vector_store %arg17[%c0_32, %c64], %97 {strides = array<i32>} : memref<16x128xf32, #tpu.memory_space<vmem>>, vector<16x32xf32>,
    %99 = vector.extract_strided_slice %32 {offsets = [0, 96], sizes = [16, 32], strides = [1, 1]} : vector<16x128xf32> to vector<16x32xf32>
    %100 = arith.truncf %99 : vector<16x32xf32> to vector<16x32xbf16>
    %101 = vector.extract_strided_slice %35 {offsets = [0, 96], sizes = [16, 32], strides = [1, 1]} : vector<16x128xf32> to vector<16x32xf32>
    %102 = arith.truncf %101 : vector<16x32xf32> to vector<16x32xbf16>
    %103 = vector.extract_strided_slice %29 {offsets = [0, 96], sizes = [16, 32], strides = [1, 1]} : vector<16x128xf32> to vector<16x32xf32>
    %104 = arith.truncf %103 : vector<16x32xf32> to vector<16x32xbf16>
    "tpu.trace_start"() <{level = 10 : i32, message = "qd,kd->qk"}> : () -> ()
    %cst_33 = arith.constant dense<0.000000e+00> : vector<16x16xf32>
    %105 = tpu.matmul %100, %102, %cst_33 {dimension_numbers = #tpu.dot_dimension_numbers<[1], [1], [0], [0], [0, 0, 1, 0], [], []>} : vector<16x32xbf16>, vector<16x32xbf16>, vector<16x16xf32> -> vector<16x16xf32>
    "tpu.trace_stop"() : () -> ()
    %106 = arith.addf %105, %6 : vector<16x16xf32>
    %cst_34 = arith.constant dense<0xFF800000> : vector<16xf32>
    %107 = vector.multi_reduction <maximumf>, %106, %cst_34 [1] : vector<16x16xf32> to vector<16xf32>
    %108 = vector.shape_cast %107 : vector<16xf32> to vector<16x1xf32>
    %109 = vector.broadcast %108 : vector<16x1xf32> to vector<16x16xf32>
    %110 = arith.subf %106, %109 : vector<16x16xf32>
    %111 = math.exp %110 : vector<16x16xf32>
    %cst_35 = arith.constant dense<0.000000e+00> : vector<16xf32>
    %112 = vector.multi_reduction <add>, %111, %cst_35 [1] : vector<16x16xf32> to vector<16xf32>
    %113 = vector.shape_cast %112 : vector<16xf32> to vector<16x1xf32>
    %114 = tpu.reciprocal %113 {approx = true} : vector<16x1xf32> -> vector<16x1xf32>
    %115 = vector.broadcast %114 : vector<16x1xf32> to vector<16x16xf32>
    %116 = arith.mulf %111, %115 : vector<16x16xf32>
    %117 = arith.truncf %116 : vector<16x16xf32> to vector<16x16xbf16>
    %cst_36 = arith.constant dense<0.000000e+00> : vector<16x32xf32>
    %118 = tpu.matmul %117, %104, %cst_36 {dimension_numbers = #tpu.dot_dimension_numbers<[1], [0], [0], [1], [0, 0, 1, 1], [], []>} : vector<16x16xbf16>, vector<16x32xbf16>, vector<16x32xf32> -> vector<16x32xf32>
    %c0_37 = arith.constant 0 : index
    %c96 = arith.constant 96 : index
    %119 = vector.load %arg17[%c0_37, %c96] : memref<16x128xf32, #tpu.memory_space<vmem>>, vector<16x32xf32>
    tpu.vector_store %arg17[%c0_37, %c96], %118 {strides = array<i32>} : memref<16x128xf32, #tpu.memory_space<vmem>>, vector<16x32xf32>,
    %c0_38 = arith.constant 0 : index
    %c0_39 = arith.constant 0 : index
    %120 = vector.load %arg17[%c0_38, %c0_39] : memref<16x128xf32, #tpu.memory_space<vmem>>, vector<16x128xf32>
    %121 = arith.truncf %120 : vector<16x128xf32> to vector<16x128xbf16>
    %c0_40 = arith.constant 0 : index
    %c0_41 = arith.constant 0 : index
    %c0_42 = arith.constant 0 : index
    %122 = vector.load %arg9[%c0_40, %c0_41, %c0_42] : memref<1x128x128xbf16, #tpu.memory_space<vmem>>, vector<1x128x128xbf16>
    %123 = vector.shape_cast %122 : vector<1x128x128xbf16> to vector<128x128xbf16>
    %cst_43 = arith.constant dense<0.000000e+00> : vector<16x128xf32>
    %124 = tpu.matmul %121, %123, %cst_43 {dimension_numbers = #tpu.dot_dimension_numbers<[1], [0], [0], [1], [0, 0, 1, 1], [], []>} : vector<16x128xbf16>, vector<128x128xbf16>, vector<16x128xf32> -> vector<16x128xf32>
    %125 = arith.addf %3, %124 : vector<16x128xf32>
    %c0_44 = arith.constant 0 : index
    %c0_45 = arith.constant 0 : index
    %c0_46 = arith.constant 0 : index
    %126 = vector.load %arg10[%c0_44, %c0_45, %c0_46] : memref<1x1x128xf32, #tpu.memory_space<vmem>>, vector<1x1x128xf32>
    %127 = vector.shape_cast %126 : vector<1x1x128xf32> to vector<1x128xf32>
    %128 = arith.mulf %125, %125 : vector<16x128xf32>
    %cst_47 = arith.constant dense<0.000000e+00> : vector<16xf32>
    %129 = vector.multi_reduction <add>, %128, %cst_47 [1] : vector<16x128xf32> to vector<16xf32>
    %130 = vector.shape_cast %129 : vector<16xf32> to vector<16x1xf32>
    %cst_48 = arith.constant 1.280000e+02 : f32
    %131 = vector.broadcast %cst_48 : f32 to vector<16x1xf32>
    %132 = arith.divf %130, %131 : vector<16x1xf32>
    %cst_49 = arith.constant 9.99999997E-7 : f32
    %133 = vector.broadcast %cst_49 : f32 to vector<16x1xf32>
    %134 = arith.addf %132, %133 : vector<16x1xf32>
    %135 = math.rsqrt %134 : vector<16x1xf32>
    %136 = vector.broadcast %135 : vector<16x1xf32> to vector<16x128xf32>
    %137 = arith.mulf %125, %136 : vector<16x128xf32>
    %138 = vector.broadcast %127 : vector<1x128xf32> to vector<16x128xf32>
    %139 = arith.mulf %137, %138 : vector<16x128xf32>
    %140 = arith.truncf %139 : vector<16x128xf32> to vector<16x128xbf16>
    %c0_50 = arith.constant 0 : index
    %c0_51 = arith.constant 0 : index
    %c0_52 = arith.constant 0 : index
    %141 = vector.load %arg11[%c0_50, %c0_51, %c0_52] : memref<1x128x512xbf16, #tpu.memory_space<vmem>>, vector<1x128x512xbf16>
    %142 = vector.shape_cast %141 : vector<1x128x512xbf16> to vector<128x512xbf16>
    %cst_53 = arith.constant dense<0.000000e+00> : vector<16x512xf32>
    %143 = tpu.matmul %140, %142, %cst_53 {dimension_numbers = #tpu.dot_dimension_numbers<[1], [0], [0], [1], [0, 0, 1, 1], [], []>} : vector<16x128xbf16>, vector<128x512xbf16>, vector<16x512xf32> -> vector<16x512xf32>
    %144 = vector.extract_strided_slice %143 {offsets = [0, 0], sizes = [16, 256], strides = [1, 1]} : vector<16x512xf32> to vector<16x256xf32>
    %145 = vector.extract_strided_slice %143 {offsets = [0, 256], sizes = [16, 256], strides = [1, 1]} : vector<16x512xf32> to vector<16x256xf32>
    %146 = arith.negf %144 : vector<16x256xf32>
    %147 = math.exp %146 : vector<16x256xf32>
    %cst_54 = arith.constant 1.000000e+00 : f32
    %148 = vector.broadcast %cst_54 : f32 to vector<16x256xf32>
    %149 = arith.addf %148, %147 : vector<16x256xf32>
    %150 = arith.divf %148, %149 : vector<16x256xf32>
    %151 = arith.mulf %144, %150 : vector<16x256xf32>
    %152 = arith.mulf %151, %145 : vector<16x256xf32>
    %153 = arith.truncf %152 : vector<16x256xf32> to vector<16x256xbf16>
    %c0_55 = arith.constant 0 : index
    %c0_56 = arith.constant 0 : index
    %c0_57 = arith.constant 0 : index
    %154 = vector.load %arg12[%c0_55, %c0_56, %c0_57] : memref<1x256x128xbf16, #tpu.memory_space<vmem>>, vector<1x256x128xbf16>
    %155 = vector.shape_cast %154 : vector<1x256x128xbf16> to vector<256x128xbf16>
    %cst_58 = arith.constant dense<0.000000e+00> : vector<16x128xf32>
    %156 = tpu.matmul %153, %155, %cst_58 {dimension_numbers = #tpu.dot_dimension_numbers<[1], [0], [0], [1], [0, 0, 1, 1], [], []>} : vector<16x256xbf16>, vector<256x128xbf16>, vector<16x128xf32> -> vector<16x128xf32>
    %157 = arith.addf %125, %156 : vector<16x128xf32>
    %c0_59 = arith.constant 0 : index
    %c0_60 = arith.constant 0 : index
    %158 = vector.load %arg16[%c0_59, %c0_60] : memref<16x128xf32, #tpu.memory_space<vmem>>, vector<16x128xf32>
    tpu.vector_store %arg16[%c0_59, %c0_60], %157 {strides = array<i32>} : memref<16x128xf32, #tpu.memory_space<vmem>>, vector<16x128xf32>,
    %c1_i32 = arith.constant 1 : i32
    %159 = arith.cmpi eq, %arg0, %c1_i32 : i32
    %160 = arith.extui %159 : i1 to i32
    %c0_i32_61 = arith.constant 0 : i32
    %161 = arith.cmpi ne, %160, %c0_i32_61 : i32
    scf.if %161 {
      %c0_62 = arith.constant 0 : index
      %162 = memref.load %arg1[%c0_62] : memref<1xi32, #tpu.memory_space<smem>>
      %c1_i32_63 = arith.constant 1 : i32
      %163 = arith.subi %162, %c1_i32_63 : i32
      %164 = arith.index_cast %163 : i32 to index
      %c0_64 = arith.constant 0 : index
      %165 = vector.load %arg16[%164, %c0_64] : memref<16x128xf32, #tpu.memory_space<vmem>>, vector<1x128xf32>
      %c0_65 = arith.constant 0 : index
      %c0_66 = arith.constant 0 : index
      %166 = vector.load %arg13[%c0_65, %c0_66] : memref<1x128xf32, #tpu.memory_space<vmem>>, vector<1x128xf32>
      %167 = arith.mulf %165, %165 : vector<1x128xf32>
      %cst_67 = arith.constant dense<0.000000e+00> : vector<1xf32>
      %168 = vector.multi_reduction <add>, %167, %cst_67 [1] : vector<1x128xf32> to vector<1xf32>
      %169 = vector.shape_cast %168 : vector<1xf32> to vector<1x1xf32>
      %cst_68 = arith.constant 1.280000e+02 : f32
      %170 = vector.broadcast %cst_68 : f32 to vector<1x1xf32>
      %171 = arith.divf %169, %170 : vector<1x1xf32>
      %cst_69 = arith.constant 9.99999997E-7 : f32
      %172 = vector.broadcast %cst_69 : f32 to vector<1x1xf32>
      %173 = arith.addf %171, %172 : vector<1x1xf32>
      %174 = math.rsqrt %173 : vector<1x1xf32>
      %175 = vector.broadcast %174 : vector<1x1xf32> to vector<1x128xf32>
      %176 = arith.mulf %165, %175 : vector<1x128xf32>
      %177 = arith.mulf %176, %166 : vector<1x128xf32>
      %178 = arith.truncf %177 : vector<1x128xf32> to vector<1x128xbf16>
      %c0_70 = arith.constant 0 : index
      %c0_71 = arith.constant 0 : index
      %179 = vector.load %arg14[%c0_70, %c0_71] : memref<128x256xbf16, #tpu.memory_space<vmem>>, vector<128x256xbf16>
      %cst_72 = arith.constant dense<0.000000e+00> : vector<1x256xf32>
      %180 = tpu.matmul %178, %179, %cst_72 {dimension_numbers = #tpu.dot_dimension_numbers<[1], [0], [0], [1], [0, 0, 1, 1], [], []>} : vector<1x128xbf16>, vector<128x256xbf16>, vector<1x256xf32> -> vector<1x256xf32>
      %cst_73 = arith.constant dense<0xFF800000> : vector<1xf32>
      %181 = vector.multi_reduction <maximumf>, %180, %cst_73 [1] : vector<1x256xf32> to vector<1xf32>
      %182 = vector.shape_cast %181 : vector<1xf32> to vector<1x1xf32>
      %183 = tpu.iota {dimensions = array<i32: 1>} : vector<1x256xi32>
      %184 = arith.sitofp %183 : vector<1x256xi32> to vector<1x256xf32>
      %185 = vector.broadcast %182 : vector<1x1xf32> to vector<1x256xf32>
      %186 = arith.cmpf oge, %180, %185 : vector<1x256xf32>
      %cst_74 = arith.constant 2.560000e+02 : f32
      %187 = vector.broadcast %cst_74 : f32 to vector<1x256xf32>
      %188 = arith.select %186, %184, %187 : vector<1x256xi1>, vector<1x256xf32>
      %cst_75 = arith.constant dense<0x7F800000> : vector<1xf32>
      %189 = vector.multi_reduction <minimumf>, %188, %cst_75 [1] : vector<1x256xf32> to vector<1xf32>
      %190 = vector.shape_cast %189 : vector<1xf32> to vector<1x1xf32>
      %c0_76 = arith.constant 0 : index
      %c0_77 = arith.constant 0 : index
      %191 = vector.load %arg15[%c0_76, %c0_77] : memref<1x1xf32, #tpu.memory_space<vmem>>, vector<1x1xf32>
      tpu.vector_store %arg15[%c0_76, %c0_77], %190 {strides = array<i32>} : memref<1x1xf32, #tpu.memory_space<vmem>>, vector<1x1xf32>,
    } else {
    }
    return
  }
  func.func @transform_0(%arg0: i32, %arg1: memref<1xi32, #tpu.memory_space<smem>>) -> (i32, i32) {
    %c0_i32 = arith.constant 0 : i32
    %c0_i32_0 = arith.constant 0 : i32
    %c0_i32_1 = arith.constant 0 : i32
    return %c0_i32, %c0_i32_0 : i32, i32
  }
  func.func @transform_1(%arg0: i32, %arg1: memref<1xi32, #tpu.memory_space<smem>>) -> (i32, i32) {
    %c0_i32 = arith.constant 0 : i32
    %c0_i32_0 = arith.constant 0 : i32
    %c0_i32_1 = arith.constant 0 : i32
    return %c0_i32, %c0_i32_0 : i32, i32
  }
  func.func @transform_2(%arg0: i32, %arg1: memref<1xi32, #tpu.memory_space<smem>>) -> (i32, i32) {
    %c0_i32 = arith.constant 0 : i32
    %c0_i32_0 = arith.constant 0 : i32
    %c0_i32_1 = arith.constant 0 : i32
    return %c0_i32, %c0_i32_0 : i32, i32
  }
  func.func @transform_3(%arg0: i32, %arg1: memref<1xi32, #tpu.memory_space<smem>>) -> (i32, i32) {
    %c0_i32 = arith.constant 0 : i32
    %c0_i32_0 = arith.constant 0 : i32
    %c0_i32_1 = arith.constant 0 : i32
    return %c0_i32, %c0_i32_0 : i32, i32
  }
  func.func @transform_4(%arg0: i32, %arg1: memref<1xi32, #tpu.memory_space<smem>>) -> (i32, i32) {
    %c0_i32 = arith.constant 0 : i32
    %c0_i32_0 = arith.constant 0 : i32
    %c0_i32_1 = arith.constant 0 : i32
    return %c0_i32, %c0_i32_0 : i32, i32
  }
  func.func @transform_5(%arg0: i32, %arg1: memref<1xi32, #tpu.memory_space<smem>>) -> (i32, i32, i32) {
    %c0_i32 = arith.constant 0 : i32
    %c0_i32_0 = arith.constant 0 : i32
    %c0_i32_1 = arith.constant 0 : i32
    return %arg0, %c0_i32, %c0_i32_0 : i32, i32, i32
  }
  func.func @transform_6(%arg0: i32, %arg1: memref<1xi32, #tpu.memory_space<smem>>) -> (i32, i32, i32) {
    %c0_i32 = arith.constant 0 : i32
    %c0_i32_0 = arith.constant 0 : i32
    %c0_i32_1 = arith.constant 0 : i32
    return %arg0, %c0_i32, %c0_i32_0 : i32, i32, i32
  }
  func.func @transform_7(%arg0: i32, %arg1: memref<1xi32, #tpu.memory_space<smem>>) -> (i32, i32, i32) {
    %c0_i32 = arith.constant 0 : i32
    %c0_i32_0 = arith.constant 0 : i32
    %c0_i32_1 = arith.constant 0 : i32
    return %arg0, %c0_i32, %c0_i32_0 : i32, i32, i32
  }
  func.func @transform_8(%arg0: i32, %arg1: memref<1xi32, #tpu.memory_space<smem>>) -> (i32, i32, i32) {
    %c0_i32 = arith.constant 0 : i32
    %c0_i32_0 = arith.constant 0 : i32
    %c0_i32_1 = arith.constant 0 : i32
    return %arg0, %c0_i32, %c0_i32_0 : i32, i32, i32
  }
  func.func @transform_9(%arg0: i32, %arg1: memref<1xi32, #tpu.memory_space<smem>>) -> (i32, i32, i32) {
    %c0_i32 = arith.constant 0 : i32
    %c0_i32_0 = arith.constant 0 : i32
    %c0_i32_1 = arith.constant 0 : i32
    return %arg0, %c0_i32, %c0_i32_0 : i32, i32, i32
  }
  func.func @transform_10(%arg0: i32, %arg1: memref<1xi32, #tpu.memory_space<smem>>) -> (i32, i32, i32) {
    %c0_i32 = arith.constant 0 : i32
    %c0_i32_0 = arith.constant 0 : i32
    %c0_i32_1 = arith.constant 0 : i32
    return %arg0, %c0_i32, %c0_i32_0 : i32, i32, i32
  }
  func.func @transform_11(%arg0: i32, %arg1: memref<1xi32, #tpu.memory_space<smem>>) -> (i32, i32) {
    %c0_i32 = arith.constant 0 : i32
    %c0_i32_0 = arith.constant 0 : i32
    %c0_i32_1 = arith.constant 0 : i32
    return %c0_i32, %c0_i32_0 : i32, i32
  }
  func.func @transform_12(%arg0: i32, %arg1: memref<1xi32, #tpu.memory_space<smem>>) -> (i32, i32) {
    %c0_i32 = arith.constant 0 : i32
    %c0_i32_0 = arith.constant 0 : i32
    %c0_i32_1 = arith.constant 0 : i32
    return %c0_i32, %c0_i32_0 : i32, i32
  }
  func.func @transform_13(%arg0: i32, %arg1: memref<1xi32, #tpu.memory_space<smem>>) -> (i32, i32) {
    %c0_i32 = arith.constant 0 : i32
    %c0_i32_0 = arith.constant 0 : i32
    %c0_i32_1 = arith.constant 0 : i32
    return %c0_i32, %c0_i32_0 : i32, i32
  }
}

</mosaic_0001>

<llo_original>
// kernel: tile.20
$region0: #{tile.20}
  %s0 = inlined_call_operand.vmem [shape: f32[16,8,16], index: 0, kind: input, shape index: {}]
  %s1 = inlined_call_operand.vmem [shape: f32[16,128], index: 1, kind: output, shape index: {}]
  %v2 = vld [vmem:[%s0] ss:$8 sm:$0xf]
  %v3 = vld [vmem:[%s0] ss:$8 sm:$0xf0]
  %vm4 = vcmask 1047556
  %v5 = vsel %vm4, %v3, %v2
  %vm6 = vcmask 130048
  %7 = vst.msk [vmem:[%s1] sm:$0xff] %vm6, %v5
  %s8 = scalar_lea.vmem %s0, 64
  %v9 = vld [vmem:[%s8] ss:$8 sm:$0xf]
  %s10 = scalar_lea.vmem %s0, 64
  %v11 = vld [vmem:[%s10] ss:$8 sm:$0xf0]
  %vm12 = vcmask 1047556
  %v13 = vsel %vm12, %v11, %v9
  %vm14 = vcmask 130048
  %s15 = scalar_lea.vmem %s1, 8
  %16 = vst.msk [vmem:[%s15] sm:$0xff] %vm14, %v13
  %s17 = scalar_lea.vmem %s0, 7
  %v18 = vld [vmem:[%s17] ss:$8 sm:$0xf]
  %s19 = scalar_lea.vmem %s0, 7
  %v20 = vld [vmem:[%s19] ss:$8 sm:$0xf0]
  %vm21 = vcmask 1047556
  %v22 = vsel %vm21, %v20, %v18
  %23 = vrot.lane.b32.xlu0 %v22, 112
  %v24 = vpop.permute.xlu0 %23
  %vm25 = vcmask 1048448
  %26 = vst.msk [vmem:[%s1] sm:$0xff] %vm25, %v24
  %s27 = scalar_lea.vmem %s0, 71
  %v28 = vld [vmem:[%s27] ss:$8 sm:$0xf]
  %s29 = scalar_lea.vmem %s0, 71
  %v30 = vld [vmem:[%s29] ss:$8 sm:$0xf0]
  %vm31 = vcmask 1047556
  %v32 = vsel %vm31, %v30, %v28
  %33 = vrot.lane.b32.xlu0 %v32, 112
  %v34 = vpop.permute.xlu0 %33
  %vm35 = vcmask 1048448
  %s36 = scalar_lea.vmem %s1, 8
  %37 = vst.msk [vmem:[%s36] sm:$0xff] %vm35, %v34
  %s38 = scalar_lea.vmem %s0, 6
  %v39 = vld [vmem:[%s38] ss:$8 sm:$0xf]
  %s40 = scalar_lea.vmem %s0, 6
  %v41 = vld [vmem:[%s40] ss:$8 sm:$0xf0]
  %vm42 = vcmask 1047556
  %v43 = vsel %vm42, %v41, %v39
  %44 = vrot.lane.b32.xlu0 %v43, 96
  %v45 = vpop.permute.xlu0 %44
  %vm46 = vcmask 917248
  %47 = vst.msk [vmem:[%s1] sm:$0xff] %vm46, %v45
  %s48 = scalar_lea.vmem %s0, 70
  %v49 = vld [vmem:[%s48] ss:$8 sm:$0xf]
  %s50 = scalar_lea.vmem %s0, 70
  %v51 = vld [vmem:[%s50] ss:$8 sm:$0xf0]
  %vm52 = vcmask 1047556
  %v53 = vsel %vm52, %v51, %v49
  %54 = vrot.lane.b32.xlu0 %v53, 96
  %v55 = vpop.permute.xlu0 %54
  %vm56 = vcmask 917248
  %s57 = scalar_lea.vmem %s1, 8
  %58 = vst.msk [vmem:[%s57] sm:$0xff] %vm56, %v55
  %s59 = scalar_lea.vmem %s0, 5
  %v60 = vld [vmem:[%s59] ss:$8 sm:$0xf]
  %s61 = scalar_lea.vmem %s0, 5
  %v62 = vld [vmem:[%s61] ss:$8 sm:$0xf0]
  %vm63 = vcmask 1047556
  %v64 = vsel %vm63, %v62, %v60
  %65 = vrot.lane.b32.xlu0 %v64, 80
  %v66 = vpop.permute.xlu0 %65
  %vm67 = vcmask 786048
  %68 = vst.msk [vmem:[%s1] sm:$0xff] %vm67, %v66
  %s69 = scalar_lea.vmem %s0, 69
  %v70 = vld [vmem:[%s69] ss:$8 sm:$0xf]
  %s71 = scalar_lea.vmem %s0, 69
  %v72 = vld [vmem:[%s71] ss:$8 sm:$0xf0]
  %vm73 = vcmask 1047556
  %v74 = vsel %vm73, %v72, %v70
  %75 = vrot.lane.b32.xlu0 %v74, 80
  %v76 = vpop.permute.xlu0 %75
  %vm77 = vcmask 786048
  %s78 = scalar_lea.vmem %s1, 8
  %79 = vst.msk [vmem:[%s78] sm:$0xff] %vm77, %v76
  %s80 = scalar_lea.vmem %s0, 4
  %v81 = vld [vmem:[%s80] ss:$8 sm:$0xf]
  %s82 = scalar_lea.vmem %s0, 4
  %v83 = vld [vmem:[%s82] ss:$8 sm:$0xf0]
  %vm84 = vcmask 1047556
  %v85 = vsel %vm84, %v83, %v81
  %86 = vrot.lane.b32.xlu0 %v85, 64
  %v87 = vpop.permute.xlu0 %86
  %vm88 = vcmask 654848
  %89 = vst.msk [vmem:[%s1] sm:$0xff] %vm88, %v87
  %s90 = scalar_lea.vmem %s0, 68
  %v91 = vld [vmem:[%s90] ss:$8 sm:$0xf]
  %s92 = scalar_lea.vmem %s0, 68
  %v93 = vld [vmem:[%s92] ss:$8 sm:$0xf0]
  %vm94 = vcmask 1047556
  %v95 = vsel %vm94, %v93, %v91
  %96 = vrot.lane.b32.xlu0 %v95, 64
  %v97 = vpop.permute.xlu0 %96
  %vm98 = vcmask 654848
  %s99 = scalar_lea.vmem %s1, 8
  %100 = vst.msk [vmem:[%s99] sm:$0xff] %vm98, %v97
  %s101 = scalar_lea.vmem %s0, 3
  %v102 = vld [vmem:[%s101] ss:$8 sm:$0xf]
  %s103 = scalar_lea.vmem %s0, 3
  %v104 = vld [vmem:[%s103] ss:$8 sm:$0xf0]
  %vm105 = vcmask 1047556
  %v106 = vsel %vm105, %v104, %v102
  %107 = vrot.lane.b32.xlu0 %v106, 48
  %v108 = vpop.permute.xlu0 %107
  %vm109 = vcmask 523648
  %110 = vst.msk [vmem:[%s1] sm:$0xff] %vm109, %v108
  %s111 = scalar_lea.vmem %s0, 67
  %v112 = vld [vmem:[%s111] ss:$8 sm:$0xf]
  %s113 = scalar_lea.vmem %s0, 67
  %v114 = vld [vmem:[%s113] ss:$8 sm:$0xf0]
  %vm115 = vcmask 1047556
  %v116 = vsel %vm115, %v114, %v112
  %117 = vrot.lane.b32.xlu0 %v116, 48
  %v118 = vpop.permute.xlu0 %117
  %vm119 = vcmask 523648
  %s120 = scalar_lea.vmem %s1, 8
  %121 = vst.msk [vmem:[%s120] sm:$0xff] %vm119, %v118
  %s122 = scalar_lea.vmem %s0, 2
  %v123 = vld [vmem:[%s122] ss:$8 sm:$0xf]
  %s124 = scalar_lea.vmem %s0, 2
  %v125 = vld [vmem:[%s124] ss:$8 sm:$0xf0]
  %vm126 = vcmask 1047556
  %v127 = vsel %vm126, %v125, %v123
  %128 = vrot.lane.b32.xlu0 %v127, 32
  %v129 = vpop.permute.xlu0 %128
  %vm130 = vcmask 392448
  %131 = vst.msk [vmem:[%s1] sm:$0xff] %vm130, %v129
  %s132 = scalar_lea.vmem %s0, 66
  %v133 = vld [vmem:[%s132] ss:$8 sm:$0xf]
  %s134 = scalar_lea.vmem %s0, 66
  %v135 = vld [vmem:[%s134] ss:$8 sm:$0xf0]
  %vm136 = vcmask 1047556
  %v137 = vsel %vm136, %v135, %v133
  %138 = vrot.lane.b32.xlu0 %v137, 32
  %v139 = vpop.permute.xlu0 %138
  %vm140 = vcmask 392448
  %s141 = scalar_lea.vmem %s1, 8
  %142 = vst.msk [vmem:[%s141] sm:$0xff] %vm140, %v139
  %s143 = scalar_lea.vmem %s0, 1
  %v144 = vld [vmem:[%s143] ss:$8 sm:$0xf]
  %s145 = scalar_lea.vmem %s0, 1
  %v146 = vld [vmem:[%s145] ss:$8 sm:$0xf0]
  %vm147 = vcmask 1047556
  %v148 = vsel %vm147, %v146, %v144
  %149 = vrot.lane.b32.xlu0 %v148, 16
  %v150 = vpop.permute.xlu0 %149
  %vm151 = vcmask 261248
  %152 = vst.msk [vmem:[%s1] sm:$0xff] %vm151, %v150
  %s153 = scalar_lea.vmem %s0, 65
  %v154 = vld [vmem:[%s153] ss:$8 sm:$0xf]
  %s155 = scalar_lea.vmem %s0, 65
  %v156 = vld [vmem:[%s155] ss:$8 sm:$0xf0]
  %vm157 = vcmask 1047556
  %v158 = vsel %vm157, %v156, %v154
  %159 = vrot.lane.b32.xlu0 %v158, 16
  %v160 = vpop.permute.xlu0 %159
  %vm161 = vcmask 261248
  %s162 = scalar_lea.vmem %s1, 8
  %163 = vst.msk [vmem:[%s162] sm:$0xff] %vm161, %v160

// kernel: closed_call.26
$region0: #{closed_call.26}
  #allocation0 [shape = 'u32[]', space=smem, size = 0x4, offset = 0x4, fixed_abs, tag = 'smem constant byte address 0x4 - core index']
  #allocation1 [shape = 'u32[144,128]{1,0:T(1,128)}', space=vmem, size = 0x12000, scoped, tag = 'internal scratch']
  #allocation2 [shape = 'f32[16,128]{1,0:T(8,128)}', space=vmem, size = 0x2000, scoped, tag = 'scratch operand']
  #allocation3 [shape = 'f32[16,128]{1,0:T(8,128)}', space=vmem, size = 0x2000, scoped, tag = 'scratch operand']
  #allocation4 [shape = 's32[1]{0}', space=sflag, size = 0x4, scoped, tag = 'scoped memory for closed_call.26']
  #allocation5 [shape = 's32[1]{0:T(128)S(6)}', space=smem, size = 0x200, scoped, tag = 'prefetched SMEM operand 0']
  %s0 = inlined_call_operand.<no memory space> [shape: s32[1], index: 0, kind: input, shape index: {}]
  %s1 = inlined_call_operand.vmem [shape: s32[16,1], index: 1, kind: input, shape index: {}]
  %s2 = inlined_call_operand.hbm [shape: bf16[256,128], index: 2, kind: input, shape index: {}]
  %s3 = inlined_call_operand.vmem [shape: f32[16,128], index: 3, kind: input, shape index: {}]
  %s4 = inlined_call_operand.vmem [shape: f32[16,128], index: 4, kind: input, shape index: {}]
  %s5 = inlined_call_operand.vmem [shape: f32[16,16], index: 5, kind: input, shape index: {}]
  %s6 = inlined_call_operand.vmem [shape: f32[2,1,128], index: 6, kind: input, shape index: {}]
  %s7 = inlined_call_operand.vmem [shape: bf16[2,128,640], index: 7, kind: input, shape index: {}]
  %s8 = inlined_call_operand.hbm [shape: bf16[2,128,128], index: 8, kind: input, shape index: {}]
  %s9 = inlined_call_operand.vmem [shape: f32[2,1,128], index: 9, kind: input, shape index: {}]
  %s10 = inlined_call_operand.hbm [shape: bf16[2,128,512], index: 10, kind: input, shape index: {}]
  %s11 = inlined_call_operand.hbm [shape: bf16[2,256,128], index: 11, kind: input, shape index: {}]
  %s12 = inlined_call_operand.vmem [shape: f32[1,128], index: 12, kind: input, shape index: {}]
  %s13 = inlined_call_operand.hbm [shape: bf16[128,256], index: 13, kind: input, shape index: {}]
  %s14 = inlined_call_operand.hbm [shape: f32[1,1], index: 14, kind: output, shape index: {}]
  %s15 = sld [smem:[#allocation0]]
  $region113: #{closed_call.26} parent=0
    _
  %s17 = ssub.s32 1, %s15
  %s18 = scalar_select 0, %s17, %s15
  %19 = sst [smem:[#allocation5]] %s0
  $region1: #{closed_call.26} parent=0
    #allocation6 [shape = 'u8[65536]{0}', space=vmem, size = 0x10000, scoped, tag = 'input window, operand 2, single buffered']
    #allocation7 [shape = 's32[2]{0}', space=sflag, size = 0x8, scoped, tag = 'scoped memory for closed_call.26']
    #allocation8 [shape = 's32[2]{0}', space=sflag, size = 0x8, scoped, tag = 'scoped memory for closed_call.26']
    #allocation9 [shape = 'u8[65536]{0}', space=vmem, size = 0x10000, scoped, tag = 'input window, operand 8']
    #allocation10 [shape = 's32[2]{0}', space=sflag, size = 0x8, scoped, tag = 'scoped memory for closed_call.26']
    #allocation11 [shape = 'u8[262144]{0}', space=vmem, size = 0x40000, scoped, tag = 'input window, operand 10']
    #allocation12 [shape = 'u8[131072]{0}', space=vmem, size = 0x20000, scoped, tag = 'input window, operand 11']
    #allocation13 [shape = 's32[2]{0}', space=sflag, size = 0x8, scoped, tag = 'scoped memory for closed_call.26']
    #allocation14 [shape = 'u8[65536]{0}', space=vmem, size = 0x10000, scoped, tag = 'input window, operand 13, single buffered']
    #allocation15 [shape = 'u8[512]{0}', space=vmem, size = 0x400, scoped, tag = 'output window, operand 0, single buffered']
    %20 = vsyncpa [#allocation7], 0
    %21 = vsyncpa [#allocation10], 0
    %s22 = scalar_lea.sflag [#allocation10], 1
    %23 = vsyncpa %s22, 0
    %24 = vsyncpa [#allocation13], 0
    %s25 = scalar_lea.sflag [#allocation13], 1
    %26 = vsyncpa %s25, 0
    %27 = vsyncpa [#allocation8], 0
    loop: start=0, step=1, limit=4
    $region2: #{closed_call.26} parent=1 // loop_pre_header
      _
    $region3: #{closed_call.26} parent=1 // loop_header
      %s29 = sphi 0, %s33
      %p30 = scmp.ge.s32.totalorder %s29, 4
      %s37 = sphi 0, %s37
      %s39 = sphi 0, %s37
      %s40 = sphi 0, %s39
      %s54 = sphi 0, %s40
      %s58 = sphi 0, %s58
      %s60 = sphi 0, %s58
      %s61 = sphi 0, %s60
      %s75 = sphi 0, %s61
      %s79 = sphi 0, %s79
      %s81 = sphi 0, %s79
      %s82 = sphi 0, %s81
      %s96 = sphi 0, %s82
      %s100 = sphi 0, %s100
      %s102 = sphi 0, %s100
      %s103 = sphi 0, %s102
      %s117 = sphi 0, %s103
      %s121 = sphi 0, %s121
      %s123 = sphi 0, %s121
      %s124 = sphi 0, %s123
      %s138 = sphi 0, %s124
      %s144 = sphi 0, %s146
      %s147 = sphi 0, %s144
      %s148 = sphi 0, %s147
      %s164 = sphi 0, %s148
      %s170 = sphi 0, %s172
      %s173 = sphi 0, %s170
      %s174 = sphi 0, %s173
      %s190 = sphi 0, %s174
      %s196 = sphi 0, %s198
      %s199 = sphi 0, %s196
      %s200 = sphi 0, %s199
      %s216 = sphi 0, %s200
      %s222 = sphi 0, %s224
      %s225 = sphi 0, %s222
      %s226 = sphi 0, %s225
      %s242 = sphi 0, %s226
      %s248 = sphi 0, %s250
      %s251 = sphi 0, %s248
      %s252 = sphi 0, %s251
      %s268 = sphi 0, %s252
      %s274 = sphi 0, %s276
      %s277 = sphi 0, %s274
      %s278 = sphi 0, %s277
      %s294 = sphi 0, %s278
      %s298 = sphi 0, %s298
      %s300 = sphi 0, %s298
      %s301 = sphi 0, %s300
      %s315 = sphi 0, %s301
      %s319 = sphi 0, %s319
      %s321 = sphi 0, %s319
      %s322 = sphi 0, %s321
      %s336 = sphi 0, %s322
      %s340 = sphi 0, %s340
      %s342 = sphi 0, %s340
      %s343 = sphi 0, %s342
      %s357 = sphi 0, %s343
    $region4: #{closed_call.26} parent=1 // loop_header_branch
      %32 = sbr.rel (%p30) target = $region8
    $region5: #{closed_call.26} parent=1 // loop_body
      %s34 = ssub.s32 %s29, 1
      %s35 = ssub.s32 %s29, 2
      %s36 = sadd.s32 %s29, 1
      %s38 = sadd.s32 %s37, 1
      %p41 = scmp.eq.s32.totalorder %s29, 1
      %p42 = scmp.ne.s32.totalorder %s37, %s39
      %p43 = scmp.eq.s32.totalorder %s29, 0
      %p44 = por %p42, %p43
      %p45 = scmp.ne.s32.totalorder %s37, %s39
      %p46 = scmp.eq.s32.totalorder %s34, 1
      %p47 = por %p45, %p46
      %p48 = scmp.ne.s32.totalorder %s39, %s40
      %p49 = scmp.eq.s32.totalorder %s34, 0
      %p50 = por %p48, %p49
      %p51 = scmp.ne.s32.totalorder %s39, %s40
      %p52 = scmp.eq.s32.totalorder %s35, 1
      %p53 = por %p51, %p52
      %p55 = scmp.ne.s32.totalorder %s40, %s54
      %p56 = scmp.eq.s32.totalorder %s35, 0
      %p57 = por %p55, %p56
      %s59 = sadd.s32 %s58, 1
      %p62 = scmp.eq.s32.totalorder %s29, 1
      %p63 = scmp.ne.s32.totalorder %s58, %s60
      %p64 = scmp.eq.s32.totalorder %s29, 0
      %p65 = por %p63, %p64
      %p66 = scmp.ne.s32.totalorder %s58, %s60
      %p67 = scmp.eq.s32.totalorder %s34, 1
      %p68 = por %p66, %p67
      %p69 = scmp.ne.s32.totalorder %s60, %s61
      %p70 = scmp.eq.s32.totalorder %s34, 0
      %p71 = por %p69, %p70
      %p72 = scmp.ne.s32.totalorder %s60, %s61
      %p73 = scmp.eq.s32.totalorder %s35, 1
      %p74 = por %p72, %p73
      %p76 = scmp.ne.s32.totalorder %s61, %s75
      %p77 = scmp.eq.s32.totalorder %s35, 0
      %p78 = por %p76, %p77
      %s80 = sadd.s32 %s79, 1
      %p83 = scmp.eq.s32.totalorder %s29, 1
      %p84 = scmp.ne.s32.totalorder %s79, %s81
      %p85 = scmp.eq.s32.totalorder %s29, 0
      %p86 = por %p84, %p85
      %p87 = scmp.ne.s32.totalorder %s79, %s81
      %p88 = scmp.eq.s32.totalorder %s34, 1
      %p89 = por %p87, %p88
      %p90 = scmp.ne.s32.totalorder %s81, %s82
      %p91 = scmp.eq.s32.totalorder %s34, 0
      %p92 = por %p90, %p91
      %p93 = scmp.ne.s32.totalorder %s81, %s82
      %p94 = scmp.eq.s32.totalorder %s35, 1
      %p95 = por %p93, %p94
      %p97 = scmp.ne.s32.totalorder %s82, %s96
      %p98 = scmp.eq.s32.totalorder %s35, 0
      %p99 = por %p97, %p98
      %s101 = sadd.s32 %s100, 1
      %p104 = scmp.eq.s32.totalorder %s29, 1
      %p105 = scmp.ne.s32.totalorder %s100, %s102
      %p106 = scmp.eq.s32.totalorder %s29, 0
      %p107 = por %p105, %p106
      %p108 = scmp.ne.s32.totalorder %s100, %s102
      %p109 = scmp.eq.s32.totalorder %s34, 1
      %p110 = por %p108, %p109
      %p111 = scmp.ne.s32.totalorder %s102, %s103
      %p112 = scmp.eq.s32.totalorder %s34, 0
      %p113 = por %p111, %p112
      %p114 = scmp.ne.s32.totalorder %s102, %s103
      %p115 = scmp.eq.s32.totalorder %s35, 1
      %p116 = por %p114, %p115
      %p118 = scmp.ne.s32.totalorder %s103, %s117
      %p119 = scmp.eq.s32.totalorder %s35, 0
      %p120 = por %p118, %p119
      %s122 = sadd.s32 %s121, 1
      %p125 = scmp.eq.s32.totalorder %s29, 1
      %p126 = scmp.ne.s32.totalorder %s121, %s123
      %p127 = scmp.eq.s32.totalorder %s29, 0
      %p128 = por %p126, %p127
      %p129 = scmp.ne.s32.totalorder %s121, %s123
      %p130 = scmp.eq.s32.totalorder %s34, 1
      %p131 = por %p129, %p130
      %p132 = scmp.ne.s32.totalorder %s123, %s124
      %p133 = scmp.eq.s32.totalorder %s34, 0
      %p134 = por %p132, %p133
      %p135 = scmp.ne.s32.totalorder %s123, %s124
      %p136 = scmp.eq.s32.totalorder %s35, 1
      %p137 = por %p135, %p136
      %p139 = scmp.ne.s32.totalorder %s124, %s138
      %p140 = scmp.eq.s32.totalorder %s35, 0
      %p141 = por %p139, %p140
      %s142 = ssub.s32 %s29, %s36
      %p143 = scmp.eq.s32.totalorder %s142, 0
      %s145 = sadd.s32 %s144, 1
      %s146 = scalar_select %p143, %s144, %s145
      %p149 = pneg %p143
      %p150 = scmp.eq.s32.totalorder %s29, 1
      %p151 = por %p149, %p150
      %p152 = scmp.ne.s32.totalorder %s144, %s147
      %p153 = scmp.eq.s32.totalorder %s29, 0
      %p154 = por %p152, %p153
      %p155 = scmp.ne.s32.totalorder %s144, %s147
      %p156 = scmp.eq.s32.totalorder %s34, 1
      %p157 = por %p155, %p156
      %p158 = scmp.ne.s32.totalorder %s147, %s148
      %p159 = scmp.eq.s32.totalorder %s34, 0
      %p160 = por %p158, %p159
      %p161 = scmp.ne.s32.totalorder %s147, %s148
      %p162 = scmp.eq.s32.totalorder %s35, 1
      %p163 = por %p161, %p162
      %p165 = scmp.ne.s32.totalorder %s148, %s164
      %p166 = scmp.eq.s32.totalorder %s35, 0
      %p167 = por %p165, %p166
      %s168 = ssub.s32 %s29, %s36
      %p169 = scmp.eq.s32.totalorder %s168, 0
      %s171 = sadd.s32 %s170, 1
      %s172 = scalar_select %p169, %s170, %s171
      %p175 = pneg %p169
      %p176 = scmp.eq.s32.totalorder %s29, 1
      %p177 = por %p175, %p176
      %p178 = scmp.ne.s32.totalorder %s170, %s173
      %p179 = scmp.eq.s32.totalorder %s29, 0
      %p180 = por %p178, %p179
      %p181 = scmp.ne.s32.totalorder %s170, %s173
      %p182 = scmp.eq.s32.totalorder %s34, 1
      %p183 = por %p181, %p182
      %p184 = scmp.ne.s32.totalorder %s173, %s174
      %p185 = scmp.eq.s32.totalorder %s34, 0
      %p186 = por %p184, %p185
      %p187 = scmp.ne.s32.totalorder %s173, %s174
      %p188 = scmp.eq.s32.totalorder %s35, 1
      %p189 = por %p187, %p188
      %p191 = scmp.ne.s32.totalorder %s174, %s190
      %p192 = scmp.eq.s32.totalorder %s35, 0
      %p193 = por %p191, %p192
      %s194 = ssub.s32 %s29, %s36
      %p195 = scmp.eq.s32.totalorder %s194, 0
      %s197 = sadd.s32 %s196, 1
      %s198 = scalar_select %p195, %s196, %s197
      %p201 = pneg %p195
      %p202 = scmp.eq.s32.totalorder %s29, 1
      %p203 = por %p201, %p202
      %p204 = scmp.ne.s32.totalorder %s196, %s199
      %p205 = scmp.eq.s32.totalorder %s29, 0
      %p206 = por %p204, %p205
      %p207 = scmp.ne.s32.totalorder %s196, %s199
      %p208 = scmp.eq.s32.totalorder %s34, 1
      %p209 = por %p207, %p208
      %p210 = scmp.ne.s32.totalorder %s199, %s200
      %p211 = scmp.eq.s32.totalorder %s34, 0
      %p212 = por %p210, %p211
      %p213 = scmp.ne.s32.totalorder %s199, %s200
      %p214 = scmp.eq.s32.totalorder %s35, 1
      %p215 = por %p213, %p214
      %p217 = scmp.ne.s32.totalorder %s200, %s216
      %p218 = scmp.eq.s32.totalorder %s35, 0
      %p219 = por %p217, %p218
      %s220 = ssub.s32 %s29, %s36
      %p221 = scmp.eq.s32.totalorder %s220, 0
      %s223 = sadd.s32 %s222, 1
      %s224 = scalar_select %p221, %s222, %s223
      %p227 = pneg %p221
      %p228 = scmp.eq.s32.totalorder %s29, 1
      %p229 = por %p227, %p228
      %p230 = scmp.ne.s32.totalorder %s222, %s225
      %p231 = scmp.eq.s32.totalorder %s29, 0
      %p232 = por %p230, %p231
      %p233 = scmp.ne.s32.totalorder %s222, %s225
      %p234 = scmp.eq.s32.totalorder %s34, 1
      %p235 = por %p233, %p234
      %p236 = scmp.ne.s32.totalorder %s225, %s226
      %p237 = scmp.eq.s32.totalorder %s34, 0
      %p238 = por %p236, %p237
      %p239 = scmp.ne.s32.totalorder %s225, %s226
      %p240 = scmp.eq.s32.totalorder %s35, 1
      %p241 = por %p239, %p240
      %p243 = scmp.ne.s32.totalorder %s226, %s242
      %p244 = scmp.eq.s32.totalorder %s35, 0
      %p245 = por %p243, %p244
      %s246 = ssub.s32 %s29, %s36
      %p247 = scmp.eq.s32.totalorder %s246, 0
      %s249 = sadd.s32 %s248, 1
      %s250 = scalar_select %p247, %s248, %s249
      %p253 = pneg %p247
      %p254 = scmp.eq.s32.totalorder %s29, 1
      %p255 = por %p253, %p254
      %p256 = scmp.ne.s32.totalorder %s248, %s251
      %p257 = scmp.eq.s32.totalorder %s29, 0
      %p258 = por %p256, %p257
      %p259 = scmp.ne.s32.totalorder %s248, %s251
      %p260 = scmp.eq.s32.totalorder %s34, 1
      %p261 = por %p259, %p260
      %p262 = scmp.ne.s32.totalorder %s251, %s252
      %p263 = scmp.eq.s32.totalorder %s34, 0
      %p264 = por %p262, %p263
      %p265 = scmp.ne.s32.totalorder %s251, %s252
      %p266 = scmp.eq.s32.totalorder %s35, 1
      %p267 = por %p265, %p266
      %p269 = scmp.ne.s32.totalorder %s252, %s268
      %p270 = scmp.eq.s32.totalorder %s35, 0
      %p271 = por %p269, %p270
      %s272 = ssub.s32 %s29, %s36
      %p273 = scmp.eq.s32.totalorder %s272, 0
      %s275 = sadd.s32 %s274, 1
      %s276 = scalar_select %p273, %s274, %s275
      %p279 = pneg %p273
      %p280 = scmp.eq.s32.totalorder %s29, 1
      %p281 = por %p279, %p280
      %p282 = scmp.ne.s32.totalorder %s274, %s277
      %p283 = scmp.eq.s32.totalorder %s29, 0
      %p284 = por %p282, %p283
      %p285 = scmp.ne.s32.totalorder %s274, %s277
      %p286 = scmp.eq.s32.totalorder %s34, 1
      %p287 = por %p285, %p286
      %p288 = scmp.ne.s32.totalorder %s277, %s278
      %p289 = scmp.eq.s32.totalorder %s34, 0
      %p290 = por %p288, %p289
      %p291 = scmp.ne.s32.totalorder %s277, %s278
      %p292 = scmp.eq.s32.totalorder %s35, 1
      %p293 = por %p291, %p292
      %p295 = scmp.ne.s32.totalorder %s278, %s294
      %p296 = scmp.eq.s32.totalorder %s35, 0
      %p297 = por %p295, %p296
      %s299 = sadd.s32 %s298, 1
      %p302 = scmp.eq.s32.totalorder %s29, 1
      %p303 = scmp.ne.s32.totalorder %s298, %s300
      %p304 = scmp.eq.s32.totalorder %s29, 0
      %p305 = por %p303, %p304
      %p306 = scmp.ne.s32.totalorder %s298, %s300
      %p307 = scmp.eq.s32.totalorder %s34, 1
      %p308 = por %p306, %p307
      %p309 = scmp.ne.s32.totalorder %s300, %s301
      %p310 = scmp.eq.s32.totalorder %s34, 0
      %p311 = por %p309, %p310
      %p312 = scmp.ne.s32.totalorder %s300, %s301
      %p313 = scmp.eq.s32.totalorder %s35, 1
      %p314 = por %p312, %p313
      %p316 = scmp.ne.s32.totalorder %s301, %s315
      %p317 = scmp.eq.s32.totalorder %s35, 0
      %p318 = por %p316, %p317
      %s320 = sadd.s32 %s319, 1
      %p323 = scmp.eq.s32.totalorder %s29, 1
      %p324 = scmp.ne.s32.totalorder %s319, %s321
      %p325 = scmp.eq.s32.totalorder %s29, 0
      %p326 = por %p324, %p325
      %p327 = scmp.ne.s32.totalorder %s319, %s321
      %p328 = scmp.eq.s32.totalorder %s34, 1
      %p329 = por %p327, %p328
      %p330 = scmp.ne.s32.totalorder %s321, %s322
      %p331 = scmp.eq.s32.totalorder %s34, 0
      %p332 = por %p330, %p331
      %p333 = scmp.ne.s32.totalorder %s321, %s322
      %p334 = scmp.eq.s32.totalorder %s35, 1
      %p335 = por %p333, %p334
      %p337 = scmp.ne.s32.totalorder %s322, %s336
      %p338 = scmp.eq.s32.totalorder %s35, 0
      %p339 = por %p337, %p338
      %s341 = sadd.s32 %s340, 1
      %p344 = scmp.eq.s32.totalorder %s29, 1
      %p345 = scmp.ne.s32.totalorder %s340, %s342
      %p346 = scmp.eq.s32.totalorder %s29, 0
      %p347 = por %p345, %p346
      %p348 = scmp.ne.s32.totalorder %s340, %s342
      %p349 = scmp.eq.s32.totalorder %s34, 1
      %p350 = por %p348, %p349
      %p351 = scmp.ne.s32.totalorder %s342, %s343
      %p352 = scmp.eq.s32.totalorder %s34, 0
      %p353 = por %p351, %p352
      %p354 = scmp.ne.s32.totalorder %s342, %s343
      %p355 = scmp.eq.s32.totalorder %s35, 1
      %p356 = por %p354, %p355
      %p358 = scmp.ne.s32.totalorder %s343, %s357
      %p359 = scmp.eq.s32.totalorder %s35, 0
      %p360 = por %p358, %p359
      %p361 = scmp.le.s32.totalorder 1, %s29
      %p362 = scmp.lt.s32.totalorder %s29, 3
      %p363 = pnand %p361, %p362
      %p364 = pneg %p363
      // Predicated region
      $region9: #{closed_call.26} parent=5 // pred_check
        _
      $region10: #{closed_call.26} parent=5 // pred_check_branch
        %366 = sbr.rel (%p363) target = $region12
      $region11: #{closed_call.26} parent=5 // pred_region
        %s367 = ssub.s32 %s29, 1
        // Predicated region
        $region13: #{closed_call.26} parent=11 // pred_check
          %p368 = pneg %p50
        $region14: #{closed_call.26} parent=11 // pred_check_branch
          %370 = sbr.rel (%p368) target = $region16
        $region15: #{closed_call.26} parent=11 // pred_region
          _
        $region16: #{closed_call.26} parent=11 // pred_fallthru
          _
        // Predicated region
        $region17: #{closed_call.26} parent=11 // pred_check
          %p371 = pneg %p71
        $region18: #{closed_call.26} parent=11 // pred_check_branch
          %373 = sbr.rel (%p371) target = $region20
        $region19: #{closed_call.26} parent=11 // pred_region
          %s375 = ssub.s32 2048, 2048
          %376 = vsyncadd [#allocation7], %s375
          %s377 = sshll.u32 [#allocation6], 4
          %s378 = int_to_ptr.vmem [resolvable:$true] %s377
          %383 = dma.hbm_to_vmem [thread:$0]  %s2, 2048, %s378, [#allocation7], 64, 64, 4
        $region20: #{closed_call.26} parent=11 // pred_fallthru
          _
        // Predicated region
        $region21: #{closed_call.26} parent=11 // pred_check
          %p384 = pneg %p92
        $region22: #{closed_call.26} parent=11 // pred_check_branch
          %386 = sbr.rel (%p384) target = $region24
        $region23: #{closed_call.26} parent=11 // pred_region
          _
        $region24: #{closed_call.26} parent=11 // pred_fallthru
          _
        // Predicated region
        $region25: #{closed_call.26} parent=11 // pred_check
          %p387 = pneg %p113
        $region26: #{closed_call.26} parent=11 // pred_check_branch
          %389 = sbr.rel (%p387) target = $region28
        $region27: #{closed_call.26} parent=11 // pred_region
          _
        $region28: #{closed_call.26} parent=11 // pred_fallthru
          _
        // Predicated region
        $region29: #{closed_call.26} parent=11 // pred_check
          %p390 = pneg %p134
        $region30: #{closed_call.26} parent=11 // pred_check_branch
          %392 = sbr.rel (%p390) target = $region32
        $region31: #{closed_call.26} parent=11 // pred_region
          _
        $region32: #{closed_call.26} parent=11 // pred_fallthru
          _
        // Predicated region
        $region33: #{closed_call.26} parent=11 // pred_check
          %p393 = pneg %p311
        $region34: #{closed_call.26} parent=11 // pred_check_branch
          %395 = sbr.rel (%p393) target = $region36
        $region35: #{closed_call.26} parent=11 // pred_region
          _
        $region36: #{closed_call.26} parent=11 // pred_fallthru
          _
        // Predicated region
        $region37: #{closed_call.26} parent=11 // pred_check
          %p396 = pneg %p332
        $region38: #{closed_call.26} parent=11 // pred_check_branch
          %398 = sbr.rel (%p396) target = $region40
        $region39: #{closed_call.26} parent=11 // pred_region
          %s400 = ssub.s32 2048, 2048
          %401 = vsyncadd [#allocation13], %s400
          %s402 = sshll.u32 [#allocation14], 4
          %s403 = int_to_ptr.vmem [resolvable:$true] %s402
          %408 = dma.hbm_to_vmem [thread:$0]  %s13, 2048, %s403, [#allocation13], 128, 128, 8
        $region40: #{closed_call.26} parent=11 // pred_fallthru
          _
      $region12: #{closed_call.26} parent=5 // pred_fallthru
        _
      %p409 = scmp.lt.s32.totalorder %s29, 2
      // Predicated region
      $region41: #{closed_call.26} parent=5 // pred_check
        %p410 = pneg %p409
      $region42: #{closed_call.26} parent=5 // pred_check_branch
        %412 = sbr.rel (%p410) target = $region44
      $region43: #{closed_call.26} parent=5 // pred_region
        // Predicated region
        $region45: #{closed_call.26} parent=43 // pred_check
          %p413 = pneg %p154
        $region46: #{closed_call.26} parent=43 // pred_check_branch
          %415 = sbr.rel (%p413) target = $region48
        $region47: #{closed_call.26} parent=43 // pred_region
          %p416 = scmp.lt.s32.totalorder %s29, 1
          %s417 = scalar_select %p416, %s29, 1
          %s418 = scalar_lea.vmem %s6, %s417
        $region48: #{closed_call.26} parent=43 // pred_fallthru
          _
        // Predicated region
        $region49: #{closed_call.26} parent=43 // pred_check
          %p419 = pneg %p180
        $region50: #{closed_call.26} parent=43 // pred_check_branch
          %421 = sbr.rel (%p419) target = $region52
        $region51: #{closed_call.26} parent=43 // pred_region
          %p422 = scmp.lt.s32.totalorder %s29, 1
          %s423 = scalar_select %p422, %s29, 1
          %s424 = smul.addr %s423, 80
          %s425 = smul.addr %s424, 4
          %s426 = scalar_lea.vmem %s7, %s425
        $region52: #{closed_call.26} parent=43 // pred_fallthru
          _
        // Predicated region
        $region53: #{closed_call.26} parent=43 // pred_check
          %p427 = pneg %p206
        $region54: #{closed_call.26} parent=43 // pred_check_branch
          %429 = sbr.rel (%p427) target = $region56
        $region55: #{closed_call.26} parent=43 // pred_region
          %s430 = sand.u32 %s29, 1
          %s431 = scalar_lea.sflag [#allocation10], %s430
          %s432 = sand.u32 %s196, 1
          %s433 = smul.addr %s432, 64
          %s434 = scalar_lea.vmem [#allocation9], %s433
          %s436 = ssub.s32 1024, 1024
          %437 = vsyncadd %s431, %s436
          %s438 = smul.addr %s29, 16
          %s439 = smul.addr %s438, 64
          %s440 = scalar_lea.hbm %s8, %s439
          %s441 = sshll.u32 %s434, 4
          %s442 = int_to_ptr.vmem [resolvable:$true] %s441
          %447 = dma.hbm_to_vmem [thread:$0]  %s440, 1024, %s442, %s431, 64, 64, 4
        $region56: #{closed_call.26} parent=43 // pred_fallthru
          _
        // Predicated region
        $region57: #{closed_call.26} parent=43 // pred_check
          %p448 = pneg %p232
        $region58: #{closed_call.26} parent=43 // pred_check_branch
          %450 = sbr.rel (%p448) target = $region60
        $region59: #{closed_call.26} parent=43 // pred_region
          %p451 = scmp.lt.s32.totalorder %s29, 1
          %s452 = scalar_select %p451, %s29, 1
          %s453 = scalar_lea.vmem %s9, %s452
        $region60: #{closed_call.26} parent=43 // pred_fallthru
          _
        // Predicated region
        $region61: #{closed_call.26} parent=43 // pred_check
          %p454 = pneg %p258
        $region62: #{closed_call.26} parent=43 // pred_check_branch
          %456 = sbr.rel (%p454) target = $region64
        $region63: #{closed_call.26} parent=43 // pred_region
          %s457 = sand.u32 %s29, 1
          %s458 = scalar_lea.sflag [#allocation10], %s457
          %s459 = sand.u32 %s248, 1
          %s460 = smul.addr %s459, 256
          %s461 = scalar_lea.vmem [#allocation11], %s460
          %s463 = ssub.s32 4096, 4096
          %464 = vsyncadd %s458, %s463
          %s465 = smul.addr %s29, 64
          %s466 = smul.addr %s465, 64
          %s467 = scalar_lea.hbm %s10, %s466
          %s468 = sshll.u32 %s461, 4
          %s469 = int_to_ptr.vmem [resolvable:$true] %s468
          %474 = dma.hbm_to_vmem [thread:$0]  %s467, 4096, %s469, %s458, 256, 256, 16
        $region64: #{closed_call.26} parent=43 // pred_fallthru
          _
        // Predicated region
        $region65: #{closed_call.26} parent=43 // pred_check
          %p475 = pneg %p284
        $region66: #{closed_call.26} parent=43 // pred_check_branch
          %477 = sbr.rel (%p475) target = $region68
        $region67: #{closed_call.26} parent=43 // pred_region
          %s478 = sand.u32 %s29, 1
          %s479 = scalar_lea.sflag [#allocation13], %s478
          %s480 = sand.u32 %s274, 1
          %s481 = smul.addr %s480, 128
          %s482 = scalar_lea.vmem [#allocation12], %s481
          %s484 = ssub.s32 2048, 2048
          %485 = vsyncadd %s479, %s484
          %s486 = smul.addr %s29, 32
          %s487 = smul.addr %s486, 64
          %s488 = scalar_lea.hbm %s11, %s487
          %s489 = sshll.u32 %s482, 4
          %s490 = int_to_ptr.vmem [resolvable:$true] %s489
          %495 = dma.hbm_to_vmem [thread:$0]  %s488, 2048, %s490, %s479, 64, 64, 4
        $region68: #{closed_call.26} parent=43 // pred_fallthru
          _
      $region44: #{closed_call.26} parent=5 // pred_fallthru
        _
      %p496 = scmp.le.s32.totalorder 1, %s29
      %p497 = scmp.lt.s32.totalorder %s29, 3
      %p498 = pnand %p496, %p497
      %p499 = pneg %p498
      // Predicated region
      $region69: #{closed_call.26} parent=5 // pred_check
        _
      $region70: #{closed_call.26} parent=5 // pred_check_branch
        %501 = sbr.rel (%p498) target = $region72
      $region71: #{closed_call.26} parent=5 // pred_region
        %s502 = ssub.s32 %s29, 1
        // Predicated region
        $region73: #{closed_call.26} parent=71 // pred_check
          %p503 = pneg %p71
        $region74: #{closed_call.26} parent=71 // pred_check_branch
          %505 = sbr.rel (%p503) target = $region76
        $region75: #{closed_call.26} parent=71 // pred_region
          %506 = dma.done [#allocation7], 2048
        $region76: #{closed_call.26} parent=71 // pred_fallthru
          _
        %s507 = sand.u32 %s34, 1
        %s508 = scalar_lea.sflag [#allocation10], %s507
        %s509 = sand.u32 %s199, 1
        %s510 = smul.addr %s509, 64
        %s511 = scalar_lea.vmem [#allocation9], %s510
        // Predicated region
        $region77: #{closed_call.26} parent=71 // pred_check
          %p512 = pneg %p212
        $region78: #{closed_call.26} parent=71 // pred_check_branch
          %514 = sbr.rel (%p512) target = $region80
        $region79: #{closed_call.26} parent=71 // pred_region
          %515 = dma.done %s508, 1024
        $region80: #{closed_call.26} parent=71 // pred_fallthru
          _
        %s516 = sand.u32 %s34, 1
        %s517 = scalar_lea.sflag [#allocation10], %s516
        %s518 = sand.u32 %s251, 1
        %s519 = smul.addr %s518, 256
        %s520 = scalar_lea.vmem [#allocation11], %s519
        // Predicated region
        $region81: #{closed_call.26} parent=71 // pred_check
          %p521 = pneg %p264
        $region82: #{closed_call.26} parent=71 // pred_check_branch
          %523 = sbr.rel (%p521) target = $region84
        $region83: #{closed_call.26} parent=71 // pred_region
          %524 = dma.done %s517, 4096
        $region84: #{closed_call.26} parent=71 // pred_fallthru
          _
        %s525 = sand.u32 %s34, 1
        %s526 = scalar_lea.sflag [#allocation13], %s525
        %s527 = sand.u32 %s277, 1
        %s528 = smul.addr %s527, 128
        %s529 = scalar_lea.vmem [#allocation12], %s528
        // Predicated region
        $region85: #{closed_call.26} parent=71 // pred_check
          %p530 = pneg %p290
        $region86: #{closed_call.26} parent=71 // pred_check_branch
          %532 = sbr.rel (%p530) target = $region88
        $region87: #{closed_call.26} parent=71 // pred_region
          %533 = dma.done %s526, 2048
        $region88: #{closed_call.26} parent=71 // pred_fallthru
          _
        // Predicated region
        $region89: #{closed_call.26} parent=71 // pred_check
          %p534 = pneg %p332
        $region90: #{closed_call.26} parent=71 // pred_check_branch
          %536 = sbr.rel (%p534) target = $region92
        $region91: #{closed_call.26} parent=71 // pred_region
          %537 = dma.done [#allocation13], 2048
        $region92: #{closed_call.26} parent=71 // pred_fallthru
          _
        %p538 = pneg %p50
        %p539 = pneg %p47
        %p540 = pneg %p71
        %p541 = pneg %p68
        %p542 = pneg %p92
        %p543 = pneg %p89
        %p544 = pneg %p113
        %p545 = pneg %p110
        %p546 = pneg %p134
        %p547 = pneg %p131
        %p548 = scmp.lt.s32.totalorder %s34, 1
        %s549 = scalar_select %p548, %s34, 1
        %s550 = scalar_lea.vmem %s6, %s549
        %p551 = pneg %p160
        %p552 = pneg %p157
        %p553 = scmp.lt.s32.totalorder %s34, 1
        %s554 = scalar_select %p553, %s34, 1
        %s555 = smul.addr %s554, 80
        %s556 = smul.addr %s555, 4
        %s557 = scalar_lea.vmem %s7, %s556
        %p558 = pneg %p186
        %p559 = pneg %p183
        %s560 = sand.u32 %s34, 1
        %s561 = scalar_lea.sflag [#allocation10], %s560
        %s562 = sand.u32 %s199, 1
        %s563 = smul.addr %s562, 64
        %s564 = scalar_lea.vmem [#allocation9], %s563
        %p565 = pneg %p212
        %p566 = pneg %p209
        %p567 = scmp.lt.s32.totalorder %s34, 1
        %s568 = scalar_select %p567, %s34, 1
        %s569 = scalar_lea.vmem %s9, %s568
        %p570 = pneg %p238
        %p571 = pneg %p235
        %s572 = sand.u32 %s34, 1
        %s573 = scalar_lea.sflag [#allocation10], %s572
        %s574 = sand.u32 %s251, 1
        %s575 = smul.addr %s574, 256
        %s576 = scalar_lea.vmem [#allocation11], %s575
        %p577 = pneg %p264
        %p578 = pneg %p261
        %s579 = sand.u32 %s34, 1
        %s580 = scalar_lea.sflag [#allocation13], %s579
        %s581 = sand.u32 %s277, 1
        %s582 = smul.addr %s581, 128
        %s583 = scalar_lea.vmem [#allocation12], %s582
        %p584 = pneg %p290
        %p585 = pneg %p287
        %p586 = pneg %p311
        %p587 = pneg %p308
        %p588 = pneg %p332
        %p589 = pneg %p329
        %p590 = pneg %p353
        %p591 = pneg %p350
        %p592 = scmp.lt.s32.totalorder %s34, 1
        %s593 = scalar_select %p592, %s34, 1
        %s594 = scalar_lea.vmem %s6, %s593
        %p595 = scmp.lt.s32.totalorder %s34, 1
        %s596 = scalar_select %p595, %s34, 1
        %s597 = smul.addr %s596, 80
        %s598 = smul.addr %s597, 4
        %s599 = scalar_lea.vmem %s7, %s598
        %p600 = scmp.lt.s32.totalorder %s34, 1
        %s601 = scalar_select %p600, %s34, 1
        %s602 = scalar_lea.vmem %s9, %s601
        %p604 = scmp.eq.s32.totalorder %s34, 0
        // Predicated region
        $region93: #{closed_call.26} parent=71 // pred_check
          %p605 = pneg %p604
        $region94: #{closed_call.26} parent=71 // pred_check_branch
          %607 = sbr.rel (%p605) target = $region96
        $region95: #{closed_call.26} parent=71 // pred_region
          %v608 = vld [vmem:[%s1] sm:$0xff]
          %v609 = vld [vmem:[%s1 + $0x8] sm:$0xff]
          %v610 = vlaneseq
          %v611 = vand.u32 %v610, 127
          %v612 = vadd.s32 %v611, 128
          %613 = vset.pattern.permute.xlu0 0
          %614 = vperm.xlu0 %613, %v608
          %v615 = vpop.permute.xlu0 %614
          %616 = vset.pattern.permute.xlu0 0
          %617 = vperm.xlu0 %616, %v609
          %v618 = vpop.permute.xlu0 %617
          %vm619 = vcmp.eq.s32.totalorder %v611, %v615
          %vm620 = vcmp.eq.s32.totalorder %v612, %v615
          %vm621 = vcmp.eq.s32.totalorder %v611, %v618
          %vm622 = vcmp.eq.s32.totalorder %v612, %v618
          %v623 = vsel %vm619, 1.0, 0.0
          %v624 = vsel %vm620, 1.0, 0.0
          %v625 = vsel %vm621, 1.0, 0.0
          %v626 = vsel %vm622, 1.0, 0.0
          %v627 = vpack.c.bf16 %v625, %v623
          %v628 = vpack.c.bf16 %v626, %v624
          %v629 = vld [vmem:[#allocation6] sm:$0xf]
          %v630 = vld [vmem:[#allocation6 + $0x4] sm:$0xf]
          %v631 = vld [vmem:[#allocation6 + $0x8] sm:$0xf]
          %v632 = vld [vmem:[#allocation6 + $0xc] sm:$0xf]
          %v633 = vld [vmem:[#allocation6 + $0x10] sm:$0xf]
          %v634 = vld [vmem:[#allocation6 + $0x14] sm:$0xf]
          %v635 = vld [vmem:[#allocation6 + $0x18] sm:$0xf]
          %v636 = vld [vmem:[#allocation6 + $0x1c] sm:$0xf]
          %v637 = vld [vmem:[#allocation6 + $0x20] sm:$0xf]
          %v638 = vld [vmem:[#allocation6 + $0x24] sm:$0xf]
          %v639 = vld [vmem:[#allocation6 + $0x28] sm:$0xf]
          %v640 = vld [vmem:[#allocation6 + $0x2c] sm:$0xf]
          %v641 = vld [vmem:[#allocation6 + $0x30] sm:$0xf]
          %v642 = vld [vmem:[#allocation6 + $0x34] sm:$0xf]
          %v643 = vld [vmem:[#allocation6 + $0x38] sm:$0xf]
          %v644 = vld [vmem:[#allocation6 + $0x3c] sm:$0xf]
          %v645 = vld [vmem:[#allocation6 + $0x40] sm:$0xf]
          %v646 = vld [vmem:[#allocation6 + $0x44] sm:$0xf]
          %v647 = vld [vmem:[#allocation6 + $0x48] sm:$0xf]
          %v648 = vld [vmem:[#allocation6 + $0x4c] sm:$0xf]
          %v649 = vld [vmem:[#allocation6 + $0x50] sm:$0xf]
          %v650 = vld [vmem:[#allocation6 + $0x54] sm:$0xf]
          %v651 = vld [vmem:[#allocation6 + $0x58] sm:$0xf]
          %v652 = vld [vmem:[#allocation6 + $0x5c] sm:$0xf]
          %v653 = vld [vmem:[#allocation6 + $0x60] sm:$0xf]
          %v654 = vld [vmem:[#allocation6 + $0x64] sm:$0xf]
          %v655 = vld [vmem:[#allocation6 + $0x68] sm:$0xf]
          %v656 = vld [vmem:[#allocation6 + $0x6c] sm:$0xf]
          %v657 = vld [vmem:[#allocation6 + $0x70] sm:$0xf]
          %v658 = vld [vmem:[#allocation6 + $0x74] sm:$0xf]
          %v659 = vld [vmem:[#allocation6 + $0x78] sm:$0xf]
          %v660 = vld [vmem:[#allocation6 + $0x7c] sm:$0xf]
          %v693 = vunpack.c.l.b16 %v629
          %v694 = vunpack.c.l.b16 %v630
          %v695 = vunpack.c.l.b16 %v631
          %v696 = vunpack.c.l.b16 %v632
          %v697 = vunpack.c.l.b16 %v633
          %v698 = vunpack.c.l.b16 %v634
          %v699 = vunpack.c.l.b16 %v635
          %v700 = vunpack.c.l.b16 %v636
          %v701 = vunpack.c.l.b16 %v637
          %v702 = vunpack.c.l.b16 %v638
          %v703 = vunpack.c.l.b16 %v639
          %v704 = vunpack.c.l.b16 %v640
          %v705 = vunpack.c.l.b16 %v641
          %v706 = vunpack.c.l.b16 %v642
          %v707 = vunpack.c.l.b16 %v643
          %v708 = vunpack.c.l.b16 %v644
          %v709 = vunpack.c.l.b16 %v645
          %v710 = vunpack.c.l.b16 %v646
          %v711 = vunpack.c.l.b16 %v647
          %v712 = vunpack.c.l.b16 %v648
          %v713 = vunpack.c.l.b16 %v649
          %v714 = vunpack.c.l.b16 %v650
          %v715 = vunpack.c.l.b16 %v651
          %v716 = vunpack.c.l.b16 %v652
          %v717 = vunpack.c.l.b16 %v653
          %v718 = vunpack.c.l.b16 %v654
          %v719 = vunpack.c.l.b16 %v655
          %v720 = vunpack.c.l.b16 %v656
          %v721 = vunpack.c.l.b16 %v657
          %v722 = vunpack.c.l.b16 %v658
          %v723 = vunpack.c.l.b16 %v659
          %v724 = vunpack.c.l.b16 %v660
          %v725 = vpack.c.b16 %v694, %v693
          %v726 = vpack.c.b16 %v696, %v695
          %v727 = vpack.c.b16 %v698, %v697
          %v728 = vpack.c.b16 %v700, %v699
          %v729 = vpack.c.b16 %v702, %v701
          %v730 = vpack.c.b16 %v704, %v703
          %v731 = vpack.c.b16 %v706, %v705
          %v732 = vpack.c.b16 %v708, %v707
          %v733 = vpack.c.b16 %v710, %v709
          %v734 = vpack.c.b16 %v712, %v711
          %v735 = vpack.c.b16 %v714, %v713
          %v736 = vpack.c.b16 %v716, %v715
          %v737 = vpack.c.b16 %v718, %v717
          %v738 = vpack.c.b16 %v720, %v719
          %v739 = vpack.c.b16 %v722, %v721
          %v740 = vpack.c.b16 %v724, %v723
          %757 = vmatprep.subr.bf16.mxu0 0
          %758 = vmatpush1.bf16.msra.mxu0 %v725
          %759 = vmatprep.subr.bf16.mxu0 0
          %760 = vmatpush1.bf16.msra.mxu0 %v726
          %761 = vmatprep.subr.bf16.mxu0 0
          %762 = vmatpush1.bf16.msra.mxu0 %v727
          %763 = vmatprep.subr.bf16.mxu0 0
          %764 = vmatpush1.bf16.msra.mxu0 %v728
          %765 = vmatprep.subr.bf16.mxu0 0
          %766 = vmatpush1.bf16.msra.mxu0 %v729
          %767 = vmatprep.subr.bf16.mxu0 0
          %768 = vmatpush1.bf16.msra.mxu0 %v730
          %769 = vmatprep.subr.bf16.mxu0 0
          %770 = vmatpush1.bf16.msra.mxu0 %v731
          %771 = vmatprep.subr.bf16.mxu0 0
          %772 = vmatpush1.bf16.msra.mxu0 %v732
          %773 = vmatprep.subr.bf16.mxu0 0
          %774 = vmatpush1.bf16.msra.mxu0 %v733
          %775 = vmatprep.subr.bf16.mxu0 0
          %776 = vmatpush1.bf16.msra.mxu0 %v734
          %777 = vmatprep.subr.bf16.mxu0 0
          %778 = vmatpush1.bf16.msra.mxu0 %v735
          %779 = vmatprep.subr.bf16.mxu0 0
          %780 = vmatpush1.bf16.msra.mxu0 %v736
          %781 = vmatprep.subr.bf16.mxu0 0
          %782 = vmatpush1.bf16.msra.mxu0 %v737
          %783 = vmatprep.subr.bf16.mxu0 0
          %784 = vmatpush1.bf16.msra.mxu0 %v738
          %785 = vmatprep.subr.bf16.mxu0 0
          %786 = vmatpush1.bf16.msra.mxu0 %v739
          %787 = vmatprep.subr.bf16.mxu0 0
          %788 = vmatpush1.bf16.msra.mxu0 %v740
          %789 = vmatprep.mubr.bf16.mxu0 %v628
          %790 = vmatmul.mubr.bf16.gmra.mrb[0].mxu0 %v627
          %v791 = vpop.f32.mrb[0].mxu0
          %v792 = vadd.f32 0.0, %v791
          %v793 = vpop.f32.mrb[0].mxu0
          %v794 = vpop.f32.mrb[0].mxu0
          %v795 = vadd.f32 0.0, %v794
          %v796 = vpop.f32.mrb[0].mxu0
          %797 = vdwg.mxu0
          %798 = vst [vmem:[#allocation2] sm:$0xff] %v792
          %799 = vst [vmem:[#allocation2 + $0x8] sm:$0xff] %v795
        $region96: #{closed_call.26} parent=71 // pred_fallthru
          _
        %v800 = vld [vmem:[#allocation2] sm:$0xff]
        %v801 = vld [vmem:[#allocation2 + $0x8] sm:$0xff]
        %v802 = vld [vmem:[%s3] sm:$0xff]
        %v803 = vld [vmem:[%s3 + $0x8] sm:$0xff]
        %v804 = vld [vmem:[%s4] sm:$0xff]
        %v805 = vld [vmem:[%s4 + $0x8] sm:$0xff]
        %v806 = vld [vmem:[%s5] sm:$0xff]
        %v807 = vld [vmem:[%s5 + $0x8] sm:$0xff]
        %v808 = vld [vmem:[%s594] sm:$0x1]
        %v809 = vmul.f32 %v800, %v800
        %v810 = vmul.f32 %v801, %v801
        %811 = vadd.xlane.f32.xlu0 %v809
        %v812 = vpop.xlane.xlu0 %811
        %813 = vadd.xlane.f32.xlu0 %v810
        %v814 = vpop.xlane.xlu0 %813
        %v815 = vrcp.pop 128.0
        %v816 = vmul.f32 %v812, %v815
        %v817 = vmul.f32 %v814, %v815
        %v818 = vadd.f32 %v816, 1e-06
        %v819 = vadd.f32 %v817, 1e-06
        %v820 = vrsqrt.pop %v818
        %v821 = vrsqrt.pop %v819
        %v822 = vmul.f32 %v800, %v820
        %v823 = vmul.f32 %v801, %v821
        %v825 = vlaneseq
        %v826 = vshrl.u32 %v825, 7
        %v827 = vsub.s32 0, %v826
        %v828 = vrot.slane %v808, %v827
        %v830 = vmul.f32 %v822, %v828
        %v831 = vmul.f32 %v823, %v828
        %v832 = vpack.c.bf16 %v831, %v830
        %v833 = vld [vmem:[%s599] sm:$0xff]
        %v834 = vld [vmem:[%s599 + $0x8] sm:$0xff]
        %v835 = vld [vmem:[%s599 + $0x10] sm:$0xf]
        %v836 = vld [vmem:[%s599 + $0x14] sm:$0xff]
        %v837 = vld [vmem:[%s599 + $0x1c] sm:$0xff]
        %v838 = vld [vmem:[%s599 + $0x24] sm:$0xf]
        %v839 = vld [vmem:[%s599 + $0x28] sm:$0xff]
        %v840 = vld [vmem:[%s599 + $0x30] sm:$0xff]
        %v841 = vld [vmem:[%s599 + $0x38] sm:$0xf]
        %v842 = vld [vmem:[%s599 + $0x3c] sm:$0xff]
        %v843 = vld [vmem:[%s599 + $0x44] sm:$0xff]
        %v844 = vld [vmem:[%s599 + $0x4c] sm:$0xf]
        %v845 = vld [vmem:[%s599 + $0x50] sm:$0xff]
        %v846 = vld [vmem:[%s599 + $0x58] sm:$0xff]
        %v847 = vld [vmem:[%s599 + $0x60] sm:$0xf]
        %v848 = vld [vmem:[%s599 + $0x64] sm:$0xff]
        %v849 = vld [vmem:[%s599 + $0x6c] sm:$0xff]
        %v850 = vld [vmem:[%s599 + $0x74] sm:$0xf]
        %v851 = vld [vmem:[%s599 + $0x78] sm:$0xff]
        %v852 = vld [vmem:[%s599 + $0x80] sm:$0xff]
        %v853 = vld [vmem:[%s599 + $0x88] sm:$0xf]
        %v854 = vld [vmem:[%s599 + $0x8c] sm:$0xff]
        %v855 = vld [vmem:[%s599 + $0x94] sm:$0xff]
        %v856 = vld [vmem:[%s599 + $0x9c] sm:$0xf]
        %v857 = vld [vmem:[%s599 + $0xa0] sm:$0xff]
        %v858 = vld [vmem:[%s599 + $0xa8] sm:$0xff]
        %v859 = vld [vmem:[%s599 + $0xb0] sm:$0xf]
        %v860 = vld [vmem:[%s599 + $0xb4] sm:$0xff]
        %v861 = vld [vmem:[%s599 + $0xbc] sm:$0xff]
        %v862 = vld [vmem:[%s599 + $0xc4] sm:$0xf]
        %v863 = vld [vmem:[%s599 + $0xc8] sm:$0xff]
        %v864 = vld [vmem:[%s599 + $0xd0] sm:$0xff]
        %v865 = vld [vmem:[%s599 + $0xd8] sm:$0xf]
        %v866 = vld [vmem:[%s599 + $0xdc] sm:$0xff]
        %v867 = vld [vmem:[%s599 + $0xe4] sm:$0xff]
        %v868 = vld [vmem:[%s599 + $0xec] sm:$0xf]
        %v869 = vld [vmem:[%s599 + $0xf0] sm:$0xff]
        %v870 = vld [vmem:[%s599 + $0xf8] sm:$0xff]
        %v871 = vld [vmem:[%s599 + $0x100] sm:$0xf]
        %v872 = vld [vmem:[%s599 + $0x104] sm:$0xff]
        %v873 = vld [vmem:[%s599 + $0x10c] sm:$0xff]
        %v874 = vld [vmem:[%s599 + $0x114] sm:$0xf]
        %v875 = vld [vmem:[%s599 + $0x118] sm:$0xff]
        %v876 = vld [vmem:[%s599 + $0x120] sm:$0xff]
        %v877 = vld [vmem:[%s599 + $0x128] sm:$0xf]
        %v878 = vld [vmem:[%s599 + $0x12c] sm:$0xff]
        %v879 = vld [vmem:[%s599 + $0x134] sm:$0xff]
        %v880 = vld [vmem:[%s599 + $0x13c] sm:$0xf]
        %v929 = vunpack.c.l.b16 %v833
        %v930 = vunpack.c.h.b16 %v833
        %v931 = vunpack.c.l.b16 %v834
        %v932 = vunpack.c.h.b16 %v834
        %v933 = vunpack.c.l.b16 %v835
        %v934 = vunpack.c.l.b16 %v836
        %v935 = vunpack.c.h.b16 %v836
        %v936 = vunpack.c.l.b16 %v837
        %v937 = vunpack.c.h.b16 %v837
        %v938 = vunpack.c.l.b16 %v838
        %v939 = vunpack.c.l.b16 %v839
        %v940 = vunpack.c.h.b16 %v839
        %v941 = vunpack.c.l.b16 %v840
        %v942 = vunpack.c.h.b16 %v840
        %v943 = vunpack.c.l.b16 %v841
        %v944 = vunpack.c.l.b16 %v842
        %v945 = vunpack.c.h.b16 %v842
        %v946 = vunpack.c.l.b16 %v843
        %v947 = vunpack.c.h.b16 %v843
        %v948 = vunpack.c.l.b16 %v844
        %v949 = vunpack.c.l.b16 %v845
        %v950 = vunpack.c.h.b16 %v845
        %v951 = vunpack.c.l.b16 %v846
        %v952 = vunpack.c.h.b16 %v846
        %v953 = vunpack.c.l.b16 %v847
        %v954 = vunpack.c.l.b16 %v848
        %v955 = vunpack.c.h.b16 %v848
        %v956 = vunpack.c.l.b16 %v849
        %v957 = vunpack.c.h.b16 %v849
        %v958 = vunpack.c.l.b16 %v850
        %v959 = vunpack.c.l.b16 %v851
        %v960 = vunpack.c.h.b16 %v851
        %v961 = vunpack.c.l.b16 %v852
        %v962 = vunpack.c.h.b16 %v852
        %v963 = vunpack.c.l.b16 %v853
        %v964 = vunpack.c.l.b16 %v854
        %v965 = vunpack.c.h.b16 %v854
        %v966 = vunpack.c.l.b16 %v855
        %v967 = vunpack.c.h.b16 %v855
        %v968 = vunpack.c.l.b16 %v856
        %v969 = vunpack.c.l.b16 %v857
        %v970 = vunpack.c.h.b16 %v857
        %v971 = vunpack.c.l.b16 %v858
        %v972 = vunpack.c.h.b16 %v858
        %v973 = vunpack.c.l.b16 %v859
        %v974 = vunpack.c.l.b16 %v860
        %v975 = vunpack.c.h.b16 %v860
        %v976 = vunpack.c.l.b16 %v861
        %v977 = vunpack.c.h.b16 %v861
        %v978 = vunpack.c.l.b16 %v862
        %v979 = vunpack.c.l.b16 %v863
        %v980 = vunpack.c.h.b16 %v863
        %v981 = vunpack.c.l.b16 %v864
        %v982 = vunpack.c.h.b16 %v864
        %v983 = vunpack.c.l.b16 %v865
        %v984 = vunpack.c.l.b16 %v866
        %v985 = vunpack.c.h.b16 %v866
        %v986 = vunpack.c.l.b16 %v867
        %v987 = vunpack.c.h.b16 %v867
        %v988 = vunpack.c.l.b16 %v868
        %v989 = vunpack.c.l.b16 %v869
        %v990 = vunpack.c.h.b16 %v869
        %v991 = vunpack.c.l.b16 %v870
        %v992 = vunpack.c.h.b16 %v870
        %v993 = vunpack.c.l.b16 %v871
        %v994 = vunpack.c.l.b16 %v872
        %v995 = vunpack.c.h.b16 %v872
        %v996 = vunpack.c.l.b16 %v873
        %v997 = vunpack.c.h.b16 %v873
        %v998 = vunpack.c.l.b16 %v874
        %v999 = vunpack.c.l.b16 %v875
        %v1000 = vunpack.c.h.b16 %v875
        %v1001 = vunpack.c.l.b16 %v876
        %v1002 = vunpack.c.h.b16 %v876
        %v1003 = vunpack.c.l.b16 %v877
        %v1004 = vunpack.c.l.b16 %v878
        %v1005 = vunpack.c.h.b16 %v878
        %v1006 = vunpack.c.l.b16 %v879
        %v1007 = vunpack.c.h.b16 %v879
        %v1008 = vunpack.c.l.b16 %v880
        %v1009 = vpack.c.b16 %v934, %v929
        %v1010 = vpack.c.b16 %v935, %v930
        %v1011 = vpack.c.b16 %v936, %v931
        %v1012 = vpack.c.b16 %v937, %v932
        %v1013 = vpack.c.b16 %v938, %v933
        %v1014 = vpack.c.b16 %v944, %v939
        %v1015 = vpack.c.b16 %v945, %v940
        %v1016 = vpack.c.b16 %v946, %v941
        %v1017 = vpack.c.b16 %v947, %v942
        %v1018 = vpack.c.b16 %v948, %v943
        %v1019 = vpack.c.b16 %v954, %v949
        %v1020 = vpack.c.b16 %v955, %v950
        %v1021 = vpack.c.b16 %v956, %v951
        %v1022 = vpack.c.b16 %v957, %v952
        %v1023 = vpack.c.b16 %v958, %v953
        %v1024 = vpack.c.b16 %v964, %v959
        %v1025 = vpack.c.b16 %v965, %v960
        %v1026 = vpack.c.b16 %v966, %v961
        %v1027 = vpack.c.b16 %v967, %v962
        %v1028 = vpack.c.b16 %v968, %v963
        %v1029 = vpack.c.b16 %v974, %v969
        %v1030 = vpack.c.b16 %v975, %v970
        %v1031 = vpack.c.b16 %v976, %v971
        %v1032 = vpack.c.b16 %v977, %v972
        %v1033 = vpack.c.b16 %v978, %v973
        %v1034 = vpack.c.b16 %v984, %v979
        %v1035 = vpack.c.b16 %v985, %v980
        %v1036 = vpack.c.b16 %v986, %v981
        %v1037 = vpack.c.b16 %v987, %v982
        %v1038 = vpack.c.b16 %v988, %v983
        %v1039 = vpack.c.b16 %v994, %v989
        %v1040 = vpack.c.b16 %v995, %v990
        %v1041 = vpack.c.b16 %v996, %v991
        %v1042 = vpack.c.b16 %v997, %v992
        %v1043 = vpack.c.b16 %v998, %v993
        %v1044 = vpack.c.b16 %v1004, %v999
        %v1045 = vpack.c.b16 %v1005, %v1000
        %v1046 = vpack.c.b16 %v1006, %v1001
        %v1047 = vpack.c.b16 %v1007, %v1002
        %v1048 = vpack.c.b16 %v1008, %v1003
        %1089 = vmatprep.subr.bf16.mxu0 %v1010
        %1090 = vmatpush1.bf16.msra.mxu0 %v1009
        %1091 = vmatprep.subr.bf16.mxu0 %v1015
        %1092 = vmatpush1.bf16.msra.mxu0 %v1014
        %1093 = vmatprep.subr.bf16.mxu0 %v1020
        %1094 = vmatpush1.bf16.msra.mxu0 %v1019
        %1095 = vmatprep.subr.bf16.mxu0 %v1025
        %1096 = vmatpush1.bf16.msra.mxu0 %v1024
        %1097 = vmatprep.subr.bf16.mxu0 %v1030
        %1098 = vmatpush1.bf16.msra.mxu0 %v1029
        %1099 = vmatprep.subr.bf16.mxu0 %v1035
        %1100 = vmatpush1.bf16.msra.mxu0 %v1034
        %1101 = vmatprep.subr.bf16.mxu0 %v1040
        %1102 = vmatpush1.bf16.msra.mxu0 %v1039
        %1103 = vmatprep.subr.bf16.mxu0 %v1045
        %1104 = vmatpush1.bf16.msra.mxu0 %v1044
        %1105 = vmatprep.subr.bf16.mxu0 0
        %1106 = vmatpush1.bf16.msra.mxu0 0
        %1107 = vmatprep.subr.bf16.mxu0 0
        %1108 = vmatpush1.bf16.msra.mxu0 0
        %1109 = vmatprep.subr.bf16.mxu0 0
        %1110 = vmatpush1.bf16.msra.mxu0 0
        %1111 = vmatprep.subr.bf16.mxu0 0
        %1112 = vmatpush1.bf16.msra.mxu0 0
        %1113 = vmatprep.subr.bf16.mxu0 0
        %1114 = vmatpush1.bf16.msra.mxu0 0
        %1115 = vmatprep.subr.bf16.mxu0 0
        %1116 = vmatpush1.bf16.msra.mxu0 0
        %1117 = vmatprep.subr.bf16.mxu0 0
        %1118 = vmatpush1.bf16.msra.mxu0 0
        %1119 = vmatprep.subr.bf16.mxu0 0
        %1120 = vmatpush1.bf16.msra.mxu0 0
        %1121 = vmatprep.mubr.bf16.mxu0 0
        %1122 = vmatmul.mubr.bf16.gmra.mrb[0].mxu0 %v832
        %v1123 = vpop.f32.mrb[0].mxu0
        %v1124 = vadd.f32 0.0, %v1123
        %v1125 = vpop.f32.mrb[0].mxu0
        %v1126 = vadd.f32 0.0, %v1125
        %v1127 = vpop.f32.mrb[0].mxu0
        %v1128 = vadd.f32 0.0, %v1127
        %v1129 = vpop.f32.mrb[0].mxu0
        %v1130 = vadd.f32 0.0, %v1129
        %1131 = vdwg.mxu0
        %1132 = vmatprep.subr.bf16.mxu0 %v1012
        %1133 = vmatpush1.bf16.msra.mxu0 %v1011
        %1134 = vmatprep.subr.bf16.mxu0 %v1017
        %1135 = vmatpush1.bf16.msra.mxu0 %v1016
        %1136 = vmatprep.subr.bf16.mxu0 %v1022
        %1137 = vmatpush1.bf16.msra.mxu0 %v1021
        %1138 = vmatprep.subr.bf16.mxu0 %v1027
        %1139 = vmatpush1.bf16.msra.mxu0 %v1026
        %1140 = vmatprep.subr.bf16.mxu0 %v1032
        %1141 = vmatpush1.bf16.msra.mxu0 %v1031
        %1142 = vmatprep.subr.bf16.mxu0 %v1037
        %1143 = vmatpush1.bf16.msra.mxu0 %v1036
        %1144 = vmatprep.subr.bf16.mxu0 %v1042
        %1145 = vmatpush1.bf16.msra.mxu0 %v1041
        %1146 = vmatprep.subr.bf16.mxu0 %v1047
        %1147 = vmatpush1.bf16.msra.mxu0 %v1046
        %1148 = vmatprep.subr.bf16.mxu0 0
        %1149 = vmatpush1.bf16.msra.mxu0 0
        %1150 = vmatprep.subr.bf16.mxu0 0
        %1151 = vmatpush1.bf16.msra.mxu0 0
        %1152 = vmatprep.subr.bf16.mxu0 0
        %1153 = vmatpush1.bf16.msra.mxu0 0
        %1154 = vmatprep.subr.bf16.mxu0 0
        %1155 = vmatpush1.bf16.msra.mxu0 0
        %1156 = vmatprep.subr.bf16.mxu0 0
        %1157 = vmatpush1.bf16.msra.mxu0 0
        %1158 = vmatprep.subr.bf16.mxu0 0
        %1159 = vmatpush1.bf16.msra.mxu0 0
        %1160 = vmatprep.subr.bf16.mxu0 0
        %1161 = vmatpush1.bf16.msra.mxu0 0
        %1162 = vmatprep.subr.bf16.mxu0 0
        %1163 = vmatpush1.bf16.msra.mxu0 0
        %1164 = vmatprep.mubr.bf16.mxu0 0
        %1165 = vmatmul.mubr.bf16.gmra.mrb[0].mxu0 %v832
        %v1166 = vpop.f32.mrb[0].mxu0
        %v1167 = vadd.f32 0.0, %v1166
        %v1168 = vpop.f32.mrb[0].mxu0
        %v1169 = vadd.f32 0.0, %v1168
        %v1170 = vpop.f32.mrb[0].mxu0
        %v1171 = vadd.f32 0.0, %v1170
        %v1172 = vpop.f32.mrb[0].mxu0
        %v1173 = vadd.f32 0.0, %v1172
        %1174 = vdwg.mxu0
        %1175 = vmatprep.subr.bf16.mxu0 0
        %1176 = vmatpush1.bf16.msra.mxu0 %v1013
        %1177 = vmatprep.subr.bf16.mxu0 0
        %1178 = vmatpush1.bf16.msra.mxu0 %v1018
        %1179 = vmatprep.subr.bf16.mxu0 0
        %1180 = vmatpush1.bf16.msra.mxu0 %v1023
        %1181 = vmatprep.subr.bf16.mxu0 0
        %1182 = vmatpush1.bf16.msra.mxu0 %v1028
        %1183 = vmatprep.subr.bf16.mxu0 0
        %1184 = vmatpush1.bf16.msra.mxu0 %v1033
        %1185 = vmatprep.subr.bf16.mxu0 0
        %1186 = vmatpush1.bf16.msra.mxu0 %v1038
        %1187 = vmatprep.subr.bf16.mxu0 0
        %1188 = vmatpush1.bf16.msra.mxu0 %v1043
        %1189 = vmatprep.subr.bf16.mxu0 0
        %1190 = vmatpush1.bf16.msra.mxu0 %v1048
        %1191 = vmatprep.subr.bf16.mxu0 0
        %1192 = vmatpush1.bf16.msra.mxu0 0
        %1193 = vmatprep.subr.bf16.mxu0 0
        %1194 = vmatpush1.bf16.msra.mxu0 0
        %1195 = vmatprep.subr.bf16.mxu0 0
        %1196 = vmatpush1.bf16.msra.mxu0 0
        %1197 = vmatprep.subr.bf16.mxu0 0
        %1198 = vmatpush1.bf16.msra.mxu0 0
        %1199 = vmatprep.subr.bf16.mxu0 0
        %1200 = vmatpush1.bf16.msra.mxu0 0
        %1201 = vmatprep.subr.bf16.mxu0 0
        %1202 = vmatpush1.bf16.msra.mxu0 0
        %1203 = vmatprep.subr.bf16.mxu0 0
        %1204 = vmatpush1.bf16.msra.mxu0 0
        %1205 = vmatprep.subr.bf16.mxu0 0
        %1206 = vmatpush1.bf16.msra.mxu0 0
        %1207 = vmatprep.mubr.bf16.mxu0 0
        %1208 = vmatmul.mubr.bf16.gmra.mrb[0].mxu0 %v832
        %v1209 = vpop.f32.mrb[0].mxu0
        %v1210 = vadd.f32 0.0, %v1209
        %v1211 = vpop.f32.mrb[0].mxu0
        %v1212 = vpop.f32.mrb[0].mxu0
        %v1213 = vadd.f32 0.0, %v1212
        %v1214 = vpop.f32.mrb[0].mxu0
        %1215 = vdwg.mxu0
        %v1216 = vmul.f32 %v1124, %v802
        %v1217 = vmul.f32 %v1128, %v803
        %v1218 = vmul.f32 %v1126, %v804
        %v1219 = vmul.f32 %v1130, %v805
        %v1220 = vadd.f32 %v1216, %v1218
        %v1221 = vadd.f32 %v1217, %v1219
        %v1222 = vmul.f32 %v1167, %v802
        %v1223 = vmul.f32 %v1171, %v803
        %v1224 = vmul.f32 %v1169, %v804
        %v1225 = vmul.f32 %v1173, %v805
        %v1226 = vadd.f32 %v1222, %v1224
        %v1227 = vadd.f32 %v1223, %v1225
        %v1228 = vpack.c.bf16 %v1221, %v1220
        %v1229 = vpack.c.bf16 %v1227, %v1226
        %v1230 = vpack.c.bf16 %v1213, %v1210
        %vm1231 = vcmask 261120
        %v1233 = vsel %vm1231, %v1228, 0
        %v1236 = vsel %vm1231, %v1229, 0
        %1238 = vmatprep.subr.bf16.mxu0 0
        %1239 = vmatpush1.bf16.xpose.msra.mxu0 %v1236
        %1240 = vmatprep.subr.bf16.mxu0 0
        %1241 = vmatpush1.bf16.xpose.msra.mxu0 0
        %1242 = vmatprep.subr.bf16.mxu0 0
        %1243 = vmatpush1.bf16.xpose.msra.mxu0 0
        %1244 = vmatprep.subr.bf16.mxu0 0
        %1245 = vmatpush1.bf16.xpose.msra.mxu0 0
        %1246 = vmatprep.subr.bf16.mxu0 0
        %1247 = vmatpush1.bf16.xpose.msra.mxu0 0
        %1248 = vmatprep.subr.bf16.mxu0 0
        %1249 = vmatpush1.bf16.xpose.msra.mxu0 0
        %1250 = vmatprep.subr.bf16.mxu0 0
        %1251 = vmatpush1.bf16.xpose.msra.mxu0 0
        %1252 = vmatprep.subr.bf16.mxu0 0
        %1253 = vmatpush1.bf16.xpose.msra.mxu0 0
        %1254 = vmatprep.subr.bf16.mxu0 0
        %1255 = vmatpush1.bf16.xpose.msra.mxu0 0
        %1256 = vmatprep.subr.bf16.mxu0 0
        %1257 = vmatpush1.bf16.xpose.msra.mxu0 0
        %1258 = vmatprep.subr.bf16.mxu0 0
        %1259 = vmatpush1.bf16.xpose.msra.mxu0 0
        %1260 = vmatprep.subr.bf16.mxu0 0
        %1261 = vmatpush1.bf16.xpose.msra.mxu0 0
        %1262 = vmatprep.subr.bf16.mxu0 0
        %1263 = vmatpush1.bf16.xpose.msra.mxu0 0
        %1264 = vmatprep.subr.bf16.mxu0 0
        %1265 = vmatpush1.bf16.xpose.msra.mxu0 0
        %1266 = vmatprep.subr.bf16.mxu0 0
        %1267 = vmatpush1.bf16.xpose.msra.mxu0 0
        %1268 = vmatprep.subr.bf16.mxu0 0
        %1269 = vmatpush1.bf16.xpose.msra.mxu0 0
        %1270 = vmatprep.mubr.bf16.mxu0 0
        %1271 = vmatmul.mubr.bf16.gmra.mrb[0].mxu0 %v1233
        %v1272 = vpop.f32.mrb[0].mxu0
        %v1273 = vadd.f32 %v806, %v1272
        %v1274 = vpop.f32.mrb[0].mxu0
        %v1275 = vpop.f32.mrb[0].mxu0
        %v1276 = vadd.f32 %v807, %v1275
        %v1277 = vpop.f32.mrb[0].mxu0
        %1278 = vdwg.mxu0
        %vm1279 = vcmask 130048
        %v1280 = vsel %vm1279, %v1273, -inf
        %1281 = vmax.xlane.f32.xlu0 %v1280
        %v1282 = vpop.xlane.xlu0 %1281
        %v1283 = vsel %vm1279, %v1276, -inf
        %1284 = vmax.xlane.f32.xlu0 %v1283
        %v1285 = vpop.xlane.xlu0 %1284
        %v1286 = vsub.f32 %v1273, %v1282
        %v1287 = vsub.f32 %v1276, %v1285
        %v1288 = vmul.f32 %v1286, 1.442695
        %v1289 = vpow.pop %v1288
        %v1290 = vmul.f32 %v1287, 1.442695
        %v1291 = vpow.pop %v1290
        %v1292 = vsel %vm1279, %v1289, 0.0
        %1293 = vadd.xlane.f32.xlu0 %v1292
        %v1294 = vpop.xlane.xlu0 %1293
        %v1295 = vsel %vm1279, %v1291, 0.0
        %1296 = vadd.xlane.f32.xlu0 %v1295
        %v1297 = vpop.xlane.xlu0 %1296
        %v1298 = vrcp.pop %v1294
        %v1299 = vrcp.pop %v1297
        %v1300 = vmul.f32 %v1289, %v1298
        %v1301 = vmul.f32 %v1291, %v1299
        %v1302 = vpack.c.bf16 %v1301, %v1300
        %v1304 = vsel %vm1279, %v1302, 0
        %1306 = vmatprep.subr.bf16.mxu0 0
        %1307 = vmatpush1.bf16.msra.mxu0 %v1230
        %1308 = vmatprep.subr.bf16.mxu0 0
        %1309 = vmatpush1.bf16.msra.mxu0 0
        %1310 = vmatprep.subr.bf16.mxu0 0
        %1311 = vmatpush1.bf16.msra.mxu0 0
        %1312 = vmatprep.subr.bf16.mxu0 0
        %1313 = vmatpush1.bf16.msra.mxu0 0
        %1314 = vmatprep.subr.bf16.mxu0 0
        %1315 = vmatpush1.bf16.msra.mxu0 0
        %1316 = vmatprep.subr.bf16.mxu0 0
        %1317 = vmatpush1.bf16.msra.mxu0 0
        %1318 = vmatprep.subr.bf16.mxu0 0
        %1319 = vmatpush1.bf16.msra.mxu0 0
        %1320 = vmatprep.subr.bf16.mxu0 0
        %1321 = vmatpush1.bf16.msra.mxu0 0
        %1322 = vmatprep.subr.bf16.mxu0 0
        %1323 = vmatpush1.bf16.msra.mxu0 0
        %1324 = vmatprep.subr.bf16.mxu0 0
        %1325 = vmatpush1.bf16.msra.mxu0 0
        %1326 = vmatprep.subr.bf16.mxu0 0
        %1327 = vmatpush1.bf16.msra.mxu0 0
        %1328 = vmatprep.subr.bf16.mxu0 0
        %1329 = vmatpush1.bf16.msra.mxu0 0
        %1330 = vmatprep.subr.bf16.mxu0 0
        %1331 = vmatpush1.bf16.msra.mxu0 0
        %1332 = vmatprep.subr.bf16.mxu0 0
        %1333 = vmatpush1.bf16.msra.mxu0 0
        %1334 = vmatprep.subr.bf16.mxu0 0
        %1335 = vmatpush1.bf16.msra.mxu0 0
        %1336 = vmatprep.subr.bf16.mxu0 0
        %1337 = vmatpush1.bf16.msra.mxu0 0
        %1338 = vmatprep.mubr.bf16.mxu0 0
        %1339 = vmatmul.mubr.bf16.gmra.mrb[0].mxu0 %v1304
        %v1340 = vpop.f32.mrb[0].mxu0
        %v1341 = vadd.f32 0.0, %v1340
        %v1342 = vpop.f32.mrb[0].mxu0
        %v1343 = vpop.f32.mrb[0].mxu0
        %v1344 = vadd.f32 0.0, %v1343
        %v1345 = vpop.f32.mrb[0].mxu0
        %1346 = vdwg.mxu0
        %1347 = vst.msk [vmem:[#allocation3] sm:$0xff] %vm1231, %v1341
        %1348 = vst.msk [vmem:[#allocation3 + $0x8] sm:$0xff] %vm1231, %v1344
        %1350 = vrot.lane.b32.xlu0 %v1228, 96
        %v1351 = vpop.permute.xlu0 %1350
        %1353 = vrot.lane.b32.xlu0 %v1229, 96
        %v1354 = vpop.permute.xlu0 %1353
        %v1356 = vsel %vm1231, %v1351, 0
        %v1359 = vsel %vm1231, %v1354, 0
        %1361 = vmatprep.subr.bf16.mxu0 0
        %1362 = vmatpush1.bf16.xpose.msra.mxu0 %v1359
        %1363 = vmatprep.subr.bf16.mxu0 0
        %1364 = vmatpush1.bf16.xpose.msra.mxu0 0
        %1365 = vmatprep.subr.bf16.mxu0 0
        %1366 = vmatpush1.bf16.xpose.msra.mxu0 0
        %1367 = vmatprep.subr.bf16.mxu0 0
        %1368 = vmatpush1.bf16.xpose.msra.mxu0 0
        %1369 = vmatprep.subr.bf16.mxu0 0
        %1370 = vmatpush1.bf16.xpose.msra.mxu0 0
        %1371 = vmatprep.subr.bf16.mxu0 0
        %1372 = vmatpush1.bf16.xpose.msra.mxu0 0
        %1373 = vmatprep.subr.bf16.mxu0 0
        %1374 = vmatpush1.bf16.xpose.msra.mxu0 0
        %1375 = vmatprep.subr.bf16.mxu0 0
        %1376 = vmatpush1.bf16.xpose.msra.mxu0 0
        %1377 = vmatprep.subr.bf16.mxu0 0
        %1378 = vmatpush1.bf16.xpose.msra.mxu0 0
        %1379 = vmatprep.subr.bf16.mxu0 0
        %1380 = vmatpush1.bf16.xpose.msra.mxu0 0
        %1381 = vmatprep.subr.bf16.mxu0 0
        %1382 = vmatpush1.bf16.xpose.msra.mxu0 0
        %1383 = vmatprep.subr.bf16.mxu0 0
        %1384 = vmatpush1.bf16.xpose.msra.mxu0 0
        %1385 = vmatprep.subr.bf16.mxu0 0
        %1386 = vmatpush1.bf16.xpose.msra.mxu0 0
        %1387 = vmatprep.subr.bf16.mxu0 0
        %1388 = vmatpush1.bf16.xpose.msra.mxu0 0
        %1389 = vmatprep.subr.bf16.mxu0 0
        %1390 = vmatpush1.bf16.xpose.msra.mxu0 0
        %1391 = vmatprep.subr.bf16.mxu0 0
        %1392 = vmatpush1.bf16.xpose.msra.mxu0 0
        %1393 = vmatprep.mubr.bf16.mxu0 0
        %1394 = vmatmul.mubr.bf16.gmra.mrb[0].mxu0 %v1356
        %v1395 = vpop.f32.mrb[0].mxu0
        %v1396 = vadd.f32 %v806, %v1395
        %v1397 = vpop.f32.mrb[0].mxu0
        %v1398 = vpop.f32.mrb[0].mxu0
        %v1399 = vadd.f32 %v807, %v1398
        %v1400 = vpop.f32.mrb[0].mxu0
        %1401 = vdwg.mxu0
        %v1402 = vsel %vm1279, %v1396, -inf
        %1403 = vmax.xlane.f32.xlu0 %v1402
        %v1404 = vpop.xlane.xlu0 %1403
        %v1405 = vsel %vm1279, %v1399, -inf
        %1406 = vmax.xlane.f32.xlu0 %v1405
        %v1407 = vpop.xlane.xlu0 %1406
        %v1408 = vsub.f32 %v1396, %v1404
        %v1409 = vsub.f32 %v1399, %v1407
        %v1410 = vmul.f32 %v1408, 1.442695
        %v1411 = vpow.pop %v1410
        %v1412 = vmul.f32 %v1409, 1.442695
        %v1413 = vpow.pop %v1412
        %v1414 = vsel %vm1279, %v1411, 0.0
        %1415 = vadd.xlane.f32.xlu0 %v1414
        %v1416 = vpop.xlane.xlu0 %1415
        %v1417 = vsel %vm1279, %v1413, 0.0
        %1418 = vadd.xlane.f32.xlu0 %v1417
        %v1419 = vpop.xlane.xlu0 %1418
        %v1420 = vrcp.pop %v1416
        %v1421 = vrcp.pop %v1419
        %v1422 = vmul.f32 %v1411, %v1420
        %v1423 = vmul.f32 %v1413, %v1421
        %v1424 = vpack.c.bf16 %v1423, %v1422
        %1426 = vrot.lane.b32.xlu0 %v1230, 96
        %v1427 = vpop.permute.xlu0 %1426
        %v1430 = vsel %vm1279, %v1424, 0
        %1432 = vmatprep.subr.bf16.mxu0 0
        %1433 = vmatpush1.bf16.msra.mxu0 %v1427
        %1434 = vmatprep.subr.bf16.mxu0 0
        %1435 = vmatpush1.bf16.msra.mxu0 0
        %1436 = vmatprep.subr.bf16.mxu0 0
        %1437 = vmatpush1.bf16.msra.mxu0 0
        %1438 = vmatprep.subr.bf16.mxu0 0
        %1439 = vmatpush1.bf16.msra.mxu0 0
        %1440 = vmatprep.subr.bf16.mxu0 0
        %1441 = vmatpush1.bf16.msra.mxu0 0
        %1442 = vmatprep.subr.bf16.mxu0 0
        %1443 = vmatpush1.bf16.msra.mxu0 0
        %1444 = vmatprep.subr.bf16.mxu0 0
        %1445 = vmatpush1.bf16.msra.mxu0 0
        %1446 = vmatprep.subr.bf16.mxu0 0
        %1447 = vmatpush1.bf16.msra.mxu0 0
        %1448 = vmatprep.subr.bf16.mxu0 0
        %1449 = vmatpush1.bf16.msra.mxu0 0
        %1450 = vmatprep.subr.bf16.mxu0 0
        %1451 = vmatpush1.bf16.msra.mxu0 0
        %1452 = vmatprep.subr.bf16.mxu0 0
        %1453 = vmatpush1.bf16.msra.mxu0 0
        %1454 = vmatprep.subr.bf16.mxu0 0
        %1455 = vmatpush1.bf16.msra.mxu0 0
        %1456 = vmatprep.subr.bf16.mxu0 0
        %1457 = vmatpush1.bf16.msra.mxu0 0
        %1458 = vmatprep.subr.bf16.mxu0 0
        %1459 = vmatpush1.bf16.msra.mxu0 0
        %1460 = vmatprep.subr.bf16.mxu0 0
        %1461 = vmatpush1.bf16.msra.mxu0 0
        %1462 = vmatprep.subr.bf16.mxu0 0
        %1463 = vmatpush1.bf16.msra.mxu0 0
        %1464 = vmatprep.mubr.bf16.mxu0 0
        %1465 = vmatmul.mubr.bf16.gmra.mrb[0].mxu0 %v1430
        %v1466 = vpop.f32.mrb[0].mxu0
        %v1467 = vadd.f32 0.0, %v1466
        %v1468 = vpop.f32.mrb[0].mxu0
        %v1469 = vpop.f32.mrb[0].mxu0
        %v1470 = vadd.f32 0.0, %v1469
        %v1471 = vpop.f32.mrb[0].mxu0
        %1472 = vdwg.mxu0
        %1475 = vrot.lane.b32.xlu0 %v1467, 32
        %v1476 = vpop.permute.xlu0 %1475
        %1477 = vrot.lane.b32.xlu0 %v1470, 32
        %v1478 = vpop.permute.xlu0 %1477
        %vm1481 = vcmask 523520
        %1482 = vst.msk [vmem:[#allocation3] sm:$0xff] %vm1481, %v1476
        %1483 = vst.msk [vmem:[#allocation3 + $0x8] sm:$0xff] %vm1481, %v1478
        %1484 = vrot.lane.b32.xlu0 %v1228, 64
        %v1485 = vpop.permute.xlu0 %1484
        %1486 = vrot.lane.b32.xlu0 %v1229, 64
        %v1487 = vpop.permute.xlu0 %1486
        %v1489 = vsel %vm1231, %v1485, 0
        %v1492 = vsel %vm1231, %v1487, 0
        %1494 = vmatprep.subr.bf16.mxu0 0
        %1495 = vmatpush1.bf16.xpose.msra.mxu0 %v1492
        %1496 = vmatprep.subr.bf16.mxu0 0
        %1497 = vmatpush1.bf16.xpose.msra.mxu0 0
        %1498 = vmatprep.subr.bf16.mxu0 0
        %1499 = vmatpush1.bf16.xpose.msra.mxu0 0
        %1500 = vmatprep.subr.bf16.mxu0 0
        %1501 = vmatpush1.bf16.xpose.msra.mxu0 0
        %1502 = vmatprep.subr.bf16.mxu0 0
        %1503 = vmatpush1.bf16.xpose.msra.mxu0 0
        %1504 = vmatprep.subr.bf16.mxu0 0
        %1505 = vmatpush1.bf16.xpose.msra.mxu0 0
        %1506 = vmatprep.subr.bf16.mxu0 0
        %1507 = vmatpush1.bf16.xpose.msra.mxu0 0
        %1508 = vmatprep.subr.bf16.mxu0 0
        %1509 = vmatpush1.bf16.xpose.msra.mxu0 0
        %1510 = vmatprep.subr.bf16.mxu0 0
        %1511 = vmatpush1.bf16.xpose.msra.mxu0 0
        %1512 = vmatprep.subr.bf16.mxu0 0
        %1513 = vmatpush1.bf16.xpose.msra.mxu0 0
        %1514 = vmatprep.subr.bf16.mxu0 0
        %1515 = vmatpush1.bf16.xpose.msra.mxu0 0
        %1516 = vmatprep.subr.bf16.mxu0 0
        %1517 = vmatpush1.bf16.xpose.msra.mxu0 0
        %1518 = vmatprep.subr.bf16.mxu0 0
        %1519 = vmatpush1.bf16.xpose.msra.mxu0 0
        %1520 = vmatprep.subr.bf16.mxu0 0
        %1521 = vmatpush1.bf16.xpose.msra.mxu0 0
        %1522 = vmatprep.subr.bf16.mxu0 0
        %1523 = vmatpush1.bf16.xpose.msra.mxu0 0
        %1524 = vmatprep.subr.bf16.mxu0 0
        %1525 = vmatpush1.bf16.xpose.msra.mxu0 0
        %1526 = vmatprep.mubr.bf16.mxu0 0
        %1527 = vmatmul.mubr.bf16.gmra.mrb[0].mxu0 %v1489
        %v1528 = vpop.f32.mrb[0].mxu0
        %v1529 = vadd.f32 %v806, %v1528
        %v1530 = vpop.f32.mrb[0].mxu0
        %v1531 = vpop.f32.mrb[0].mxu0
        %v1532 = vadd.f32 %v807, %v1531
        %v1533 = vpop.f32.mrb[0].mxu0
        %1534 = vdwg.mxu0
        %v1535 = vsel %vm1279, %v1529, -inf
        %1536 = vmax.xlane.f32.xlu0 %v1535
        %v1537 = vpop.xlane.xlu0 %1536
        %v1538 = vsel %vm1279, %v1532, -inf
        %1539 = vmax.xlane.f32.xlu0 %v1538
        %v1540 = vpop.xlane.xlu0 %1539
        %v1541 = vsub.f32 %v1529, %v1537
        %v1542 = vsub.f32 %v1532, %v1540
        %v1543 = vmul.f32 %v1541, 1.442695
        %v1544 = vpow.pop %v1543
        %v1545 = vmul.f32 %v1542, 1.442695
        %v1546 = vpow.pop %v1545
        %v1547 = vsel %vm1279, %v1544, 0.0
        %1548 = vadd.xlane.f32.xlu0 %v1547
        %v1549 = vpop.xlane.xlu0 %1548
        %v1550 = vsel %vm1279, %v1546, 0.0
        %1551 = vadd.xlane.f32.xlu0 %v1550
        %v1552 = vpop.xlane.xlu0 %1551
        %v1553 = vrcp.pop %v1549
        %v1554 = vrcp.pop %v1552
        %v1555 = vmul.f32 %v1544, %v1553
        %v1556 = vmul.f32 %v1546, %v1554
        %v1557 = vpack.c.bf16 %v1556, %v1555
        %1558 = vrot.lane.b32.xlu0 %v1230, 64
        %v1559 = vpop.permute.xlu0 %1558
        %v1562 = vsel %vm1279, %v1557, 0
        %1564 = vmatprep.subr.bf16.mxu0 0
        %1565 = vmatpush1.bf16.msra.mxu0 %v1559
        %1566 = vmatprep.subr.bf16.mxu0 0
        %1567 = vmatpush1.bf16.msra.mxu0 0
        %1568 = vmatprep.subr.bf16.mxu0 0
        %1569 = vmatpush1.bf16.msra.mxu0 0
        %1570 = vmatprep.subr.bf16.mxu0 0
        %1571 = vmatpush1.bf16.msra.mxu0 0
        %1572 = vmatprep.subr.bf16.mxu0 0
        %1573 = vmatpush1.bf16.msra.mxu0 0
        %1574 = vmatprep.subr.bf16.mxu0 0
        %1575 = vmatpush1.bf16.msra.mxu0 0
        %1576 = vmatprep.subr.bf16.mxu0 0
        %1577 = vmatpush1.bf16.msra.mxu0 0
        %1578 = vmatprep.subr.bf16.mxu0 0
        %1579 = vmatpush1.bf16.msra.mxu0 0
        %1580 = vmatprep.subr.bf16.mxu0 0
        %1581 = vmatpush1.bf16.msra.mxu0 0
        %1582 = vmatprep.subr.bf16.mxu0 0
        %1583 = vmatpush1.bf16.msra.mxu0 0
        %1584 = vmatprep.subr.bf16.mxu0 0
        %1585 = vmatpush1.bf16.msra.mxu0 0
        %1586 = vmatprep.subr.bf16.mxu0 0
        %1587 = vmatpush1.bf16.msra.mxu0 0
        %1588 = vmatprep.subr.bf16.mxu0 0
        %1589 = vmatpush1.bf16.msra.mxu0 0
        %1590 = vmatprep.subr.bf16.mxu0 0
        %1591 = vmatpush1.bf16.msra.mxu0 0
        %1592 = vmatprep.subr.bf16.mxu0 0
        %1593 = vmatpush1.bf16.msra.mxu0 0
        %1594 = vmatprep.subr.bf16.mxu0 0
        %1595 = vmatpush1.bf16.msra.mxu0 0
        %1596 = vmatprep.mubr.bf16.mxu0 0
        %1597 = vmatmul.mubr.bf16.gmra.mrb[0].mxu0 %v1562
        %v1598 = vpop.f32.mrb[0].mxu0
        %v1599 = vadd.f32 0.0, %v1598
        %v1600 = vpop.f32.mrb[0].mxu0
        %v1601 = vpop.f32.mrb[0].mxu0
        %v1602 = vadd.f32 0.0, %v1601
        %v1603 = vpop.f32.mrb[0].mxu0
        %1604 = vdwg.mxu0
        %1607 = vrot.lane.b32.xlu0 %v1599, 64
        %v1608 = vpop.permute.xlu0 %1607
        %1609 = vrot.lane.b32.xlu0 %v1602, 64
        %v1610 = vpop.permute.xlu0 %1609
        %vm1613 = vcmask 785920
        %1614 = vst.msk [vmem:[#allocation3] sm:$0xff] %vm1613, %v1608
        %1615 = vst.msk [vmem:[#allocation3 + $0x8] sm:$0xff] %vm1613, %v1610
        %1616 = vrot.lane.b32.xlu0 %v1228, 32
        %v1617 = vpop.permute.xlu0 %1616
        %1618 = vrot.lane.b32.xlu0 %v1229, 32
        %v1619 = vpop.permute.xlu0 %1618
        %v1621 = vsel %vm1231, %v1617, 0
        %v1624 = vsel %vm1231, %v1619, 0
        %1626 = vmatprep.subr.bf16.mxu0 0
        %1627 = vmatpush1.bf16.xpose.msra.mxu0 %v1624
        %1628 = vmatprep.subr.bf16.mxu0 0
        %1629 = vmatpush1.bf16.xpose.msra.mxu0 0
        %1630 = vmatprep.subr.bf16.mxu0 0
        %1631 = vmatpush1.bf16.xpose.msra.mxu0 0
        %1632 = vmatprep.subr.bf16.mxu0 0
        %1633 = vmatpush1.bf16.xpose.msra.mxu0 0
        %1634 = vmatprep.subr.bf16.mxu0 0
        %1635 = vmatpush1.bf16.xpose.msra.mxu0 0
        %1636 = vmatprep.subr.bf16.mxu0 0
        %1637 = vmatpush1.bf16.xpose.msra.mxu0 0
        %1638 = vmatprep.subr.bf16.mxu0 0
        %1639 = vmatpush1.bf16.xpose.msra.mxu0 0
        %1640 = vmatprep.subr.bf16.mxu0 0
        %1641 = vmatpush1.bf16.xpose.msra.mxu0 0
        %1642 = vmatprep.subr.bf16.mxu0 0
        %1643 = vmatpush1.bf16.xpose.msra.mxu0 0
        %1644 = vmatprep.subr.bf16.mxu0 0
        %1645 = vmatpush1.bf16.xpose.msra.mxu0 0
        %1646 = vmatprep.subr.bf16.mxu0 0
        %1647 = vmatpush1.bf16.xpose.msra.mxu0 0
        %1648 = vmatprep.subr.bf16.mxu0 0
        %1649 = vmatpush1.bf16.xpose.msra.mxu0 0
        %1650 = vmatprep.subr.bf16.mxu0 0
        %1651 = vmatpush1.bf16.xpose.msra.mxu0 0
        %1652 = vmatprep.subr.bf16.mxu0 0
        %1653 = vmatpush1.bf16.xpose.msra.mxu0 0
        %1654 = vmatprep.subr.bf16.mxu0 0
        %1655 = vmatpush1.bf16.xpose.msra.mxu0 0
        %1656 = vmatprep.subr.bf16.mxu0 0
        %1657 = vmatpush1.bf16.xpose.msra.mxu0 0
        %1658 = vmatprep.mubr.bf16.mxu0 0
        %1659 = vmatmul.mubr.bf16.gmra.mrb[0].mxu0 %v1621
        %v1660 = vpop.f32.mrb[0].mxu0
        %v1661 = vadd.f32 %v806, %v1660
        %v1662 = vpop.f32.mrb[0].mxu0
        %v1663 = vpop.f32.mrb[0].mxu0
        %v1664 = vadd.f32 %v807, %v1663
        %v1665 = vpop.f32.mrb[0].mxu0
        %1666 = vdwg.mxu0
        %v1667 = vsel %vm1279, %v1661, -inf
        %1668 = vmax.xlane.f32.xlu0 %v1667
        %v1669 = vpop.xlane.xlu0 %1668
        %v1670 = vsel %vm1279, %v1664, -inf
        %1671 = vmax.xlane.f32.xlu0 %v1670
        %v1672 = vpop.xlane.xlu0 %1671
        %v1673 = vsub.f32 %v1661, %v1669
        %v1674 = vsub.f32 %v1664, %v1672
        %v1675 = vmul.f32 %v1673, 1.442695
        %v1676 = vpow.pop %v1675
        %v1677 = vmul.f32 %v1674, 1.442695
        %v1678 = vpow.pop %v1677
        %v1679 = vsel %vm1279, %v1676, 0.0
        %1680 = vadd.xlane.f32.xlu0 %v1679
        %v1681 = vpop.xlane.xlu0 %1680
        %v1682 = vsel %vm1279, %v1678, 0.0
        %1683 = vadd.xlane.f32.xlu0 %v1682
        %v1684 = vpop.xlane.xlu0 %1683
        %v1685 = vrcp.pop %v1681
        %v1686 = vrcp.pop %v1684
        %v1687 = vmul.f32 %v1676, %v1685
        %v1688 = vmul.f32 %v1678, %v1686
        %v1689 = vpack.c.bf16 %v1688, %v1687
        %1690 = vrot.lane.b32.xlu0 %v1230, 32
        %v1691 = vpop.permute.xlu0 %1690
        %v1694 = vsel %vm1279, %v1689, 0
        %1696 = vmatprep.subr.bf16.mxu0 0
        %1697 = vmatpush1.bf16.msra.mxu0 %v1691
        %1698 = vmatprep.subr.bf16.mxu0 0
        %1699 = vmatpush1.bf16.msra.mxu0 0
        %1700 = vmatprep.subr.bf16.mxu0 0
        %1701 = vmatpush1.bf16.msra.mxu0 0
        %1702 = vmatprep.subr.bf16.mxu0 0
        %1703 = vmatpush1.bf16.msra.mxu0 0
        %1704 = vmatprep.subr.bf16.mxu0 0
        %1705 = vmatpush1.bf16.msra.mxu0 0
        %1706 = vmatprep.subr.bf16.mxu0 0
        %1707 = vmatpush1.bf16.msra.mxu0 0
        %1708 = vmatprep.subr.bf16.mxu0 0
        %1709 = vmatpush1.bf16.msra.mxu0 0
        %1710 = vmatprep.subr.bf16.mxu0 0
        %1711 = vmatpush1.bf16.msra.mxu0 0
        %1712 = vmatprep.subr.bf16.mxu0 0
        %1713 = vmatpush1.bf16.msra.mxu0 0
        %1714 = vmatprep.subr.bf16.mxu0 0
        %1715 = vmatpush1.bf16.msra.mxu0 0
        %1716 = vmatprep.subr.bf16.mxu0 0
        %1717 = vmatpush1.bf16.msra.mxu0 0
        %1718 = vmatprep.subr.bf16.mxu0 0
        %1719 = vmatpush1.bf16.msra.mxu0 0
        %1720 = vmatprep.subr.bf16.mxu0 0
        %1721 = vmatpush1.bf16.msra.mxu0 0
        %1722 = vmatprep.subr.bf16.mxu0 0
        %1723 = vmatpush1.bf16.msra.mxu0 0
        %1724 = vmatprep.subr.bf16.mxu0 0
        %1725 = vmatpush1.bf16.msra.mxu0 0
        %1726 = vmatprep.subr.bf16.mxu0 0
        %1727 = vmatpush1.bf16.msra.mxu0 0
        %1728 = vmatprep.mubr.bf16.mxu0 0
        %1729 = vmatmul.mubr.bf16.gmra.mrb[0].mxu0 %v1694
        %v1730 = vpop.f32.mrb[0].mxu0
        %v1731 = vadd.f32 0.0, %v1730
        %v1732 = vpop.f32.mrb[0].mxu0
        %v1733 = vpop.f32.mrb[0].mxu0
        %v1734 = vadd.f32 0.0, %v1733
        %v1735 = vpop.f32.mrb[0].mxu0
        %1736 = vdwg.mxu0
        %1739 = vrot.lane.b32.xlu0 %v1731, 96
        %v1740 = vpop.permute.xlu0 %1739
        %1741 = vrot.lane.b32.xlu0 %v1734, 96
        %v1742 = vpop.permute.xlu0 %1741
        %vm1745 = vcmask 1048320
        %1746 = vst.msk [vmem:[#allocation3] sm:$0xff] %vm1745, %v1740
        %1747 = vst.msk [vmem:[#allocation3 + $0x8] sm:$0xff] %vm1745, %v1742
        %v1748 = vld [vmem:[#allocation3] sm:$0xff]
        %v1749 = vld [vmem:[#allocation3 + $0x8] sm:$0xff]
        %v1750 = vpack.c.bf16 %v1749, %v1748
        %v1751 = vld [vmem:[%s511] sm:$0xf]
        %v1752 = vld [vmem:[%s511 + $0x4] sm:$0xf]
        %v1753 = vld [vmem:[%s511 + $0x8] sm:$0xf]
        %v1754 = vld [vmem:[%s511 + $0xc] sm:$0xf]
        %v1755 = vld [vmem:[%s511 + $0x10] sm:$0xf]
        %v1756 = vld [vmem:[%s511 + $0x14] sm:$0xf]
        %v1757 = vld [vmem:[%s511 + $0x18] sm:$0xf]
        %v1758 = vld [vmem:[%s511 + $0x1c] sm:$0xf]
        %v1759 = vld [vmem:[%s511 + $0x20] sm:$0xf]
        %v1760 = vld [vmem:[%s511 + $0x24] sm:$0xf]
        %v1761 = vld [vmem:[%s511 + $0x28] sm:$0xf]
        %v1762 = vld [vmem:[%s511 + $0x2c] sm:$0xf]
        %v1763 = vld [vmem:[%s511 + $0x30] sm:$0xf]
        %v1764 = vld [vmem:[%s511 + $0x34] sm:$0xf]
        %v1765 = vld [vmem:[%s511 + $0x38] sm:$0xf]
        %v1766 = vld [vmem:[%s511 + $0x3c] sm:$0xf]
        %v1783 = vunpack.c.l.b16 %v1751
        %v1784 = vunpack.c.l.b16 %v1752
        %v1785 = vunpack.c.l.b16 %v1753
        %v1786 = vunpack.c.l.b16 %v1754
        %v1787 = vunpack.c.l.b16 %v1755
        %v1788 = vunpack.c.l.b16 %v1756
        %v1789 = vunpack.c.l.b16 %v1757
        %v1790 = vunpack.c.l.b16 %v1758
        %v1791 = vunpack.c.l.b16 %v1759
        %v1792 = vunpack.c.l.b16 %v1760
        %v1793 = vunpack.c.l.b16 %v1761
        %v1794 = vunpack.c.l.b16 %v1762
        %v1795 = vunpack.c.l.b16 %v1763
        %v1796 = vunpack.c.l.b16 %v1764
        %v1797 = vunpack.c.l.b16 %v1765
        %v1798 = vunpack.c.l.b16 %v1766
        %v1799 = vpack.c.b16 %v1784, %v1783
        %v1800 = vpack.c.b16 %v1786, %v1785
        %v1801 = vpack.c.b16 %v1788, %v1787
        %v1802 = vpack.c.b16 %v1790, %v1789
        %v1803 = vpack.c.b16 %v1792, %v1791
        %v1804 = vpack.c.b16 %v1794, %v1793
        %v1805 = vpack.c.b16 %v1796, %v1795
        %v1806 = vpack.c.b16 %v1798, %v1797
        %1815 = vmatprep.subr.bf16.mxu0 0
        %1816 = vmatpush1.bf16.msra.mxu0 %v1799
        %1817 = vmatprep.subr.bf16.mxu0 0
        %1818 = vmatpush1.bf16.msra.mxu0 %v1800
        %1819 = vmatprep.subr.bf16.mxu0 0
        %1820 = vmatpush1.bf16.msra.mxu0 %v1801
        %1821 = vmatprep.subr.bf16.mxu0 0
        %1822 = vmatpush1.bf16.msra.mxu0 %v1802
        %1823 = vmatprep.subr.bf16.mxu0 0
        %1824 = vmatpush1.bf16.msra.mxu0 %v1803
        %1825 = vmatprep.subr.bf16.mxu0 0
        %1826 = vmatpush1.bf16.msra.mxu0 %v1804
        %1827 = vmatprep.subr.bf16.mxu0 0
        %1828 = vmatpush1.bf16.msra.mxu0 %v1805
        %1829 = vmatprep.subr.bf16.mxu0 0
        %1830 = vmatpush1.bf16.msra.mxu0 %v1806
        %1831 = vmatprep.subr.bf16.mxu0 0
        %1832 = vmatpush1.bf16.msra.mxu0 0
        %1833 = vmatprep.subr.bf16.mxu0 0
        %1834 = vmatpush1.bf16.msra.mxu0 0
        %1835 = vmatprep.subr.bf16.mxu0 0
        %1836 = vmatpush1.bf16.msra.mxu0 0
        %1837 = vmatprep.subr.bf16.mxu0 0
        %1838 = vmatpush1.bf16.msra.mxu0 0
        %1839 = vmatprep.subr.bf16.mxu0 0
        %1840 = vmatpush1.bf16.msra.mxu0 0
        %1841 = vmatprep.subr.bf16.mxu0 0
        %1842 = vmatpush1.bf16.msra.mxu0 0
        %1843 = vmatprep.subr.bf16.mxu0 0
        %1844 = vmatpush1.bf16.msra.mxu0 0
        %1845 = vmatprep.subr.bf16.mxu0 0
        %1846 = vmatpush1.bf16.msra.mxu0 0
        %1847 = vmatprep.mubr.bf16.mxu0 0
        %1848 = vmatmul.mubr.bf16.gmra.mrb[0].mxu0 %v1750
        %v1849 = vpop.f32.mrb[0].mxu0
        %v1850 = vadd.f32 0.0, %v1849
        %v1851 = vpop.f32.mrb[0].mxu0
        %v1852 = vpop.f32.mrb[0].mxu0
        %v1853 = vadd.f32 0.0, %v1852
        %v1854 = vpop.f32.mrb[0].mxu0
        %1855 = vdwg.mxu0
        %v1856 = vadd.f32 %v800, %v1850
        %v1857 = vadd.f32 %v801, %v1853
        %v1858 = vld [vmem:[%s602] sm:$0x1]
        %v1859 = vmul.f32 %v1856, %v1856
        %v1860 = vmul.f32 %v1857, %v1857
        %1861 = vadd.xlane.f32.xlu0 %v1859
        %v1862 = vpop.xlane.xlu0 %1861
        %1863 = vadd.xlane.f32.xlu0 %v1860
        %v1864 = vpop.xlane.xlu0 %1863
        %v1865 = vmul.f32 %v1862, %v815
        %v1866 = vmul.f32 %v1864, %v815
        %v1867 = vadd.f32 %v1865, 1e-06
        %v1868 = vadd.f32 %v1866, 1e-06
        %v1869 = vrsqrt.pop %v1867
        %v1870 = vrsqrt.pop %v1868
        %v1871 = vmul.f32 %v1856, %v1869
        %v1872 = vmul.f32 %v1857, %v1870
        %v1874 = vlaneseq
        %v1875 = vshrl.u32 %v1874, 7
        %v1876 = vsub.s32 0, %v1875
        %v1877 = vrot.slane %v1858, %v1876
        %v1879 = vmul.f32 %v1871, %v1877
        %v1880 = vmul.f32 %v1872, %v1877
        %v1881 = vpack.c.bf16 %v1880, %v1879
        %v1882 = vld [vmem:[%s520] sm:$0xff]
        %v1883 = vld [vmem:[%s520 + $0x8] sm:$0xff]
        %v1884 = vld [vmem:[%s520 + $0x10] sm:$0xff]
        %v1885 = vld [vmem:[%s520 + $0x18] sm:$0xff]
        %v1886 = vld [vmem:[%s520 + $0x20] sm:$0xff]
        %v1887 = vld [vmem:[%s520 + $0x28] sm:$0xff]
        %v1888 = vld [vmem:[%s520 + $0x30] sm:$0xff]
        %v1889 = vld [vmem:[%s520 + $0x38] sm:$0xff]
        %v1890 = vld [vmem:[%s520 + $0x40] sm:$0xff]
        %v1891 = vld [vmem:[%s520 + $0x48] sm:$0xff]
        %v1892 = vld [vmem:[%s520 + $0x50] sm:$0xff]
        %v1893 = vld [vmem:[%s520 + $0x58] sm:$0xff]
        %v1894 = vld [vmem:[%s520 + $0x60] sm:$0xff]
        %v1895 = vld [vmem:[%s520 + $0x68] sm:$0xff]
        %v1896 = vld [vmem:[%s520 + $0x70] sm:$0xff]
        %v1897 = vld [vmem:[%s520 + $0x78] sm:$0xff]
        %v1898 = vld [vmem:[%s520 + $0x80] sm:$0xff]
        %v1899 = vld [vmem:[%s520 + $0x88] sm:$0xff]
        %v1900 = vld [vmem:[%s520 + $0x90] sm:$0xff]
        %v1901 = vld [vmem:[%s520 + $0x98] sm:$0xff]
        %v1902 = vld [vmem:[%s520 + $0xa0] sm:$0xff]
        %v1903 = vld [vmem:[%s520 + $0xa8] sm:$0xff]
        %v1904 = vld [vmem:[%s520 + $0xb0] sm:$0xff]
        %v1905 = vld [vmem:[%s520 + $0xb8] sm:$0xff]
        %v1906 = vld [vmem:[%s520 + $0xc0] sm:$0xff]
        %v1907 = vld [vmem:[%s520 + $0xc8] sm:$0xff]
        %v1908 = vld [vmem:[%s520 + $0xd0] sm:$0xff]
        %v1909 = vld [vmem:[%s520 + $0xd8] sm:$0xff]
        %v1910 = vld [vmem:[%s520 + $0xe0] sm:$0xff]
        %v1911 = vld [vmem:[%s520 + $0xe8] sm:$0xff]
        %v1912 = vld [vmem:[%s520 + $0xf0] sm:$0xff]
        %v1913 = vld [vmem:[%s520 + $0xf8] sm:$0xff]
        %v1946 = vunpack.c.l.b16 %v1882
        %v1947 = vunpack.c.h.b16 %v1882
        %v1948 = vunpack.c.l.b16 %v1883
        %v1949 = vunpack.c.h.b16 %v1883
        %v1950 = vunpack.c.l.b16 %v1884
        %v1951 = vunpack.c.h.b16 %v1884
        %v1952 = vunpack.c.l.b16 %v1885
        %v1953 = vunpack.c.h.b16 %v1885
        %v1954 = vunpack.c.l.b16 %v1886
        %v1955 = vunpack.c.h.b16 %v1886
        %v1956 = vunpack.c.l.b16 %v1887
        %v1957 = vunpack.c.h.b16 %v1887
        %v1958 = vunpack.c.l.b16 %v1888
        %v1959 = vunpack.c.h.b16 %v1888
        %v1960 = vunpack.c.l.b16 %v1889
        %v1961 = vunpack.c.h.b16 %v1889
        %v1962 = vunpack.c.l.b16 %v1890
        %v1963 = vunpack.c.h.b16 %v1890
        %v1964 = vunpack.c.l.b16 %v1891
        %v1965 = vunpack.c.h.b16 %v1891
        %v1966 = vunpack.c.l.b16 %v1892
        %v1967 = vunpack.c.h.b16 %v1892
        %v1968 = vunpack.c.l.b16 %v1893
        %v1969 = vunpack.c.h.b16 %v1893
        %v1970 = vunpack.c.l.b16 %v1894
        %v1971 = vunpack.c.h.b16 %v1894
        %v1972 = vunpack.c.l.b16 %v1895
        %v1973 = vunpack.c.h.b16 %v1895
        %v1974 = vunpack.c.l.b16 %v1896
        %v1975 = vunpack.c.h.b16 %v1896
        %v1976 = vunpack.c.l.b16 %v1897
        %v1977 = vunpack.c.h.b16 %v1897
        %v1978 = vunpack.c.l.b16 %v1898
        %v1979 = vunpack.c.h.b16 %v1898
        %v1980 = vunpack.c.l.b16 %v1899
        %v1981 = vunpack.c.h.b16 %v1899
        %v1982 = vunpack.c.l.b16 %v1900
        %v1983 = vunpack.c.h.b16 %v1900
        %v1984 = vunpack.c.l.b16 %v1901
        %v1985 = vunpack.c.h.b16 %v1901
        %v1986 = vunpack.c.l.b16 %v1902
        %v1987 = vunpack.c.h.b16 %v1902
        %v1988 = vunpack.c.l.b16 %v1903
        %v1989 = vunpack.c.h.b16 %v1903
        %v1990 = vunpack.c.l.b16 %v1904
        %v1991 = vunpack.c.h.b16 %v1904
        %v1992 = vunpack.c.l.b16 %v1905
        %v1993 = vunpack.c.h.b16 %v1905
        %v1994 = vunpack.c.l.b16 %v1906
        %v1995 = vunpack.c.h.b16 %v1906
        %v1996 = vunpack.c.l.b16 %v1907
        %v1997 = vunpack.c.h.b16 %v1907
        %v1998 = vunpack.c.l.b16 %v1908
        %v1999 = vunpack.c.h.b16 %v1908
        %v2000 = vunpack.c.l.b16 %v1909
        %v2001 = vunpack.c.h.b16 %v1909
        %v2002 = vunpack.c.l.b16 %v1910
        %v2003 = vunpack.c.h.b16 %v1910
        %v2004 = vunpack.c.l.b16 %v1911
        %v2005 = vunpack.c.h.b16 %v1911
        %v2006 = vunpack.c.l.b16 %v1912
        %v2007 = vunpack.c.h.b16 %v1912
        %v2008 = vunpack.c.l.b16 %v1913
        %v2009 = vunpack.c.h.b16 %v1913
        %v2010 = vpack.c.b16 %v1950, %v1946
        %v2011 = vpack.c.b16 %v1951, %v1947
        %v2012 = vpack.c.b16 %v1952, %v1948
        %v2013 = vpack.c.b16 %v1953, %v1949
        %v2014 = vpack.c.b16 %v1958, %v1954
        %v2015 = vpack.c.b16 %v1959, %v1955
        %v2016 = vpack.c.b16 %v1960, %v1956
        %v2017 = vpack.c.b16 %v1961, %v1957
        %v2018 = vpack.c.b16 %v1966, %v1962
        %v2019 = vpack.c.b16 %v1967, %v1963
        %v2020 = vpack.c.b16 %v1968, %v1964
        %v2021 = vpack.c.b16 %v1969, %v1965
        %v2022 = vpack.c.b16 %v1974, %v1970
        %v2023 = vpack.c.b16 %v1975, %v1971
        %v2024 = vpack.c.b16 %v1976, %v1972
        %v2025 = vpack.c.b16 %v1977, %v1973
        %v2026 = vpack.c.b16 %v1982, %v1978
        %v2027 = vpack.c.b16 %v1983, %v1979
        %v2028 = vpack.c.b16 %v1984, %v1980
        %v2029 = vpack.c.b16 %v1985, %v1981
        %v2030 = vpack.c.b16 %v1990, %v1986
        %v2031 = vpack.c.b16 %v1991, %v1987
        %v2032 = vpack.c.b16 %v1992, %v1988
        %v2033 = vpack.c.b16 %v1993, %v1989
        %v2034 = vpack.c.b16 %v1998, %v1994
        %v2035 = vpack.c.b16 %v1999, %v1995
        %v2036 = vpack.c.b16 %v2000, %v1996
        %v2037 = vpack.c.b16 %v2001, %v1997
        %v2038 = vpack.c.b16 %v2006, %v2002
        %v2039 = vpack.c.b16 %v2007, %v2003
        %v2040 = vpack.c.b16 %v2008, %v2004
        %v2041 = vpack.c.b16 %v2009, %v2005
        %2074 = vmatprep.subr.bf16.mxu0 %v2011
        %2075 = vmatpush1.bf16.msra.mxu0 %v2010
        %2076 = vmatprep.subr.bf16.mxu0 %v2015
        %2077 = vmatpush1.bf16.msra.mxu0 %v2014
        %2078 = vmatprep.subr.bf16.mxu0 %v2019
        %2079 = vmatpush1.bf16.msra.mxu0 %v2018
        %2080 = vmatprep.subr.bf16.mxu0 %v2023
        %2081 = vmatpush1.bf16.msra.mxu0 %v2022
        %2082 = vmatprep.subr.bf16.mxu0 %v2027
        %2083 = vmatpush1.bf16.msra.mxu0 %v2026
        %2084 = vmatprep.subr.bf16.mxu0 %v2031
        %2085 = vmatpush1.bf16.msra.mxu0 %v2030
        %2086 = vmatprep.subr.bf16.mxu0 %v2035
        %2087 = vmatpush1.bf16.msra.mxu0 %v2034
        %2088 = vmatprep.subr.bf16.mxu0 %v2039
        %2089 = vmatpush1.bf16.msra.mxu0 %v2038
        %2090 = vmatprep.subr.bf16.mxu0 0
        %2091 = vmatpush1.bf16.msra.mxu0 0
        %2092 = vmatprep.subr.bf16.mxu0 0
        %2093 = vmatpush1.bf16.msra.mxu0 0
        %2094 = vmatprep.subr.bf16.mxu0 0
        %2095 = vmatpush1.bf16.msra.mxu0 0
        %2096 = vmatprep.subr.bf16.mxu0 0
        %2097 = vmatpush1.bf16.msra.mxu0 0
        %2098 = vmatprep.subr.bf16.mxu0 0
        %2099 = vmatpush1.bf16.msra.mxu0 0
        %2100 = vmatprep.subr.bf16.mxu0 0
        %2101 = vmatpush1.bf16.msra.mxu0 0
        %2102 = vmatprep.subr.bf16.mxu0 0
        %2103 = vmatpush1.bf16.msra.mxu0 0
        %2104 = vmatprep.subr.bf16.mxu0 0
        %2105 = vmatpush1.bf16.msra.mxu0 0
        %2106 = vmatprep.mubr.bf16.mxu0 0
        %2107 = vmatmul.mubr.bf16.gmra.mrb[0].mxu0 %v1881
        %v2108 = vpop.f32.mrb[0].mxu0
        %v2109 = vadd.f32 0.0, %v2108
        %v2110 = vpop.f32.mrb[0].mxu0
        %v2111 = vadd.f32 0.0, %v2110
        %v2112 = vpop.f32.mrb[0].mxu0
        %v2113 = vadd.f32 0.0, %v2112
        %v2114 = vpop.f32.mrb[0].mxu0
        %v2115 = vadd.f32 0.0, %v2114
        %2116 = vdwg.mxu0
        %2117 = vmatprep.subr.bf16.mxu0 %v2013
        %2118 = vmatpush1.bf16.msra.mxu0 %v2012
        %2119 = vmatprep.subr.bf16.mxu0 %v2017
        %2120 = vmatpush1.bf16.msra.mxu0 %v2016
        %2121 = vmatprep.subr.bf16.mxu0 %v2021
        %2122 = vmatpush1.bf16.msra.mxu0 %v2020
        %2123 = vmatprep.subr.bf16.mxu0 %v2025
        %2124 = vmatpush1.bf16.msra.mxu0 %v2024
        %2125 = vmatprep.subr.bf16.mxu0 %v2029
        %2126 = vmatpush1.bf16.msra.mxu0 %v2028
        %2127 = vmatprep.subr.bf16.mxu0 %v2033
        %2128 = vmatpush1.bf16.msra.mxu0 %v2032
        %2129 = vmatprep.subr.bf16.mxu0 %v2037
        %2130 = vmatpush1.bf16.msra.mxu0 %v2036
        %2131 = vmatprep.subr.bf16.mxu0 %v2041
        %2132 = vmatpush1.bf16.msra.mxu0 %v2040
        %2133 = vmatprep.subr.bf16.mxu0 0
        %2134 = vmatpush1.bf16.msra.mxu0 0
        %2135 = vmatprep.subr.bf16.mxu0 0
        %2136 = vmatpush1.bf16.msra.mxu0 0
        %2137 = vmatprep.subr.bf16.mxu0 0
        %2138 = vmatpush1.bf16.msra.mxu0 0
        %2139 = vmatprep.subr.bf16.mxu0 0
        %2140 = vmatpush1.bf16.msra.mxu0 0
        %2141 = vmatprep.subr.bf16.mxu0 0
        %2142 = vmatpush1.bf16.msra.mxu0 0
        %2143 = vmatprep.subr.bf16.mxu0 0
        %2144 = vmatpush1.bf16.msra.mxu0 0
        %2145 = vmatprep.subr.bf16.mxu0 0
        %2146 = vmatpush1.bf16.msra.mxu0 0
        %2147 = vmatprep.subr.bf16.mxu0 0
        %2148 = vmatpush1.bf16.msra.mxu0 0
        %2149 = vmatprep.mubr.bf16.mxu0 0
        %2150 = vmatmul.mubr.bf16.gmra.mrb[0].mxu0 %v1881
        %v2151 = vpop.f32.mrb[0].mxu0
        %v2152 = vadd.f32 0.0, %v2151
        %v2153 = vpop.f32.mrb[0].mxu0
        %v2154 = vadd.f32 0.0, %v2153
        %v2155 = vpop.f32.mrb[0].mxu0
        %v2156 = vadd.f32 0.0, %v2155
        %v2157 = vpop.f32.mrb[0].mxu0
        %v2158 = vadd.f32 0.0, %v2157
        %2159 = vdwg.mxu0
        %v2160 = vxor.u32 %v2109, 2147483648
        %v2161 = vxor.u32 %v2111, 2147483648
        %v2162 = vxor.u32 %v2113, 2147483648
        %v2163 = vxor.u32 %v2115, 2147483648
        %v2164 = vmul.f32 %v2160, 1.442695
        %v2165 = vpow.pop %v2164
        %v2166 = vmul.f32 %v2161, 1.442695
        %v2167 = vpow.pop %v2166
        %v2168 = vmul.f32 %v2162, 1.442695
        %v2169 = vpow.pop %v2168
        %v2170 = vmul.f32 %v2163, 1.442695
        %v2171 = vpow.pop %v2170
        %v2172 = vadd.f32 %v2165, 1.0
        %v2173 = vadd.f32 %v2167, 1.0
        %v2174 = vadd.f32 %v2169, 1.0
        %v2175 = vadd.f32 %v2171, 1.0
        %v2176 = vrcp.pop %v2172
        %v2177 = vmul.f32 1.0, %v2176
        %v2178 = vrcp.pop %v2173
        %v2179 = vmul.f32 1.0, %v2178
        %v2180 = vrcp.pop %v2174
        %v2181 = vmul.f32 1.0, %v2180
        %v2182 = vrcp.pop %v2175
        %v2183 = vmul.f32 1.0, %v2182
        %v2184 = vmul.f32 %v2109, %v2177
        %v2185 = vmul.f32 %v2111, %v2179
        %v2186 = vmul.f32 %v2113, %v2181
        %v2187 = vmul.f32 %v2115, %v2183
        %v2188 = vmul.f32 %v2184, %v2152
        %v2189 = vmul.f32 %v2185, %v2154
        %v2190 = vmul.f32 %v2186, %v2156
        %v2191 = vmul.f32 %v2187, %v2158
        %v2192 = vpack.c.bf16 %v2190, %v2188
        %v2193 = vpack.c.bf16 %v2191, %v2189
        %v2194 = vld [vmem:[%s529] sm:$0xf]
        %v2195 = vld [vmem:[%s529 + $0x4] sm:$0xf]
        %v2196 = vld [vmem:[%s529 + $0x8] sm:$0xf]
        %v2197 = vld [vmem:[%s529 + $0xc] sm:$0xf]
        %v2198 = vld [vmem:[%s529 + $0x10] sm:$0xf]
        %v2199 = vld [vmem:[%s529 + $0x14] sm:$0xf]
        %v2200 = vld [vmem:[%s529 + $0x18] sm:$0xf]
        %v2201 = vld [vmem:[%s529 + $0x1c] sm:$0xf]
        %v2202 = vld [vmem:[%s529 + $0x20] sm:$0xf]
        %v2203 = vld [vmem:[%s529 + $0x24] sm:$0xf]
        %v2204 = vld [vmem:[%s529 + $0x28] sm:$0xf]
        %v2205 = vld [vmem:[%s529 + $0x2c] sm:$0xf]
        %v2206 = vld [vmem:[%s529 + $0x30] sm:$0xf]
        %v2207 = vld [vmem:[%s529 + $0x34] sm:$0xf]
        %v2208 = vld [vmem:[%s529 + $0x38] sm:$0xf]
        %v2209 = vld [vmem:[%s529 + $0x3c] sm:$0xf]
        %v2210 = vld [vmem:[%s529 + $0x40] sm:$0xf]
        %v2211 = vld [vmem:[%s529 + $0x44] sm:$0xf]
        %v2212 = vld [vmem:[%s529 + $0x48] sm:$0xf]
        %v2213 = vld [vmem:[%s529 + $0x4c] sm:$0xf]
        %v2214 = vld [vmem:[%s529 + $0x50] sm:$0xf]
        %v2215 = vld [vmem:[%s529 + $0x54] sm:$0xf]
        %v2216 = vld [vmem:[%s529 + $0x58] sm:$0xf]
        %v2217 = vld [vmem:[%s529 + $0x5c] sm:$0xf]
        %v2218 = vld [vmem:[%s529 + $0x60] sm:$0xf]
        %v2219 = vld [vmem:[%s529 + $0x64] sm:$0xf]
        %v2220 = vld [vmem:[%s529 + $0x68] sm:$0xf]
        %v2221 = vld [vmem:[%s529 + $0x6c] sm:$0xf]
        %v2222 = vld [vmem:[%s529 + $0x70] sm:$0xf]
        %v2223 = vld [vmem:[%s529 + $0x74] sm:$0xf]
        %v2224 = vld [vmem:[%s529 + $0x78] sm:$0xf]
        %v2225 = vld [vmem:[%s529 + $0x7c] sm:$0xf]
        %v2258 = vunpack.c.l.b16 %v2194
        %v2259 = vunpack.c.l.b16 %v2195
        %v2260 = vunpack.c.l.b16 %v2196
        %v2261 = vunpack.c.l.b16 %v2197
        %v2262 = vunpack.c.l.b16 %v2198
        %v2263 = vunpack.c.l.b16 %v2199
        %v2264 = vunpack.c.l.b16 %v2200
        %v2265 = vunpack.c.l.b16 %v2201
        %v2266 = vunpack.c.l.b16 %v2202
        %v2267 = vunpack.c.l.b16 %v2203
        %v2268 = vunpack.c.l.b16 %v2204
        %v2269 = vunpack.c.l.b16 %v2205
        %v2270 = vunpack.c.l.b16 %v2206
        %v2271 = vunpack.c.l.b16 %v2207
        %v2272 = vunpack.c.l.b16 %v2208
        %v2273 = vunpack.c.l.b16 %v2209
        %v2274 = vunpack.c.l.b16 %v2210
        %v2275 = vunpack.c.l.b16 %v2211
        %v2276 = vunpack.c.l.b16 %v2212
        %v2277 = vunpack.c.l.b16 %v2213
        %v2278 = vunpack.c.l.b16 %v2214
        %v2279 = vunpack.c.l.b16 %v2215
        %v2280 = vunpack.c.l.b16 %v2216
        %v2281 = vunpack.c.l.b16 %v2217
        %v2282 = vunpack.c.l.b16 %v2218
        %v2283 = vunpack.c.l.b16 %v2219
        %v2284 = vunpack.c.l.b16 %v2220
        %v2285 = vunpack.c.l.b16 %v2221
        %v2286 = vunpack.c.l.b16 %v2222
        %v2287 = vunpack.c.l.b16 %v2223
        %v2288 = vunpack.c.l.b16 %v2224
        %v2289 = vunpack.c.l.b16 %v2225
        %v2290 = vpack.c.b16 %v2259, %v2258
        %v2291 = vpack.c.b16 %v2261, %v2260
        %v2292 = vpack.c.b16 %v2263, %v2262
        %v2293 = vpack.c.b16 %v2265, %v2264
        %v2294 = vpack.c.b16 %v2267, %v2266
        %v2295 = vpack.c.b16 %v2269, %v2268
        %v2296 = vpack.c.b16 %v2271, %v2270
        %v2297 = vpack.c.b16 %v2273, %v2272
        %v2298 = vpack.c.b16 %v2275, %v2274
        %v2299 = vpack.c.b16 %v2277, %v2276
        %v2300 = vpack.c.b16 %v2279, %v2278
        %v2301 = vpack.c.b16 %v2281, %v2280
        %v2302 = vpack.c.b16 %v2283, %v2282
        %v2303 = vpack.c.b16 %v2285, %v2284
        %v2304 = vpack.c.b16 %v2287, %v2286
        %v2305 = vpack.c.b16 %v2289, %v2288
        %2322 = vmatprep.subr.bf16.mxu0 0
        %2323 = vmatpush1.bf16.msra.mxu0 %v2290
        %2324 = vmatprep.subr.bf16.mxu0 0
        %2325 = vmatpush1.bf16.msra.mxu0 %v2291
        %2326 = vmatprep.subr.bf16.mxu0 0
        %2327 = vmatpush1.bf16.msra.mxu0 %v2292
        %2328 = vmatprep.subr.bf16.mxu0 0
        %2329 = vmatpush1.bf16.msra.mxu0 %v2293
        %2330 = vmatprep.subr.bf16.mxu0 0
        %2331 = vmatpush1.bf16.msra.mxu0 %v2294
        %2332 = vmatprep.subr.bf16.mxu0 0
        %2333 = vmatpush1.bf16.msra.mxu0 %v2295
        %2334 = vmatprep.subr.bf16.mxu0 0
        %2335 = vmatpush1.bf16.msra.mxu0 %v2296
        %2336 = vmatprep.subr.bf16.mxu0 0
        %2337 = vmatpush1.bf16.msra.mxu0 %v2297
        %2338 = vmatprep.subr.bf16.mxu0 0
        %2339 = vmatpush1.bf16.msra.mxu0 %v2298
        %2340 = vmatprep.subr.bf16.mxu0 0
        %2341 = vmatpush1.bf16.msra.mxu0 %v2299
        %2342 = vmatprep.subr.bf16.mxu0 0
        %2343 = vmatpush1.bf16.msra.mxu0 %v2300
        %2344 = vmatprep.subr.bf16.mxu0 0
        %2345 = vmatpush1.bf16.msra.mxu0 %v2301
        %2346 = vmatprep.subr.bf16.mxu0 0
        %2347 = vmatpush1.bf16.msra.mxu0 %v2302
        %2348 = vmatprep.subr.bf16.mxu0 0
        %2349 = vmatpush1.bf16.msra.mxu0 %v2303
        %2350 = vmatprep.subr.bf16.mxu0 0
        %2351 = vmatpush1.bf16.msra.mxu0 %v2304
        %2352 = vmatprep.subr.bf16.mxu0 0
        %2353 = vmatpush1.bf16.msra.mxu0 %v2305
        %2354 = vmatprep.mubr.bf16.mxu0 %v2193
        %2355 = vmatmul.mubr.bf16.gmra.mrb[0].mxu0 %v2192
        %v2356 = vpop.f32.mrb[0].mxu0
        %v2357 = vadd.f32 0.0, %v2356
        %v2358 = vpop.f32.mrb[0].mxu0
        %v2359 = vpop.f32.mrb[0].mxu0
        %v2360 = vadd.f32 0.0, %v2359
        %v2361 = vpop.f32.mrb[0].mxu0
        %2362 = vdwg.mxu0
        %v2363 = vadd.f32 %v1856, %v2357
        %v2364 = vadd.f32 %v1857, %v2360
        %2365 = vst [vmem:[#allocation2] sm:$0xff] %v2363
        %2366 = vst [vmem:[#allocation2 + $0x8] sm:$0xff] %v2364
        %p2367 = scmp.eq.s32.totalorder %s34, 1
        // Predicated region
        $region97: #{closed_call.26} parent=71 // pred_check
          %p2368 = pneg %p2367
        $region98: #{closed_call.26} parent=71 // pred_check_branch
          %2370 = sbr.rel (%p2368) target = $region100
        $region99: #{closed_call.26} parent=71 // pred_region
          %s2371 = sld [smem:[#allocation5]]
          %s2372 = ssub.s32 %s2371, 1
          %s2373 = scalar_lea.vmem [#allocation2], %s2372
          %v2374 = vld [vmem:[%s2373] sm:$0x1]
          %v2375 = vld [vmem:[%s12] sm:$0x1]
          %v2376 = vmul.f32 %v2374, %v2374
          %vm2377 = vcmask 1040384
          %v2378 = vsel %vm2377, %v2376, 0.0
          %2379 = vadd.xlane.f32.xlu0 %v2378
          %v2380 = vpop.xlane.xlu0 %2379
          %v2381 = vmul.f32 %v2380, %v815
          %v2382 = vadd.f32 %v2381, 1e-06
          %v2383 = vrsqrt.pop %v2382
          %v2384 = vmul.f32 %v2374, %v2383
          %v2385 = vmul.f32 %v2384, %v2375
          %v2386 = vpack.c.bf16 %v2385, %v2385
          %v2387 = vld [vmem:[#allocation14] sm:$0xff]
          %v2388 = vld [vmem:[#allocation14 + $0x8] sm:$0xff]
          %v2389 = vld [vmem:[#allocation14 + $0x10] sm:$0xff]
          %v2390 = vld [vmem:[#allocation14 + $0x18] sm:$0xff]
          %v2391 = vld [vmem:[#allocation14 + $0x20] sm:$0xff]
          %v2392 = vld [vmem:[#allocation14 + $0x28] sm:$0xff]
          %v2393 = vld [vmem:[#allocation14 + $0x30] sm:$0xff]
          %v2394 = vld [vmem:[#allocation14 + $0x38] sm:$0xff]
          %v2395 = vld [vmem:[#allocation14 + $0x40] sm:$0xff]
          %v2396 = vld [vmem:[#allocation14 + $0x48] sm:$0xff]
          %v2397 = vld [vmem:[#allocation14 + $0x50] sm:$0xff]
          %v2398 = vld [vmem:[#allocation14 + $0x58] sm:$0xff]
          %v2399 = vld [vmem:[#allocation14 + $0x60] sm:$0xff]
          %v2400 = vld [vmem:[#allocation14 + $0x68] sm:$0xff]
          %v2401 = vld [vmem:[#allocation14 + $0x70] sm:$0xff]
          %v2402 = vld [vmem:[#allocation14 + $0x78] sm:$0xff]
          %v2419 = vunpack.c.l.b16 %v2387
          %v2420 = vunpack.c.h.b16 %v2387
          %v2421 = vunpack.c.l.b16 %v2388
          %v2422 = vunpack.c.h.b16 %v2388
          %v2423 = vunpack.c.l.b16 %v2389
          %v2424 = vunpack.c.h.b16 %v2389
          %v2425 = vunpack.c.l.b16 %v2390
          %v2426 = vunpack.c.h.b16 %v2390
          %v2427 = vunpack.c.l.b16 %v2391
          %v2428 = vunpack.c.h.b16 %v2391
          %v2429 = vunpack.c.l.b16 %v2392
          %v2430 = vunpack.c.h.b16 %v2392
          %v2431 = vunpack.c.l.b16 %v2393
          %v2432 = vunpack.c.h.b16 %v2393
          %v2433 = vunpack.c.l.b16 %v2394
          %v2434 = vunpack.c.h.b16 %v2394
          %v2435 = vunpack.c.l.b16 %v2395
          %v2436 = vunpack.c.h.b16 %v2395
          %v2437 = vunpack.c.l.b16 %v2396
          %v2438 = vunpack.c.h.b16 %v2396
          %v2439 = vunpack.c.l.b16 %v2397
          %v2440 = vunpack.c.h.b16 %v2397
          %v2441 = vunpack.c.l.b16 %v2398
          %v2442 = vunpack.c.h.b16 %v2398
          %v2443 = vunpack.c.l.b16 %v2399
          %v2444 = vunpack.c.h.b16 %v2399
          %v2445 = vunpack.c.l.b16 %v2400
          %v2446 = vunpack.c.h.b16 %v2400
          %v2447 = vunpack.c.l.b16 %v2401
          %v2448 = vunpack.c.h.b16 %v2401
          %v2449 = vunpack.c.l.b16 %v2402
          %v2450 = vunpack.c.h.b16 %v2402
          %v2451 = vpack.c.b16 %v2421, %v2419
          %v2452 = vpack.c.b16 %v2422, %v2420
          %v2453 = vpack.c.b16 %v2425, %v2423
          %v2454 = vpack.c.b16 %v2426, %v2424
          %v2455 = vpack.c.b16 %v2429, %v2427
          %v2456 = vpack.c.b16 %v2430, %v2428
          %v2457 = vpack.c.b16 %v2433, %v2431
          %v2458 = vpack.c.b16 %v2434, %v2432
          %v2459 = vpack.c.b16 %v2437, %v2435
          %v2460 = vpack.c.b16 %v2438, %v2436
          %v2461 = vpack.c.b16 %v2441, %v2439
          %v2462 = vpack.c.b16 %v2442, %v2440
          %v2463 = vpack.c.b16 %v2445, %v2443
          %v2464 = vpack.c.b16 %v2446, %v2444
          %v2465 = vpack.c.b16 %v2449, %v2447
          %v2466 = vpack.c.b16 %v2450, %v2448
          %2483 = vmatprep.subr.bf16.mxu0 %v2452
          %2484 = vmatpush1.bf16.msra.mxu0 %v2451
          %2485 = vmatprep.subr.bf16.mxu0 %v2454
          %2486 = vmatpush1.bf16.msra.mxu0 %v2453
          %2487 = vmatprep.subr.bf16.mxu0 %v2456
          %2488 = vmatpush1.bf16.msra.mxu0 %v2455
          %2489 = vmatprep.subr.bf16.mxu0 %v2458
          %2490 = vmatpush1.bf16.msra.mxu0 %v2457
          %2491 = vmatprep.subr.bf16.mxu0 %v2460
          %2492 = vmatpush1.bf16.msra.mxu0 %v2459
          %2493 = vmatprep.subr.bf16.mxu0 %v2462
          %2494 = vmatpush1.bf16.msra.mxu0 %v2461
          %2495 = vmatprep.subr.bf16.mxu0 %v2464
          %2496 = vmatpush1.bf16.msra.mxu0 %v2463
          %2497 = vmatprep.subr.bf16.mxu0 %v2466
          %2498 = vmatpush1.bf16.msra.mxu0 %v2465
          %2499 = vmatprep.subr.bf16.mxu0 0
          %2500 = vmatpush1.bf16.msra.mxu0 0
          %2501 = vmatprep.subr.bf16.mxu0 0
          %2502 = vmatpush1.bf16.msra.mxu0 0
          %2503 = vmatprep.subr.bf16.mxu0 0
          %2504 = vmatpush1.bf16.msra.mxu0 0
          %2505 = vmatprep.subr.bf16.mxu0 0
          %2506 = vmatpush1.bf16.msra.mxu0 0
          %2507 = vmatprep.subr.bf16.mxu0 0
          %2508 = vmatpush1.bf16.msra.mxu0 0
          %2509 = vmatprep.subr.bf16.mxu0 0
          %2510 = vmatpush1.bf16.msra.mxu0 0
          %2511 = vmatprep.subr.bf16.mxu0 0
          %2512 = vmatpush1.bf16.msra.mxu0 0
          %2513 = vmatprep.subr.bf16.mxu0 0
          %2514 = vmatpush1.bf16.msra.mxu0 0
          %2515 = vmatprep.mubr.bf16.mxu0 0
          %2516 = vmatmul.mubr.bf16.gmra.mrb[0].mxu0 %v2386
          %v2517 = vpop.f32.mrb[0].mxu0
          %v2518 = vadd.f32 0.0, %v2517
          %v2519 = vpop.f32.mrb[0].mxu0
          %v2520 = vadd.f32 0.0, %v2519
          %v2521 = vpop.f32.mrb[0].mxu0
          %v2522 = vpop.f32.mrb[0].mxu0
          %2523 = vdwg.mxu0
          %v2524 = vsel %vm2377, %v2518, -inf
          %v2525 = vsel %vm2377, %v2520, -inf
          %v2526 = vmax.f32 %v2524, %v2525
          %2527 = vmax.xlane.f32.xlu0 %v2526
          %v2528 = vpop.xlane.xlu0 %2527
          %v2529 = vlaneseq
          %v2530 = vand.u32 %v2529, 127
          %v2531 = vadd.s32 %v2530, 128
          %v2532 = vcvt.s32.f32 %v2530
          %v2533 = vcvt.s32.f32 %v2531
          %vm2534 = vcmp.ge.f32.partialorder %v2518, %v2528
          %vm2535 = vcmp.ge.f32.partialorder %v2520, %v2528
          %v2536 = vsel %vm2534, %v2532, 256.0
          %v2537 = vsel %vm2535, %v2533, 256.0
          %v2538 = vsel %vm2377, %v2536, inf
          %v2539 = vsel %vm2377, %v2537, inf
          %v2540 = vmin.f32 %v2538, %v2539
          %2541 = vmin.xlane.f32.xlu0 %v2540
          %v2542 = vpop.xlane.xlu0 %2541
          %vm2543 = vcmask 0
          %2544 = vst.msk [vmem:[#allocation15] sm:$0x1] %vm2543, %v2542
        $region100: #{closed_call.26} parent=71 // pred_fallthru
          _
        // Predicated region
        $region101: #{closed_call.26} parent=71 // pred_check
          %p2545 = pneg %p350
        $region102: #{closed_call.26} parent=71 // pred_check_branch
          %2547 = sbr.rel (%p2545) target = $region104
        $region103: #{closed_call.26} parent=71 // pred_region
          %s2549 = ssub.s32 16, 16
          %2550 = vsyncadd [#allocation8], %s2549
          %s2552 = sshll.u32 [#allocation15], 4
          %s2553 = int_to_ptr.vmem [resolvable:$true] %s2552
          %2555 = dma.vmem_to_hbm [thread:$0]  %s2553, 16, %s14, [#allocation8]
        $region104: #{closed_call.26} parent=71 // pred_fallthru
          _
        // Predicated region
        $region105: #{closed_call.26} parent=71 // pred_check
          %p2556 = pneg %p350
        $region106: #{closed_call.26} parent=71 // pred_check_branch
          %2558 = sbr.rel (%p2556) target = $region108
        $region107: #{closed_call.26} parent=71 // pred_region
          %2559 = dma.done [#allocation8], 16
        $region108: #{closed_call.26} parent=71 // pred_fallthru
          _
      $region72: #{closed_call.26} parent=5 // pred_fallthru
        _
      %p2560 = scmp.le.s32.totalorder 2, %s29
      // Predicated region
      $region109: #{closed_call.26} parent=5 // pred_check
        %p2561 = pneg %p2560
      $region110: #{closed_call.26} parent=5 // pred_check_branch
        %2563 = sbr.rel (%p2561) target = $region112
      $region111: #{closed_call.26} parent=5 // pred_region
        %s2564 = ssub.s32 %s29, 2
      $region112: #{closed_call.26} parent=5 // pred_fallthru
        _
    $region6: #{closed_call.26} parent=1 // loop_footer
      %s33 = sadd.s32 1, %s29
    $region7: #{closed_call.26} parent=1 // loop_footer_branch
      %28 = sbr.rel target = $region3
    $region8: #{closed_call.26} parent=1 // loop_exit
      _
    %2565 = vsyncpa [#allocation7], 1
    %s2566 = scalar_lea.sflag [#allocation7], 1
    %2567 = vsyncpa %s2566, 1
    %2568 = vsyncpa [#allocation10], 1
    %s2569 = scalar_lea.sflag [#allocation10], 1
    %2570 = vsyncpa %s2569, 1
    %2571 = vsyncpa [#allocation13], 1
    %s2572 = scalar_lea.sflag [#allocation13], 1
    %2573 = vsyncpa %s2572, 1
    %2574 = vsyncpa [#allocation8], 1
    %s2575 = scalar_lea.sflag [#allocation8], 1
    %2576 = vsyncpa %s2575, 1

</llo_original>
